<compile_context>
chip_gen: v6e
topology: v6e:2x2x1
jax: 0.10.0
libtpu: 0.0.40
codegen_flags: <defaults>
</compile_context>

<pallas_src>
import functools

import jax
import jax.numpy as jnp
import numpy as np
from jax.experimental import pallas as pl
from jax.experimental.pallas import tpu as pltpu


def _round_up(x, m):
    return (x + m - 1) // m * m


def basic_block_kernel(x_ref, w1_ref, s1_ref, b1_ref, w2_ref, s2_ref, b2_ref,
                       out_ref, *, H, W, TH, WO, EC, Cp, d):
    """One (batch, row-tile) pair per grid step.

    x_ref  : (1, Hp+4d, Wp, Cp) bf16  full zero-padded NHWC image (this batch)
    w*_ref : (3, 3*Cp, Cp)      bf16  per-kh weight, contraction = (kw, cin)
    s*,b*  : (1, Cp)            f32   folded BatchNorm scale / bias
    out_ref: (1, TH, WO, Cp)    bf16  lane-dense output tile
    """
    i = pl.program_id(1)
    t0 = i * TH                       # first output row of this tile
    r0 = pl.multiple_of(t0, 8)        # tile start in padded-row coordinates
    RI = TH + 4 * d                   # input rows this tile needs
    ER = TH + 2 * d                   # conv1 extended rows conv2 needs

    # Column-shifted (kw-folded) copies of the input window, built once.
    # Channel block kw holds padded-input columns [kw*d, kw*d + EC).
    xsh = jnp.concatenate(
        [x_ref[0, pl.ds(r0, RI), kw * d:kw * d + EC, :] for kw in range(3)],
        axis=-1)                                         # (RI, EC, 3*Cp) bf16

    # ---- conv1: 3 MXU matmuls (one per kh), K = 3*Cp ----
    acc1 = None
    for kh in range(3):
        op = xsh[kh * d:kh * d + ER].reshape(ER * EC, 3 * Cp)
        p = jnp.dot(op, w1_ref[kh], preferred_element_type=jnp.float32)
        acc1 = p if acc1 is None else acc1 + p

    # ---- folded bn1 + relu (f32) ----
    h1 = jnp.maximum(acc1 * s1_ref[...] + b1_ref[...], 0.0).reshape(ER, EC, Cp)

    # conv2's zero padding: mask extended positions that fall outside the
    # image (single combined mask; depends on the grid only through t0).
    row_ids = jax.lax.broadcasted_iota(jnp.int32, (ER, EC, 1), 0) + (t0 - d)
    col_ids = jax.lax.broadcasted_iota(jnp.int32, (ER, EC, 1), 1)
    valid = ((row_ids >= 0) & (row_ids < H)
             & (col_ids >= d) & (col_ids < d + W))
    a1 = jnp.where(valid, h1, 0.0).astype(jnp.bfloat16)  # (ER, EC, Cp)

    # ---- conv2: kw-folded operands built once, 3 matmuls, K = 3*Cp ----
    a1sh = jnp.concatenate(
        [a1[:, kw * d:kw * d + WO, :] for kw in range(3)], axis=-1)
    acc2 = None
    for kh in range(3):
        op = a1sh[kh * d:kh * d + TH].reshape(TH * WO, 3 * Cp)
        p = jnp.dot(op, w2_ref[kh], preferred_element_type=jnp.float32)
        acc2 = p if acc2 is None else acc2 + p

    # ---- folded bn2 + identity residual + relu, bf16 writeback ----
    # Residual = original input at the output positions; the kw=2 block of
    # xsh already holds padded columns [2d, 2d+EC), so reuse it (no extra
    # sublane-unaligned load).
    resid = xsh[2 * d:2 * d + TH, :WO, 2 * Cp:3 * Cp].astype(jnp.float32)
    out = acc2 * s2_ref[...] + b2_ref[...] + resid.reshape(TH * WO, Cp)
    out_ref[0] = jnp.maximum(out, 0.0).reshape(TH, WO, Cp).astype(out_ref.dtype)


def basic_block_forward(x_nchw, w1, g1, be1, m1, v1, w2, g2, be2, m2, v2,
                        *, dilation=1, eps=1e-5, tile_rows=32):
    """x_nchw: (N, C, H, W) float32.  Conv weights w*: (3, 3, Cin, Cout) HWIO."""
    # TODO(synk): stride > 1 / non-None `downsample` (non-default BasicBlock
    # construction) is not implemented; defaults are stride=1, downsample=None.
    N, Cin, H, W = x_nchw.shape
    Cout = w1.shape[-1]
    assert Cin == Cout, "identity residual requires Cin == Cout"
    d = dilation

    Cp = _round_up(max(Cin, Cout), 128)                 # lane-dense channels
    TH = min(_round_up(tile_rows, 8), _round_up(H, 8))  # row tile (mult. of 8)
    Hp = _round_up(H, TH)                               # padded rows (tail tile)
    nt = Hp // TH
    WO = _round_up(W, 8)                                # sublane-aligned out cols
    EC = _round_up(WO + 2 * d, 8)                       # conv1 extended cols
    Wp = EC + 2 * d                                     # padded input cols

    # Layout plumbing (plain JAX): NHWC, bf16, zero pad rows/cols/channels.
    x = jnp.transpose(x_nchw, (0, 2, 3, 1)).astype(jnp.bfloat16)
    x = jnp.pad(x, ((0, 0), (2 * d, 2 * d + Hp - H),
                    (2 * d, Wp - W - 2 * d), (0, Cp - Cin)))  # (N, Hp+4d, Wp, Cp)

    # Fold BatchNorm (inference) into per-channel scale/bias, pad to Cp.
    def fold(g, be, m, v):
        s = g / jnp.sqrt(v + eps)
        b = be - m * s
        s = jnp.pad(s, (0, Cp - Cout)).reshape(1, Cp).astype(jnp.float32)
        b = jnp.pad(b, (0, Cp - Cout)).reshape(1, Cp).astype(jnp.float32)
        return s, b

    s1, b1 = fold(g1, be1, m1, v1)
    s2, b2 = fold(g2, be2, m2, v2)

    # Weights: pad channels, fold kw into the contraction -> (kh, kw*cin, cout).
    def prep_w(w, ci):
        wp = jnp.pad(w, ((0, 0), (0, 0), (0, Cp - ci), (0, Cp - Cout)))
        return wp.reshape(3, 3 * Cp, Cp).astype(jnp.bfloat16)

    w1f = prep_w(w1, Cin)
    w2f = prep_w(w2, Cout)

    # VMEM budget: actual need with 2x headroom, capped at 48 MiB so we never
    # claim all of v7x's 64 MiB per-TensorCore VMEM (floor = 32 MiB default).
    RI, ER = TH + 4 * d, TH + 2 * d
    need = (2 * (Hp + 4 * d) * Wp * Cp * 2        # input block (double buffered)
            + 2 * 2 * 3 * (3 * Cp) * Cp * 2       # both weights (double buffered)
            + 2 * TH * WO * Cp * 2                # output block (double buffered)
            + RI * EC * 3 * Cp * 2                # xsh
            + 3 * ER * EC * Cp * 4                # acc1 / h1 / mask temporaries
            + ER * WO * 3 * Cp * 2                # a1sh
            + 2 * TH * WO * Cp * 4)               # acc2 / epilogue temporaries
    vmem_bytes = int(min(max(32 * 2**20, 2 * need), 48 * 2**20))

    kernel = functools.partial(basic_block_kernel,
                               H=H, W=W, TH=TH, WO=WO, EC=EC, Cp=Cp, d=d)

    out = pl.pallas_call(
        kernel,
        out_shape=jax.ShapeDtypeStruct((N, Hp, WO, Cp), jnp.bfloat16),
        grid_spec=pltpu.PrefetchScalarGridSpec(
            num_scalar_prefetch=0,
            grid=(N, nt),
            in_specs=[
                # Whole padded image per batch; resident across the row-tile axis.
                pl.BlockSpec((1, Hp + 4 * d, Wp, Cp), lambda n, i: (n, 0, 0, 0)),
                pl.BlockSpec((3, 3 * Cp, Cp), lambda n, i: (0, 0, 0)),
                pl.BlockSpec((1, Cp), lambda n, i: (0, 0)),
                pl.BlockSpec((1, Cp), lambda n, i: (0, 0)),
                pl.BlockSpec((3, 3 * Cp, Cp), lambda n, i: (0, 0, 0)),
                pl.BlockSpec((1, Cp), lambda n, i: (0, 0)),
                pl.BlockSpec((1, Cp), lambda n, i: (0, 0)),
            ],
            out_specs=pl.BlockSpec((1, TH, WO, Cp), lambda n, i: (n, i, 0, 0)),
        ),
        compiler_params=pltpu.CompilerParams(
            dimension_semantics=("parallel", "parallel"),
            vmem_limit_bytes=vmem_bytes,
        ),
    )(x, w1f, s1, b1, w2f, s2, b2)

    # Interface parity with the PyTorch module: strip padding, back to NCHW f32.
    # (When chaining blocks, keep the NHWC / Cp-padded / bf16 layout instead.)
    return jnp.transpose(out[:, :H, :W, :Cout].astype(jnp.float32), (0, 3, 1, 2))


def reference_forward(x_nchw, w1, g1, be1, m1, v1, w2, g2, be2, m2, v2,
                      *, dilation=1, eps=1e-5):
    d = dilation
    x = jnp.transpose(x_nchw, (0, 2, 3, 1))

    def conv(x, w):
        return jax.lax.conv_general_dilated(
            x, w, window_strides=(1, 1), padding=[(d, d), (d, d)],
            rhs_dilation=(d, d), dimension_numbers=("NHWC", "HWIO", "NHWC"))

    def bn(x, g, b, m, v):
        return (x - m) / jnp.sqrt(v + eps) * g + b

    out = jnp.maximum(bn(conv(x, w1), g1, be1, m1, v1), 0.0)
    out = bn(conv(out, w2), g2, be2, m2, v2)
    out = jnp.maximum(out + x, 0.0)
    return jnp.transpose(out, (0, 3, 1, 2))


if __name__ == "__main__":
    N, C = 2, 4   # inplanes = planes = 4, stride=1

    key = jax.random.PRNGKey(0)
    keys = jax.random.split(key, 8)

    # conv weights: (kh, kw, Cin, Cout)  (HWIO)
    w1 = jax.random.normal(keys[1], (3, 3, C, C), jnp.float32) * 0.1
    w2 = jax.random.normal(keys[2], (3, 3, C, C), jnp.float32) * 0.1

    # BatchNorm params / running stats (synthetic, inference mode).
    g1 = 1.0 + 0.1 * jax.random.normal(keys[3], (C,), jnp.float32)
    be1 = 0.1 * jax.random.normal(keys[4], (C,), jnp.float32)
    m1 = 0.05 * jnp.arange(C, dtype=jnp.float32)
    v1 = 1.0 + 0.1 * jnp.arange(C, dtype=jnp.float32)

    g2 = 1.0 + 0.1 * jax.random.normal(keys[5], (C,), jnp.float32)
    be2 = 0.1 * jax.random.normal(keys[6], (C,), jnp.float32)
    m2 = -0.05 * jnp.arange(C, dtype=jnp.float32)
    v2 = 1.0 + 0.05 * jnp.arange(C, dtype=jnp.float32)

    # (H, W, dilation, tile_rows): exercise multi-tile, single-tile and the
    # padded/masked tail paths (this is DilatedResnet, so test dilation too).
    cases = [(16, 16, 1, 8), (16, 16, 2, 16), (12, 12, 1, 8)]
    for (H, W, dil, th) in cases:
        x = jax.random.normal(keys[0], (N, C, H, W), jnp.float32)
        out = basic_block_forward(x, w1, g1, be1, m1, v1, w2, g2, be2, m2, v2,
                                  dilation=dil, tile_rows=th)
        out = jax.block_until_ready(out)
        ref = reference_forward(x, w1, g1, be1, m1, v1, w2, g2, be2, m2, v2,
                                dilation=dil)
        # bf16 MXU operands + bf16 output (f32 accumulation) vs f32 reference.
        np.testing.assert_allclose(np.asarray(out), np.asarray(ref),
                                   rtol=5e-2, atol=5e-2)

    print("KERNEL_OK")
</pallas_src>

<mosaic_0001>
module attributes {stable_mosaic.version = 11 : i64} {
  func.func @basic_block_kernel(%arg0: i32, %arg1: i32, %arg2: memref<1x20x26x128xbf16, #tpu.memory_space<vmem>>, %arg3: memref<3x384x128xbf16, #tpu.memory_space<vmem>>, %arg4: memref<1x128xf32, #tpu.memory_space<vmem>>, %arg5: memref<1x128xf32, #tpu.memory_space<vmem>>, %arg6: memref<3x384x128xbf16, #tpu.memory_space<vmem>>, %arg7: memref<1x128xf32, #tpu.memory_space<vmem>>, %arg8: memref<1x128xf32, #tpu.memory_space<vmem>>, %arg9: memref<1x8x16x128xbf16, #tpu.memory_space<vmem>>) attributes {dimension_semantics = [#tpu.dimension_semantics<parallel>, #tpu.dimension_semantics<parallel>], iteration_bounds = array<i64: 2, 2>, scalar_prefetch = 0 : i64, scratch_operands = 0 : i64, tpu.core_type = #tpu.core_type<tc>, window_params = [{transform_indices = @transform_0, window_bounds = array<i64: 1, 20, 26, 128>}, {pipeline_mode = #tpu.pipeline_mode<synchronous>, transform_indices = @transform_1, window_bounds = array<i64: 3, 384, 128>}, {pipeline_mode = #tpu.pipeline_mode<synchronous>, transform_indices = @transform_2, window_bounds = array<i64: 1, 128>}, {pipeline_mode = #tpu.pipeline_mode<synchronous>, transform_indices = @transform_3, window_bounds = array<i64: 1, 128>}, {pipeline_mode = #tpu.pipeline_mode<synchronous>, transform_indices = @transform_4, window_bounds = array<i64: 3, 384, 128>}, {pipeline_mode = #tpu.pipeline_mode<synchronous>, transform_indices = @transform_5, window_bounds = array<i64: 1, 128>}, {pipeline_mode = #tpu.pipeline_mode<synchronous>, transform_indices = @transform_6, window_bounds = array<i64: 1, 128>}, {transform_indices = @transform_7, window_bounds = array<i64: 1, 8, 16, 128>}]} {
    %c8_i32 = arith.constant 8 : i32
    %0 = arith.muli %arg1, %c8_i32 : i32
    %1 = tpu.assume_multiple %0, 8 : i32
    %c0 = arith.constant 0 : index
    %2 = arith.index_cast %1 : i32 to index
    %c0_0 = arith.constant 0 : index
    %c0_1 = arith.constant 0 : index
    %3 = vector.load %arg2[%c0, %2, %c0_0, %c0_1] : memref<1x20x26x128xbf16, #tpu.memory_space<vmem>>, vector<1x12x24x128xbf16>
    %4 = vector.shape_cast %3 : vector<1x12x24x128xbf16> to vector<12x24x128xbf16>
    %c0_2 = arith.constant 0 : index
    %5 = arith.index_cast %1 : i32 to index
    %c1 = arith.constant 1 : index
    %c0_3 = arith.constant 0 : index
    %6 = vector.load %arg2[%c0_2, %5, %c1, %c0_3] : memref<1x20x26x128xbf16, #tpu.memory_space<vmem>>, vector<1x12x24x128xbf16>
    %7 = vector.shape_cast %6 : vector<1x12x24x128xbf16> to vector<12x24x128xbf16>
    %c0_4 = arith.constant 0 : index
    %8 = arith.index_cast %1 : i32 to index
    %c2 = arith.constant 2 : index
    %c0_5 = arith.constant 0 : index
    %9 = vector.load %arg2[%c0_4, %8, %c2, %c0_5] : memref<1x20x26x128xbf16, #tpu.memory_space<vmem>>, vector<1x12x24x128xbf16>
    %10 = vector.shape_cast %9 : vector<1x12x24x128xbf16> to vector<12x24x128xbf16>
    %11 = tpu.concatenate %4, %7, %10 in 2 : vector<12x24x128xbf16>, vector<12x24x128xbf16>, vector<12x24x128xbf16> -> vector<12x24x384xbf16>
    %12 = vector.extract_strided_slice %11 {offsets = [0, 0, 0], sizes = [10, 24, 384], strides = [1, 1, 1]} : vector<12x24x384xbf16> to vector<10x24x384xbf16>
    %13 = vector.shape_cast %12 : vector<10x24x384xbf16> to vector<240x384xbf16>
    %c0_6 = arith.constant 0 : index
    %c0_7 = arith.constant 0 : index
    %c0_8 = arith.constant 0 : index
    %14 = vector.load %arg3[%c0_6, %c0_7, %c0_8] : memref<3x384x128xbf16, #tpu.memory_space<vmem>>, vector<1x384x128xbf16>
    %15 = vector.shape_cast %14 : vector<1x384x128xbf16> to vector<384x128xbf16>
    %cst = arith.constant dense<0.000000e+00> : vector<240x128xf32>
    %16 = tpu.matmul %13, %15, %cst {dimension_numbers = #tpu.dot_dimension_numbers<[1], [0], [0], [1], [0, 0, 1, 1], [], []>} : vector<240x384xbf16>, vector<384x128xbf16>, vector<240x128xf32> -> vector<240x128xf32>
    %17 = vector.extract_strided_slice %11 {offsets = [1, 0, 0], sizes = [10, 24, 384], strides = [1, 1, 1]} : vector<12x24x384xbf16> to vector<10x24x384xbf16>
    %18 = vector.shape_cast %17 : vector<10x24x384xbf16> to vector<240x384xbf16>
    %c1_9 = arith.constant 1 : index
    %c0_10 = arith.constant 0 : index
    %c0_11 = arith.constant 0 : index
    %19 = vector.load %arg3[%c1_9, %c0_10, %c0_11] : memref<3x384x128xbf16, #tpu.memory_space<vmem>>, vector<1x384x128xbf16>
    %20 = vector.shape_cast %19 : vector<1x384x128xbf16> to vector<384x128xbf16>
    %cst_12 = arith.constant dense<0.000000e+00> : vector<240x128xf32>
    %21 = tpu.matmul %18, %20, %cst_12 {dimension_numbers = #tpu.dot_dimension_numbers<[1], [0], [0], [1], [0, 0, 1, 1], [], []>} : vector<240x384xbf16>, vector<384x128xbf16>, vector<240x128xf32> -> vector<240x128xf32>
    %22 = arith.addf %16, %21 : vector<240x128xf32>
    %23 = vector.extract_strided_slice %11 {offsets = [2, 0, 0], sizes = [10, 24, 384], strides = [1, 1, 1]} : vector<12x24x384xbf16> to vector<10x24x384xbf16>
    %24 = vector.shape_cast %23 : vector<10x24x384xbf16> to vector<240x384xbf16>
    %c2_13 = arith.constant 2 : index
    %c0_14 = arith.constant 0 : index
    %c0_15 = arith.constant 0 : index
    %25 = vector.load %arg3[%c2_13, %c0_14, %c0_15] : memref<3x384x128xbf16, #tpu.memory_space<vmem>>, vector<1x384x128xbf16>
    %26 = vector.shape_cast %25 : vector<1x384x128xbf16> to vector<384x128xbf16>
    %cst_16 = arith.constant dense<0.000000e+00> : vector<240x128xf32>
    %27 = tpu.matmul %24, %26, %cst_16 {dimension_numbers = #tpu.dot_dimension_numbers<[1], [0], [0], [1], [0, 0, 1, 1], [], []>} : vector<240x384xbf16>, vector<384x128xbf16>, vector<240x128xf32> -> vector<240x128xf32>
    %28 = arith.addf %22, %27 : vector<240x128xf32>
    %c0_17 = arith.constant 0 : index
    %c0_18 = arith.constant 0 : index
    %29 = vector.load %arg4[%c0_17, %c0_18] : memref<1x128xf32, #tpu.memory_space<vmem>>, vector<1x128xf32>
    %30 = vector.broadcast %29 : vector<1x128xf32> to vector<240x128xf32>
    %31 = arith.mulf %28, %30 : vector<240x128xf32>
    %c0_19 = arith.constant 0 : index
    %c0_20 = arith.constant 0 : index
    %32 = vector.load %arg5[%c0_19, %c0_20] : memref<1x128xf32, #tpu.memory_space<vmem>>, vector<1x128xf32>
    %33 = vector.broadcast %32 : vector<1x128xf32> to vector<240x128xf32>
    %34 = arith.addf %31, %33 : vector<240x128xf32>
    %cst_21 = arith.constant 0.000000e+00 : f32
    %35 = vector.broadcast %cst_21 : f32 to vector<240x128xf32>
    %36 = arith.maximumf %34, %35 : vector<240x128xf32>
    %37 = vector.shape_cast %36 : vector<240x128xf32> to vector<10x24x128xf32>
    %38 = tpu.iota {dimensions = array<i32: 0>} : vector<10x24x1xi32>
    %c1_i32 = arith.constant 1 : i32
    %39 = arith.subi %0, %c1_i32 : i32
    %40 = vector.broadcast %39 : i32 to vector<10x24x1xi32>
    %41 = arith.addi %38, %40 : vector<10x24x1xi32>
    %42 = tpu.iota {dimensions = array<i32: 1>} : vector<10x24x1xi32>
    %c0_i32 = arith.constant 0 : i32
    %43 = vector.broadcast %c0_i32 : i32 to vector<10x24x1xi32>
    %44 = arith.cmpi sge, %41, %43 : vector<10x24x1xi32>
    %c16_i32 = arith.constant 16 : i32
    %45 = vector.broadcast %c16_i32 : i32 to vector<10x24x1xi32>
    %46 = arith.cmpi slt, %41, %45 : vector<10x24x1xi32>
    %47 = arith.andi %44, %46 : vector<10x24x1xi1>
    %c1_i32_22 = arith.constant 1 : i32
    %48 = vector.broadcast %c1_i32_22 : i32 to vector<10x24x1xi32>
    %49 = arith.cmpi sge, %42, %48 : vector<10x24x1xi32>
    %50 = arith.andi %47, %49 : vector<10x24x1xi1>
    %c17_i32 = arith.constant 17 : i32
    %51 = vector.broadcast %c17_i32 : i32 to vector<10x24x1xi32>
    %52 = arith.cmpi slt, %42, %51 : vector<10x24x1xi32>
    %53 = arith.andi %50, %52 : vector<10x24x1xi1>
    %cst_23 = arith.constant 0.000000e+00 : f32
    %54 = vector.shape_cast %53 : vector<10x24x1xi1> to vector<10x24x1xi1>
    %55 = vector.broadcast %54 : vector<10x24x1xi1> to vector<10x24x128xi1>
    %56 = vector.broadcast %cst_23 : f32 to vector<10x24x128xf32>
    %57 = arith.select %55, %37, %56 : vector<10x24x128xi1>, vector<10x24x128xf32>
    %58 = arith.truncf %57 : vector<10x24x128xf32> to vector<10x24x128xbf16>
    %59 = vector.extract_strided_slice %58 {offsets = [0, 0, 0], sizes = [10, 16, 128], strides = [1, 1, 1]} : vector<10x24x128xbf16> to vector<10x16x128xbf16>
    %60 = vector.extract_strided_slice %58 {offsets = [0, 1, 0], sizes = [10, 16, 128], strides = [1, 1, 1]} : vector<10x24x128xbf16> to vector<10x16x128xbf16>
    %61 = vector.extract_strided_slice %58 {offsets = [0, 2, 0], sizes = [10, 16, 128], strides = [1, 1, 1]} : vector<10x24x128xbf16> to vector<10x16x128xbf16>
    %62 = tpu.concatenate %59, %60, %61 in 2 : vector<10x16x128xbf16>, vector<10x16x128xbf16>, vector<10x16x128xbf16> -> vector<10x16x384xbf16>
    %63 = vector.extract_strided_slice %62 {offsets = [0, 0, 0], sizes = [8, 16, 384], strides = [1, 1, 1]} : vector<10x16x384xbf16> to vector<8x16x384xbf16>
    %64 = vector.shape_cast %63 : vector<8x16x384xbf16> to vector<128x384xbf16>
    %c0_24 = arith.constant 0 : index
    %c0_25 = arith.constant 0 : index
    %c0_26 = arith.constant 0 : index
    %65 = vector.load %arg6[%c0_24, %c0_25, %c0_26] : memref<3x384x128xbf16, #tpu.memory_space<vmem>>, vector<1x384x128xbf16>
    %66 = vector.shape_cast %65 : vector<1x384x128xbf16> to vector<384x128xbf16>
    %cst_27 = arith.constant dense<0.000000e+00> : vector<128x128xf32>
    %67 = tpu.matmul %64, %66, %cst_27 {dimension_numbers = #tpu.dot_dimension_numbers<[1], [0], [0], [1], [0, 0, 1, 1], [], []>} : vector<128x384xbf16>, vector<384x128xbf16>, vector<128x128xf32> -> vector<128x128xf32>
    %68 = vector.extract_strided_slice %62 {offsets = [1, 0, 0], sizes = [8, 16, 384], strides = [1, 1, 1]} : vector<10x16x384xbf16> to vector<8x16x384xbf16>
    %69 = vector.shape_cast %68 : vector<8x16x384xbf16> to vector<128x384xbf16>
    %c1_28 = arith.constant 1 : index
    %c0_29 = arith.constant 0 : index
    %c0_30 = arith.constant 0 : index
    %70 = vector.load %arg6[%c1_28, %c0_29, %c0_30] : memref<3x384x128xbf16, #tpu.memory_space<vmem>>, vector<1x384x128xbf16>
    %71 = vector.shape_cast %70 : vector<1x384x128xbf16> to vector<384x128xbf16>
    %cst_31 = arith.constant dense<0.000000e+00> : vector<128x128xf32>
    %72 = tpu.matmul %69, %71, %cst_31 {dimension_numbers = #tpu.dot_dimension_numbers<[1], [0], [0], [1], [0, 0, 1, 1], [], []>} : vector<128x384xbf16>, vector<384x128xbf16>, vector<128x128xf32> -> vector<128x128xf32>
    %73 = arith.addf %67, %72 : vector<128x128xf32>
    %74 = vector.extract_strided_slice %62 {offsets = [2, 0, 0], sizes = [8, 16, 384], strides = [1, 1, 1]} : vector<10x16x384xbf16> to vector<8x16x384xbf16>
    %75 = vector.shape_cast %74 : vector<8x16x384xbf16> to vector<128x384xbf16>
    %c2_32 = arith.constant 2 : index
    %c0_33 = arith.constant 0 : index
    %c0_34 = arith.constant 0 : index
    %76 = vector.load %arg6[%c2_32, %c0_33, %c0_34] : memref<3x384x128xbf16, #tpu.memory_space<vmem>>, vector<1x384x128xbf16>
    %77 = vector.shape_cast %76 : vector<1x384x128xbf16> to vector<384x128xbf16>
    %cst_35 = arith.constant dense<0.000000e+00> : vector<128x128xf32>
    %78 = tpu.matmul %75, %77, %cst_35 {dimension_numbers = #tpu.dot_dimension_numbers<[1], [0], [0], [1], [0, 0, 1, 1], [], []>} : vector<128x384xbf16>, vector<384x128xbf16>, vector<128x128xf32> -> vector<128x128xf32>
    %79 = arith.addf %73, %78 : vector<128x128xf32>
    %80 = vector.extract_strided_slice %11 {offsets = [2, 0, 256], sizes = [8, 16, 128], strides = [1, 1, 1]} : vector<12x24x384xbf16> to vector<8x16x128xbf16>
    %81 = arith.extf %80 : vector<8x16x128xbf16> to vector<8x16x128xf32>
    %c0_36 = arith.constant 0 : index
    %c0_37 = arith.constant 0 : index
    %82 = vector.load %arg7[%c0_36, %c0_37] : memref<1x128xf32, #tpu.memory_space<vmem>>, vector<1x128xf32>
    %83 = vector.broadcast %82 : vector<1x128xf32> to vector<128x128xf32>
    %84 = arith.mulf %79, %83 : vector<128x128xf32>
    %c0_38 = arith.constant 0 : index
    %c0_39 = arith.constant 0 : index
    %85 = vector.load %arg8[%c0_38, %c0_39] : memref<1x128xf32, #tpu.memory_space<vmem>>, vector<1x128xf32>
    %86 = vector.broadcast %85 : vector<1x128xf32> to vector<128x128xf32>
    %87 = arith.addf %84, %86 : vector<128x128xf32>
    %88 = vector.shape_cast %81 : vector<8x16x128xf32> to vector<128x128xf32>
    %89 = arith.addf %87, %88 : vector<128x128xf32>
    %cst_40 = arith.constant 0.000000e+00 : f32
    %90 = vector.broadcast %cst_40 : f32 to vector<128x128xf32>
    %91 = arith.maximumf %89, %90 : vector<128x128xf32>
    %92 = vector.shape_cast %91 : vector<128x128xf32> to vector<8x16x128xf32>
    %93 = arith.truncf %92 : vector<8x16x128xf32> to vector<8x16x128xbf16>
    %c0_41 = arith.constant 0 : index
    %c0_42 = arith.constant 0 : index
    %c0_43 = arith.constant 0 : index
    %c0_44 = arith.constant 0 : index
    %94 = vector.load %arg9[%c0_41, %c0_42, %c0_43, %c0_44] : memref<1x8x16x128xbf16, #tpu.memory_space<vmem>>, vector<1x8x16x128xbf16>
    %95 = vector.shape_cast %94 : vector<1x8x16x128xbf16> to vector<8x16x128xbf16>
    %96 = vector.shape_cast %93 : vector<8x16x128xbf16> to vector<1x8x16x128xbf16>
    tpu.vector_store %arg9[%c0_41, %c0_42, %c0_43, %c0_44], %96 {strides = array<i32>} : memref<1x8x16x128xbf16, #tpu.memory_space<vmem>>, vector<1x8x16x128xbf16>,
    return
  }
  func.func @transform_0(%arg0: i32, %arg1: i32) -> (i32, i32, i32, i32) {
    %c0_i32 = arith.constant 0 : i32
    %c0_i32_0 = arith.constant 0 : i32
    %c0_i32_1 = arith.constant 0 : i32
    %c0_i32_2 = arith.constant 0 : i32
    return %arg0, %c0_i32, %c0_i32_0, %c0_i32_1 : i32, i32, i32, i32
  }
  func.func @transform_1(%arg0: i32, %arg1: i32) -> (i32, i32, i32) {
    %c0_i32 = arith.constant 0 : i32
    %c0_i32_0 = arith.constant 0 : i32
    %c0_i32_1 = arith.constant 0 : i32
    %c0_i32_2 = arith.constant 0 : i32
    return %c0_i32, %c0_i32_0, %c0_i32_1 : i32, i32, i32
  }
  func.func @transform_2(%arg0: i32, %arg1: i32) -> (i32, i32) {
    %c0_i32 = arith.constant 0 : i32
    %c0_i32_0 = arith.constant 0 : i32
    %c0_i32_1 = arith.constant 0 : i32
    return %c0_i32, %c0_i32_0 : i32, i32
  }
  func.func @transform_3(%arg0: i32, %arg1: i32) -> (i32, i32) {
    %c0_i32 = arith.constant 0 : i32
    %c0_i32_0 = arith.constant 0 : i32
    %c0_i32_1 = arith.constant 0 : i32
    return %c0_i32, %c0_i32_0 : i32, i32
  }
  func.func @transform_4(%arg0: i32, %arg1: i32) -> (i32, i32, i32) {
    %c0_i32 = arith.constant 0 : i32
    %c0_i32_0 = arith.constant 0 : i32
    %c0_i32_1 = arith.constant 0 : i32
    %c0_i32_2 = arith.constant 0 : i32
    return %c0_i32, %c0_i32_0, %c0_i32_1 : i32, i32, i32
  }
  func.func @transform_5(%arg0: i32, %arg1: i32) -> (i32, i32) {
    %c0_i32 = arith.constant 0 : i32
    %c0_i32_0 = arith.constant 0 : i32
    %c0_i32_1 = arith.constant 0 : i32
    return %c0_i32, %c0_i32_0 : i32, i32
  }
  func.func @transform_6(%arg0: i32, %arg1: i32) -> (i32, i32) {
    %c0_i32 = arith.constant 0 : i32
    %c0_i32_0 = arith.constant 0 : i32
    %c0_i32_1 = arith.constant 0 : i32
    return %c0_i32, %c0_i32_0 : i32, i32
  }
  func.func @transform_7(%arg0: i32, %arg1: i32) -> (i32, i32, i32, i32) {
    %c0_i32 = arith.constant 0 : i32
    %c0_i32_0 = arith.constant 0 : i32
    %c0_i32_1 = arith.constant 0 : i32
    return %arg0, %arg1, %c0_i32, %c0_i32_0 : i32, i32, i32, i32
  }
}

</mosaic_0001>

<llo_original>
// kernel: tpu_custom_call.1
$region0: #{tpu_custom_call.1}
  #allocation0 [shape = 'u32[]', space=smem, size = 0x4, offset = 0x4, fixed_abs, tag = 'smem constant byte address 0x4 - core index']
  #allocation1 [shape = 'u32[144,128]{1,0:T(1,128)}', space=vmem, size = 0x12000, scoped, tag = 'internal scratch']
  %s0 = inlined_call_operand.vmem [shape: bf16[2,20,26,128], index: 0, kind: input, shape index: {}]
  %s1 = inlined_call_operand.vmem [shape: bf16[3,384,128], index: 1, kind: input, shape index: {}]
  %s2 = inlined_call_operand.vmem [shape: f32[1,128], index: 2, kind: input, shape index: {}]
  %s3 = inlined_call_operand.vmem [shape: f32[1,128], index: 3, kind: input, shape index: {}]
  %s4 = inlined_call_operand.vmem [shape: bf16[3,384,128], index: 4, kind: input, shape index: {}]
  %s5 = inlined_call_operand.vmem [shape: f32[1,128], index: 5, kind: input, shape index: {}]
  %s6 = inlined_call_operand.vmem [shape: f32[1,128], index: 6, kind: input, shape index: {}]
  %s7 = inlined_call_operand.hbm [shape: bf16[2,16,16,128], index: 7, kind: output, shape index: {}]
  %s8 = sld [smem:[#allocation0]]
  $region61: #{tpu_custom_call.1} parent=0
    _
  %s10 = ssub.s32 1, %s8
  %s11 = scalar_select 0, %s10, %s8
  $region1: #{tpu_custom_call.1} parent=0
    #allocation2 [shape = 'u8[65536]{0}', space=vmem, size = 0x10000, scoped, tag = 'output window, operand 0']
    #allocation3 [shape = 's32[2]{0}', space=sflag, size = 0x8, scoped, tag = 'scoped memory for tpu_custom_call.1']
    %12 = vsyncpa [#allocation3], 0
    %s13 = scalar_lea.sflag [#allocation3], 1
    %14 = vsyncpa %s13, 0
    loop: start=0, step=1, limit=6
    $region2: #{tpu_custom_call.1} parent=1 // loop_pre_header
      _
    $region3: #{tpu_custom_call.1} parent=1 // loop_header
      %s16 = sphi 0, %s20
      %p17 = scmp.ge.s32.totalorder %s16, 6
      %s23 = sphi 0, %s35
      %s24 = sphi 0, %s31
      %s25 = sphi 0, %s23
      %s26 = sphi 0, %s24
      %s27 = sphi 0, %s25
      %s28 = sphi 0, %s26
      %s38 = sphi 0, %s40
      %s41 = sphi 0, %s38
      %s42 = sphi 0, %s41
      %s58 = sphi 0, %s42
      %s62 = sphi 0, %s62
      %s64 = sphi 0, %s62
      %s65 = sphi 0, %s64
      %s79 = sphi 0, %s65
      %s83 = sphi 0, %s83
      %s85 = sphi 0, %s83
      %s86 = sphi 0, %s85
      %s100 = sphi 0, %s86
      %s104 = sphi 0, %s104
      %s106 = sphi 0, %s104
      %s107 = sphi 0, %s106
      %s121 = sphi 0, %s107
      %s125 = sphi 0, %s125
      %s127 = sphi 0, %s125
      %s128 = sphi 0, %s127
      %s142 = sphi 0, %s128
      %s146 = sphi 0, %s146
      %s148 = sphi 0, %s146
      %s149 = sphi 0, %s148
      %s163 = sphi 0, %s149
      %s167 = sphi 0, %s167
      %s169 = sphi 0, %s167
      %s170 = sphi 0, %s169
      %s184 = sphi 0, %s170
      %s192 = sphi 0, %s194
      %s195 = sphi 0, %s192
      %s196 = sphi 0, %s195
      %s212 = sphi 0, %s196
    $region4: #{tpu_custom_call.1} parent=1 // loop_header_branch
      %19 = sbr.rel (%p17) target = $region8
    $region5: #{tpu_custom_call.1} parent=1 // loop_body
      %s21 = ssub.s32 %s16, 1
      %s22 = ssub.s32 %s16, 2
      %s29 = sadd.s32 1, %s24
      %p30 = scmp.ge.s32.totalorder %s29, 2
      %s31 = scalar_select %p30, 0, %s29
      %s32 = sadd.s32 1, %s23
      %s33 = scalar_select %p30, %s32, %s23
      %p34 = scmp.ge.s32.totalorder %s33, 2
      %s35 = scalar_select %p34, 0, %s33
      %s36 = ssub.s32 %s23, %s35
      %p37 = scmp.eq.s32.totalorder %s36, 0
      %s39 = sadd.s32 %s38, 1
      %s40 = scalar_select %p37, %s38, %s39
      %p43 = pneg %p37
      %p44 = scmp.eq.s32.totalorder %s16, 3
      %p45 = por %p43, %p44
      %p46 = scmp.ne.s32.totalorder %s38, %s41
      %p47 = scmp.eq.s32.totalorder %s16, 0
      %p48 = por %p46, %p47
      %p49 = scmp.ne.s32.totalorder %s38, %s41
      %p50 = scmp.eq.s32.totalorder %s21, 3
      %p51 = por %p49, %p50
      %p52 = scmp.ne.s32.totalorder %s41, %s42
      %p53 = scmp.eq.s32.totalorder %s21, 0
      %p54 = por %p52, %p53
      %p55 = scmp.ne.s32.totalorder %s41, %s42
      %p56 = scmp.eq.s32.totalorder %s22, 3
      %p57 = por %p55, %p56
      %p59 = scmp.ne.s32.totalorder %s42, %s58
      %p60 = scmp.eq.s32.totalorder %s22, 0
      %p61 = por %p59, %p60
      %s63 = sadd.s32 %s62, 1
      %p66 = scmp.eq.s32.totalorder %s16, 3
      %p67 = scmp.ne.s32.totalorder %s62, %s64
      %p68 = scmp.eq.s32.totalorder %s16, 0
      %p69 = por %p67, %p68
      %p70 = scmp.ne.s32.totalorder %s62, %s64
      %p71 = scmp.eq.s32.totalorder %s21, 3
      %p72 = por %p70, %p71
      %p73 = scmp.ne.s32.totalorder %s64, %s65
      %p74 = scmp.eq.s32.totalorder %s21, 0
      %p75 = por %p73, %p74
      %p76 = scmp.ne.s32.totalorder %s64, %s65
      %p77 = scmp.eq.s32.totalorder %s22, 3
      %p78 = por %p76, %p77
      %p80 = scmp.ne.s32.totalorder %s65, %s79
      %p81 = scmp.eq.s32.totalorder %s22, 0
      %p82 = por %p80, %p81
      %s84 = sadd.s32 %s83, 1
      %p87 = scmp.eq.s32.totalorder %s16, 3
      %p88 = scmp.ne.s32.totalorder %s83, %s85
      %p89 = scmp.eq.s32.totalorder %s16, 0
      %p90 = por %p88, %p89
      %p91 = scmp.ne.s32.totalorder %s83, %s85
      %p92 = scmp.eq.s32.totalorder %s21, 3
      %p93 = por %p91, %p92
      %p94 = scmp.ne.s32.totalorder %s85, %s86
      %p95 = scmp.eq.s32.totalorder %s21, 0
      %p96 = por %p94, %p95
      %p97 = scmp.ne.s32.totalorder %s85, %s86
      %p98 = scmp.eq.s32.totalorder %s22, 3
      %p99 = por %p97, %p98
      %p101 = scmp.ne.s32.totalorder %s86, %s100
      %p102 = scmp.eq.s32.totalorder %s22, 0
      %p103 = por %p101, %p102
      %s105 = sadd.s32 %s104, 1
      %p108 = scmp.eq.s32.totalorder %s16, 3
      %p109 = scmp.ne.s32.totalorder %s104, %s106
      %p110 = scmp.eq.s32.totalorder %s16, 0
      %p111 = por %p109, %p110
      %p112 = scmp.ne.s32.totalorder %s104, %s106
      %p113 = scmp.eq.s32.totalorder %s21, 3
      %p114 = por %p112, %p113
      %p115 = scmp.ne.s32.totalorder %s106, %s107
      %p116 = scmp.eq.s32.totalorder %s21, 0
      %p117 = por %p115, %p116
      %p118 = scmp.ne.s32.totalorder %s106, %s107
      %p119 = scmp.eq.s32.totalorder %s22, 3
      %p120 = por %p118, %p119
      %p122 = scmp.ne.s32.totalorder %s107, %s121
      %p123 = scmp.eq.s32.totalorder %s22, 0
      %p124 = por %p122, %p123
      %s126 = sadd.s32 %s125, 1
      %p129 = scmp.eq.s32.totalorder %s16, 3
      %p130 = scmp.ne.s32.totalorder %s125, %s127
      %p131 = scmp.eq.s32.totalorder %s16, 0
      %p132 = por %p130, %p131
      %p133 = scmp.ne.s32.totalorder %s125, %s127
      %p134 = scmp.eq.s32.totalorder %s21, 3
      %p135 = por %p133, %p134
      %p136 = scmp.ne.s32.totalorder %s127, %s128
      %p137 = scmp.eq.s32.totalorder %s21, 0
      %p138 = por %p136, %p137
      %p139 = scmp.ne.s32.totalorder %s127, %s128
      %p140 = scmp.eq.s32.totalorder %s22, 3
      %p141 = por %p139, %p140
      %p143 = scmp.ne.s32.totalorder %s128, %s142
      %p144 = scmp.eq.s32.totalorder %s22, 0
      %p145 = por %p143, %p144
      %s147 = sadd.s32 %s146, 1
      %p150 = scmp.eq.s32.totalorder %s16, 3
      %p151 = scmp.ne.s32.totalorder %s146, %s148
      %p152 = scmp.eq.s32.totalorder %s16, 0
      %p153 = por %p151, %p152
      %p154 = scmp.ne.s32.totalorder %s146, %s148
      %p155 = scmp.eq.s32.totalorder %s21, 3
      %p156 = por %p154, %p155
      %p157 = scmp.ne.s32.totalorder %s148, %s149
      %p158 = scmp.eq.s32.totalorder %s21, 0
      %p159 = por %p157, %p158
      %p160 = scmp.ne.s32.totalorder %s148, %s149
      %p161 = scmp.eq.s32.totalorder %s22, 3
      %p162 = por %p160, %p161
      %p164 = scmp.ne.s32.totalorder %s149, %s163
      %p165 = scmp.eq.s32.totalorder %s22, 0
      %p166 = por %p164, %p165
      %s168 = sadd.s32 %s167, 1
      %p171 = scmp.eq.s32.totalorder %s16, 3
      %p172 = scmp.ne.s32.totalorder %s167, %s169
      %p173 = scmp.eq.s32.totalorder %s16, 0
      %p174 = por %p172, %p173
      %p175 = scmp.ne.s32.totalorder %s167, %s169
      %p176 = scmp.eq.s32.totalorder %s21, 3
      %p177 = por %p175, %p176
      %p178 = scmp.ne.s32.totalorder %s169, %s170
      %p179 = scmp.eq.s32.totalorder %s21, 0
      %p180 = por %p178, %p179
      %p181 = scmp.ne.s32.totalorder %s169, %s170
      %p182 = scmp.eq.s32.totalorder %s22, 3
      %p183 = por %p181, %p182
      %p185 = scmp.ne.s32.totalorder %s170, %s184
      %p186 = scmp.eq.s32.totalorder %s22, 0
      %p187 = por %p185, %p186
      %s188 = ssub.s32 %s23, %s35
      %s189 = ssub.s32 %s24, %s31
      %s190 = sor.u32 %s188, %s189
      %p191 = scmp.eq.s32.totalorder %s190, 0
      %s193 = sadd.s32 %s192, 1
      %s194 = scalar_select %p191, %s192, %s193
      %p197 = pneg %p191
      %p198 = scmp.eq.s32.totalorder %s16, 3
      %p199 = por %p197, %p198
      %p200 = scmp.ne.s32.totalorder %s192, %s195
      %p201 = scmp.eq.s32.totalorder %s16, 0
      %p202 = por %p200, %p201
      %p203 = scmp.ne.s32.totalorder %s192, %s195
      %p204 = scmp.eq.s32.totalorder %s21, 3
      %p205 = por %p203, %p204
      %p206 = scmp.ne.s32.totalorder %s195, %s196
      %p207 = scmp.eq.s32.totalorder %s21, 0
      %p208 = por %p206, %p207
      %p209 = scmp.ne.s32.totalorder %s195, %s196
      %p210 = scmp.eq.s32.totalorder %s22, 3
      %p211 = por %p209, %p210
      %p213 = scmp.ne.s32.totalorder %s196, %s212
      %p214 = scmp.eq.s32.totalorder %s22, 0
      %p215 = por %p213, %p214
      %p216 = scmp.le.s32.totalorder 1, %s16
      %p217 = scmp.lt.s32.totalorder %s16, 5
      %p218 = pnand %p216, %p217
      %p219 = pneg %p218
      // Predicated region
      $region9: #{tpu_custom_call.1} parent=5 // pred_check
        _
      $region10: #{tpu_custom_call.1} parent=5 // pred_check_branch
        %221 = sbr.rel (%p218) target = $region12
      $region11: #{tpu_custom_call.1} parent=5 // pred_region
        %s222 = ssub.s32 %s16, 1
        // Predicated region
        $region13: #{tpu_custom_call.1} parent=11 // pred_check
          %p223 = pneg %p75
        $region14: #{tpu_custom_call.1} parent=11 // pred_check_branch
          %225 = sbr.rel (%p223) target = $region16
        $region15: #{tpu_custom_call.1} parent=11 // pred_region
          _
        $region16: #{tpu_custom_call.1} parent=11 // pred_fallthru
          _
        // Predicated region
        $region17: #{tpu_custom_call.1} parent=11 // pred_check
          %p226 = pneg %p96
        $region18: #{tpu_custom_call.1} parent=11 // pred_check_branch
          %228 = sbr.rel (%p226) target = $region20
        $region19: #{tpu_custom_call.1} parent=11 // pred_region
          _
        $region20: #{tpu_custom_call.1} parent=11 // pred_fallthru
          _
        // Predicated region
        $region21: #{tpu_custom_call.1} parent=11 // pred_check
          %p229 = pneg %p117
        $region22: #{tpu_custom_call.1} parent=11 // pred_check_branch
          %231 = sbr.rel (%p229) target = $region24
        $region23: #{tpu_custom_call.1} parent=11 // pred_region
          _
        $region24: #{tpu_custom_call.1} parent=11 // pred_fallthru
          _
        // Predicated region
        $region25: #{tpu_custom_call.1} parent=11 // pred_check
          %p232 = pneg %p138
        $region26: #{tpu_custom_call.1} parent=11 // pred_check_branch
          %234 = sbr.rel (%p232) target = $region28
        $region27: #{tpu_custom_call.1} parent=11 // pred_region
          _
        $region28: #{tpu_custom_call.1} parent=11 // pred_fallthru
          _
        // Predicated region
        $region29: #{tpu_custom_call.1} parent=11 // pred_check
          %p235 = pneg %p159
        $region30: #{tpu_custom_call.1} parent=11 // pred_check_branch
          %237 = sbr.rel (%p235) target = $region32
        $region31: #{tpu_custom_call.1} parent=11 // pred_region
          _
        $region32: #{tpu_custom_call.1} parent=11 // pred_fallthru
          _
        // Predicated region
        $region33: #{tpu_custom_call.1} parent=11 // pred_check
          %p238 = pneg %p180
        $region34: #{tpu_custom_call.1} parent=11 // pred_check_branch
          %240 = sbr.rel (%p238) target = $region36
        $region35: #{tpu_custom_call.1} parent=11 // pred_region
          _
        $region36: #{tpu_custom_call.1} parent=11 // pred_fallthru
          _
      $region12: #{tpu_custom_call.1} parent=5 // pred_fallthru
        _
      %p241 = scmp.lt.s32.totalorder %s16, 4
      // Predicated region
      $region37: #{tpu_custom_call.1} parent=5 // pred_check
        %p242 = pneg %p241
      $region38: #{tpu_custom_call.1} parent=5 // pred_check_branch
        %244 = sbr.rel (%p242) target = $region40
      $region39: #{tpu_custom_call.1} parent=5 // pred_region
        // Predicated region
        $region41: #{tpu_custom_call.1} parent=39 // pred_check
          %p245 = pneg %p48
        $region42: #{tpu_custom_call.1} parent=39 // pred_check_branch
          %247 = sbr.rel (%p245) target = $region44
        $region43: #{tpu_custom_call.1} parent=39 // pred_region
          %p248 = scmp.lt.s32.totalorder %s23, 1
          %s249 = scalar_select %p248, %s23, 1
          %s250 = smul.addr %s249, 80
          %s251 = smul.addr %s250, 4
          %s252 = scalar_lea.vmem %s0, %s251
        $region44: #{tpu_custom_call.1} parent=39 // pred_fallthru
          _
      $region40: #{tpu_custom_call.1} parent=5 // pred_fallthru
        _
      %p253 = scmp.le.s32.totalorder 1, %s16
      %p254 = scmp.lt.s32.totalorder %s16, 5
      %p255 = pnand %p253, %p254
      %p256 = pneg %p255
      // Predicated region
      $region45: #{tpu_custom_call.1} parent=5 // pred_check
        _
      $region46: #{tpu_custom_call.1} parent=5 // pred_check_branch
        %258 = sbr.rel (%p255) target = $region48
      $region47: #{tpu_custom_call.1} parent=5 // pred_region
        %s259 = ssub.s32 %s16, 1
        %p260 = scmp.lt.s32.totalorder %s25, 1
        %s261 = scalar_select %p260, %s25, 1
        %s262 = smul.addr %s261, 80
        %s263 = smul.addr %s262, 4
        %s264 = scalar_lea.vmem %s0, %s263
        %p265 = pneg %p54
        %p266 = pneg %p51
        %p267 = pneg %p75
        %p268 = pneg %p72
        %p269 = pneg %p96
        %p270 = pneg %p93
        %p271 = pneg %p117
        %p272 = pneg %p114
        %p273 = pneg %p138
        %p274 = pneg %p135
        %p275 = pneg %p159
        %p276 = pneg %p156
        %p277 = pneg %p180
        %p278 = pneg %p177
        %p279 = pneg %p208
        %p280 = pneg %p205
        %s281 = sand.u32 %s195, 1
        %s282 = scalar_lea.sflag [#allocation3], %s281
        %s283 = sand.u32 %s195, 1
        %s284 = smul.addr %s283, 64
        %s285 = scalar_lea.vmem [#allocation2], %s284
        %p286 = scmp.lt.s32.totalorder %s25, 1
        %s287 = scalar_select %p286, %s25, 1
        %s288 = smul.addr %s287, 80
        %s289 = smul.addr %s288, 4
        %s290 = scalar_lea.vmem %s0, %s289
        %s291 = smul.u32 8, %s26
        %s293 = smul.u32 %s26, 8
        %s294 = smul.u32 %s293, 4
        %s295 = smul.addr %s294, 4
        %s296 = scalar_lea.vmem %s290, %s295
        %v297 = vld [vmem:[%s296] sm:$0xf]
        %v298 = vld [vmem:[%s296 + $0x4] sm:$0xf]
        %v299 = vld [vmem:[%s296 + $0x8] sm:$0xf]
        %v300 = vld [vmem:[%s296 + $0x10] sm:$0xf]
        %v301 = vld [vmem:[%s296 + $0x14] sm:$0xf]
        %v302 = vld [vmem:[%s296 + $0x18] sm:$0xf]
        %v303 = vld [vmem:[%s296 + $0x20] sm:$0xf]
        %v304 = vld [vmem:[%s296 + $0x24] sm:$0xf]
        %v305 = vld [vmem:[%s296 + $0x28] sm:$0xf]
        %v306 = vld [vmem:[%s296 + $0x30] sm:$0xf]
        %v307 = vld [vmem:[%s296 + $0x34] sm:$0xf]
        %v308 = vld [vmem:[%s296 + $0x38] sm:$0xf]
        %v309 = vld [vmem:[%s296 + $0x40] sm:$0xf]
        %v310 = vld [vmem:[%s296 + $0x44] sm:$0xf]
        %v311 = vld [vmem:[%s296 + $0x48] sm:$0xf]
        %v312 = vld [vmem:[%s296 + $0x50] sm:$0xf]
        %v313 = vld [vmem:[%s296 + $0x54] sm:$0xf]
        %v314 = vld [vmem:[%s296 + $0x58] sm:$0xf]
        %v315 = vld [vmem:[%s296 + $0x60] sm:$0xf]
        %v316 = vld [vmem:[%s296 + $0x64] sm:$0xf]
        %v317 = vld [vmem:[%s296 + $0x68] sm:$0xf]
        %v318 = vld [vmem:[%s296 + $0x70] sm:$0xf]
        %v319 = vld [vmem:[%s296 + $0x74] sm:$0xf]
        %v320 = vld [vmem:[%s296 + $0x78] sm:$0xf]
        %v321 = vld [vmem:[%s296 + $0x80] sm:$0xf]
        %v322 = vld [vmem:[%s296 + $0x84] sm:$0xf]
        %v323 = vld [vmem:[%s296 + $0x88] sm:$0xf]
        %v324 = vld [vmem:[%s296 + $0x90] sm:$0xf]
        %v325 = vld [vmem:[%s296 + $0x94] sm:$0xf]
        %v326 = vld [vmem:[%s296 + $0x98] sm:$0xf]
        %v327 = vld [vmem:[%s296 + $0xa0] sm:$0xf]
        %v328 = vld [vmem:[%s296 + $0xa4] sm:$0xf]
        %v329 = vld [vmem:[%s296 + $0xa8] sm:$0xf]
        %v330 = vld [vmem:[%s296 + $0xb0] sm:$0xf]
        %v331 = vld [vmem:[%s296 + $0xb4] sm:$0xf]
        %v332 = vld [vmem:[%s296 + $0xb8] sm:$0xf]
        %v333 = vld [vmem:[%s296 + $0xc] sm:$0x1]
        %v334 = vld [vmem:[%s296 + $0x1c] sm:$0x1]
        %v335 = vld [vmem:[%s296 + $0x2c] sm:$0x1]
        %v336 = vld [vmem:[%s296 + $0x3c] sm:$0x1]
        %v337 = vld [vmem:[%s296 + $0x4c] sm:$0x1]
        %v338 = vld [vmem:[%s296 + $0x5c] sm:$0x1]
        %v339 = vld [vmem:[%s296 + $0x6c] sm:$0x1]
        %v340 = vld [vmem:[%s296 + $0x7c] sm:$0x1]
        %v341 = vld [vmem:[%s296 + $0x8c] sm:$0x1]
        %v342 = vld [vmem:[%s296 + $0x9c] sm:$0x1]
        %v343 = vld [vmem:[%s296 + $0xac] sm:$0x1]
        %v344 = vld [vmem:[%s296 + $0xbc] sm:$0x1]
        %v345 = vld [vmem:[%s296] sm:$0xe]
        %v346 = vld [vmem:[%s296 + $0x10] sm:$0xe]
        %v347 = vld [vmem:[%s296 + $0x20] sm:$0xe]
        %v348 = vld [vmem:[%s296 + $0x30] sm:$0xe]
        %v349 = vld [vmem:[%s296 + $0x40] sm:$0xe]
        %v350 = vld [vmem:[%s296 + $0x50] sm:$0xe]
        %v351 = vld [vmem:[%s296 + $0x60] sm:$0xe]
        %v352 = vld [vmem:[%s296 + $0x70] sm:$0xe]
        %v353 = vld [vmem:[%s296 + $0x80] sm:$0xe]
        %v354 = vld [vmem:[%s296 + $0x90] sm:$0xe]
        %v355 = vld [vmem:[%s296 + $0xa0] sm:$0xe]
        %v356 = vld [vmem:[%s296 + $0xb0] sm:$0xe]
        %v393 = vunpack.c.l.b16 %v297
        %v394 = vunpack.c.l.b16 %v298
        %v395 = vunpack.c.l.b16 %v299
        %v396 = vunpack.c.l.b16 %v300
        %v397 = vunpack.c.l.b16 %v301
        %v398 = vunpack.c.l.b16 %v302
        %v399 = vunpack.c.l.b16 %v303
        %v400 = vunpack.c.l.b16 %v304
        %v401 = vunpack.c.l.b16 %v305
        %v402 = vunpack.c.l.b16 %v306
        %v403 = vunpack.c.l.b16 %v307
        %v404 = vunpack.c.l.b16 %v308
        %v405 = vunpack.c.l.b16 %v309
        %v406 = vunpack.c.l.b16 %v310
        %v407 = vunpack.c.l.b16 %v311
        %v408 = vunpack.c.l.b16 %v312
        %v409 = vunpack.c.l.b16 %v313
        %v410 = vunpack.c.l.b16 %v314
        %v411 = vunpack.c.l.b16 %v315
        %v412 = vunpack.c.l.b16 %v316
        %v413 = vunpack.c.l.b16 %v317
        %v414 = vunpack.c.l.b16 %v318
        %v415 = vunpack.c.l.b16 %v319
        %v416 = vunpack.c.l.b16 %v320
        %v417 = vunpack.c.l.b16 %v321
        %v418 = vunpack.c.l.b16 %v322
        %v419 = vunpack.c.l.b16 %v323
        %v420 = vunpack.c.l.b16 %v324
        %v421 = vunpack.c.l.b16 %v325
        %v422 = vunpack.c.l.b16 %v326
        %v423 = vunpack.c.l.b16 %v327
        %v424 = vunpack.c.l.b16 %v328
        %v425 = vunpack.c.l.b16 %v329
        %v426 = vunpack.c.l.b16 %v330
        %v427 = vunpack.c.l.b16 %v331
        %v428 = vunpack.c.l.b16 %v332
        %v441 = vunpack.c.l.b16 %v333
        %v442 = vunpack.c.l.b16 %v334
        %v443 = vunpack.c.l.b16 %v335
        %v444 = vunpack.c.l.b16 %v336
        %v445 = vunpack.c.l.b16 %v337
        %v446 = vunpack.c.l.b16 %v338
        %v447 = vunpack.c.l.b16 %v339
        %v448 = vunpack.c.l.b16 %v340
        %v449 = vunpack.c.l.b16 %v341
        %v450 = vunpack.c.l.b16 %v342
        %v451 = vunpack.c.l.b16 %v343
        %v452 = vunpack.c.l.b16 %v344
        %v453 = vpack.c.b16 %v394, %v393
        %v454 = vpack.c.b16 %v441, %v395
        %v455 = vpack.c.b16 %v397, %v396
        %v456 = vpack.c.b16 %v442, %v398
        %v457 = vpack.c.b16 %v400, %v399
        %v458 = vpack.c.b16 %v443, %v401
        %v459 = vpack.c.b16 %v403, %v402
        %v460 = vpack.c.b16 %v444, %v404
        %v461 = vpack.c.b16 %v406, %v405
        %v462 = vpack.c.b16 %v445, %v407
        %v463 = vpack.c.b16 %v409, %v408
        %v464 = vpack.c.b16 %v446, %v410
        %v465 = vpack.c.b16 %v412, %v411
        %v466 = vpack.c.b16 %v447, %v413
        %v467 = vpack.c.b16 %v415, %v414
        %v468 = vpack.c.b16 %v448, %v416
        %v469 = vpack.c.b16 %v418, %v417
        %v470 = vpack.c.b16 %v449, %v419
        %v471 = vpack.c.b16 %v421, %v420
        %v472 = vpack.c.b16 %v450, %v422
        %v473 = vpack.c.b16 %v424, %v423
        %v474 = vpack.c.b16 %v451, %v425
        %v475 = vpack.c.b16 %v427, %v426
        %v476 = vpack.c.b16 %v452, %v428
        %vm477 = vsmask.f32 7424
        %v479 = vshrl.u32 %v453, 16
        %v481 = vshll.u32 %v453, 16
        %v483 = vrot.slane %v481, 1
        %v484 = vor.u32 %v479, %v483
        %v486 = vshll.u32 %v454, 16
        %v488 = vrot.slane %v486, 1
        %v489 = vsel %vm477, %v484, %v488
        %v490 = vshrl.u32 %v454, 16
        %v492 = vor.u32 %v490, %v488
        %v494 = vshrl.u32 %v455, 16
        %v496 = vshll.u32 %v455, 16
        %v498 = vrot.slane %v496, 1
        %v499 = vor.u32 %v494, %v498
        %v501 = vshll.u32 %v456, 16
        %v503 = vrot.slane %v501, 1
        %v504 = vsel %vm477, %v499, %v503
        %v505 = vshrl.u32 %v456, 16
        %v507 = vor.u32 %v505, %v503
        %v509 = vshrl.u32 %v457, 16
        %v511 = vshll.u32 %v457, 16
        %v513 = vrot.slane %v511, 1
        %v514 = vor.u32 %v509, %v513
        %v516 = vshll.u32 %v458, 16
        %v518 = vrot.slane %v516, 1
        %v519 = vsel %vm477, %v514, %v518
        %v520 = vshrl.u32 %v458, 16
        %v522 = vor.u32 %v520, %v518
        %v524 = vshrl.u32 %v459, 16
        %v526 = vshll.u32 %v459, 16
        %v528 = vrot.slane %v526, 1
        %v529 = vor.u32 %v524, %v528
        %v531 = vshll.u32 %v460, 16
        %v533 = vrot.slane %v531, 1
        %v534 = vsel %vm477, %v529, %v533
        %v535 = vshrl.u32 %v460, 16
        %v537 = vor.u32 %v535, %v533
        %v539 = vshrl.u32 %v461, 16
        %v541 = vshll.u32 %v461, 16
        %v543 = vrot.slane %v541, 1
        %v544 = vor.u32 %v539, %v543
        %v546 = vshll.u32 %v462, 16
        %v548 = vrot.slane %v546, 1
        %v549 = vsel %vm477, %v544, %v548
        %v550 = vshrl.u32 %v462, 16
        %v552 = vor.u32 %v550, %v548
        %v554 = vshrl.u32 %v463, 16
        %v556 = vshll.u32 %v463, 16
        %v558 = vrot.slane %v556, 1
        %v559 = vor.u32 %v554, %v558
        %v561 = vshll.u32 %v464, 16
        %v563 = vrot.slane %v561, 1
        %v564 = vsel %vm477, %v559, %v563
        %v565 = vshrl.u32 %v464, 16
        %v567 = vor.u32 %v565, %v563
        %v569 = vshrl.u32 %v465, 16
        %v571 = vshll.u32 %v465, 16
        %v573 = vrot.slane %v571, 1
        %v574 = vor.u32 %v569, %v573
        %v576 = vshll.u32 %v466, 16
        %v578 = vrot.slane %v576, 1
        %v579 = vsel %vm477, %v574, %v578
        %v580 = vshrl.u32 %v466, 16
        %v582 = vor.u32 %v580, %v578
        %v584 = vshrl.u32 %v467, 16
        %v586 = vshll.u32 %v467, 16
        %v588 = vrot.slane %v586, 1
        %v589 = vor.u32 %v584, %v588
        %v591 = vshll.u32 %v468, 16
        %v593 = vrot.slane %v591, 1
        %v594 = vsel %vm477, %v589, %v593
        %v595 = vshrl.u32 %v468, 16
        %v597 = vor.u32 %v595, %v593
        %v599 = vshrl.u32 %v469, 16
        %v601 = vshll.u32 %v469, 16
        %v603 = vrot.slane %v601, 1
        %v604 = vor.u32 %v599, %v603
        %v606 = vshll.u32 %v470, 16
        %v608 = vrot.slane %v606, 1
        %v609 = vsel %vm477, %v604, %v608
        %v610 = vshrl.u32 %v470, 16
        %v612 = vor.u32 %v610, %v608
        %v614 = vshrl.u32 %v471, 16
        %v616 = vshll.u32 %v471, 16
        %v618 = vrot.slane %v616, 1
        %v619 = vor.u32 %v614, %v618
        %v621 = vshll.u32 %v472, 16
        %v623 = vrot.slane %v621, 1
        %v624 = vsel %vm477, %v619, %v623
        %v625 = vshrl.u32 %v472, 16
        %v627 = vor.u32 %v625, %v623
        %v629 = vshrl.u32 %v473, 16
        %v631 = vshll.u32 %v473, 16
        %v633 = vrot.slane %v631, 1
        %v634 = vor.u32 %v629, %v633
        %v636 = vshll.u32 %v474, 16
        %v638 = vrot.slane %v636, 1
        %v639 = vsel %vm477, %v634, %v638
        %v640 = vshrl.u32 %v474, 16
        %v642 = vor.u32 %v640, %v638
        %v644 = vshrl.u32 %v475, 16
        %v646 = vshll.u32 %v475, 16
        %v648 = vrot.slane %v646, 1
        %v649 = vor.u32 %v644, %v648
        %v651 = vshll.u32 %v476, 16
        %v653 = vrot.slane %v651, 1
        %v654 = vsel %vm477, %v649, %v653
        %v655 = vshrl.u32 %v476, 16
        %v657 = vor.u32 %v655, %v653
        %v670 = vunpack.c.l.b16 %v345
        %v671 = vunpack.c.l.b16 %v346
        %v672 = vunpack.c.l.b16 %v347
        %v673 = vunpack.c.l.b16 %v348
        %v674 = vunpack.c.l.b16 %v349
        %v675 = vunpack.c.l.b16 %v350
        %v676 = vunpack.c.l.b16 %v351
        %v677 = vunpack.c.l.b16 %v352
        %v678 = vunpack.c.l.b16 %v353
        %v679 = vunpack.c.l.b16 %v354
        %v680 = vunpack.c.l.b16 %v355
        %v681 = vunpack.c.l.b16 %v356
        %v682 = vpack.c.b16 %v394, %v670
        %v683 = vpack.c.b16 %v397, %v671
        %v684 = vpack.c.b16 %v400, %v672
        %v685 = vpack.c.b16 %v403, %v673
        %v686 = vpack.c.b16 %v406, %v674
        %v687 = vpack.c.b16 %v409, %v675
        %v688 = vpack.c.b16 %v412, %v676
        %v689 = vpack.c.b16 %v415, %v677
        %v690 = vpack.c.b16 %v418, %v678
        %v691 = vpack.c.b16 %v421, %v679
        %v692 = vpack.c.b16 %v424, %v680
        %v693 = vpack.c.b16 %v427, %v681
        %vm694 = vcmask 1046528
        %v695 = vrot.slane %v682, 1
        %v696 = vrot.slane %v454, 1
        %v697 = vsel %vm694, %v695, %v696
        %v698 = vrot.slane %v683, 1
        %v699 = vrot.slane %v456, 1
        %v700 = vsel %vm694, %v698, %v699
        %v701 = vrot.slane %v684, 1
        %v702 = vrot.slane %v458, 1
        %v703 = vsel %vm694, %v701, %v702
        %v704 = vrot.slane %v685, 1
        %v705 = vrot.slane %v460, 1
        %v706 = vsel %vm694, %v704, %v705
        %v707 = vrot.slane %v686, 1
        %v708 = vrot.slane %v462, 1
        %v709 = vsel %vm694, %v707, %v708
        %v710 = vrot.slane %v687, 1
        %v711 = vrot.slane %v464, 1
        %v712 = vsel %vm694, %v710, %v711
        %v713 = vrot.slane %v688, 1
        %v714 = vrot.slane %v466, 1
        %v715 = vsel %vm694, %v713, %v714
        %v716 = vrot.slane %v689, 1
        %v717 = vrot.slane %v468, 1
        %v718 = vsel %vm694, %v716, %v717
        %v719 = vrot.slane %v690, 1
        %v720 = vrot.slane %v470, 1
        %v721 = vsel %vm694, %v719, %v720
        %v722 = vrot.slane %v691, 1
        %v723 = vrot.slane %v472, 1
        %v724 = vsel %vm694, %v722, %v723
        %v725 = vrot.slane %v692, 1
        %v726 = vrot.slane %v474, 1
        %v727 = vsel %vm694, %v725, %v726
        %v728 = vrot.slane %v693, 1
        %v729 = vrot.slane %v476, 1
        %v730 = vsel %vm694, %v728, %v729
        %v739 = vunpack.c.l.b16 %v489
        %v740 = vunpack.c.l.b16 %v697
        %v741 = vunpack.c.h.b16 %v489
        %v742 = vunpack.c.h.b16 %v697
        %v743 = vunpack.c.l.b16 %v492
        %v744 = vunpack.c.l.b16 %v696
        %v745 = vunpack.c.l.b16 %v504
        %v746 = vunpack.c.l.b16 %v700
        %v747 = vunpack.c.h.b16 %v504
        %v748 = vunpack.c.h.b16 %v700
        %v749 = vunpack.c.l.b16 %v507
        %v750 = vunpack.c.l.b16 %v699
        %v751 = vunpack.c.l.b16 %v519
        %v752 = vunpack.c.l.b16 %v703
        %v753 = vunpack.c.h.b16 %v519
        %v754 = vunpack.c.h.b16 %v703
        %v755 = vunpack.c.l.b16 %v522
        %v756 = vunpack.c.l.b16 %v702
        %v757 = vunpack.c.l.b16 %v534
        %v758 = vunpack.c.l.b16 %v706
        %v759 = vunpack.c.h.b16 %v534
        %v760 = vunpack.c.h.b16 %v706
        %v761 = vunpack.c.l.b16 %v537
        %v762 = vunpack.c.l.b16 %v705
        %v763 = vunpack.c.l.b16 %v549
        %v764 = vunpack.c.l.b16 %v709
        %v765 = vunpack.c.h.b16 %v549
        %v766 = vunpack.c.h.b16 %v709
        %v767 = vunpack.c.l.b16 %v552
        %v768 = vunpack.c.l.b16 %v708
        %v769 = vunpack.c.l.b16 %v564
        %v770 = vunpack.c.l.b16 %v712
        %v771 = vunpack.c.h.b16 %v564
        %v772 = vunpack.c.h.b16 %v712
        %v773 = vunpack.c.l.b16 %v567
        %v774 = vunpack.c.l.b16 %v711
        %v775 = vunpack.c.l.b16 %v579
        %v776 = vunpack.c.l.b16 %v715
        %v777 = vunpack.c.h.b16 %v579
        %v778 = vunpack.c.h.b16 %v715
        %v779 = vunpack.c.l.b16 %v582
        %v780 = vunpack.c.l.b16 %v714
        %v781 = vunpack.c.l.b16 %v594
        %v782 = vunpack.c.l.b16 %v718
        %v783 = vunpack.c.h.b16 %v594
        %v784 = vunpack.c.h.b16 %v718
        %v785 = vunpack.c.l.b16 %v597
        %v786 = vunpack.c.l.b16 %v717
        %v787 = vunpack.c.l.b16 %v609
        %v788 = vunpack.c.l.b16 %v721
        %v789 = vunpack.c.h.b16 %v609
        %v790 = vunpack.c.h.b16 %v721
        %v791 = vunpack.c.l.b16 %v612
        %v792 = vunpack.c.l.b16 %v720
        %v793 = vunpack.c.l.b16 %v624
        %v794 = vunpack.c.l.b16 %v724
        %v795 = vunpack.c.h.b16 %v624
        %v796 = vunpack.c.h.b16 %v724
        %v797 = vunpack.c.l.b16 %v627
        %v798 = vunpack.c.l.b16 %v723
        %v799 = vld [vmem:[%s1] sm:$0xf]
        %v800 = vld [vmem:[%s1 + $0x4] sm:$0xf]
        %v801 = vld [vmem:[%s1 + $0x8] sm:$0xf]
        %v802 = vld [vmem:[%s1 + $0xc] sm:$0xf]
        %v803 = vld [vmem:[%s1 + $0x10] sm:$0xf]
        %v804 = vld [vmem:[%s1 + $0x14] sm:$0xf]
        %v805 = vld [vmem:[%s1 + $0x18] sm:$0xf]
        %v806 = vld [vmem:[%s1 + $0x1c] sm:$0xf]
        %v807 = vld [vmem:[%s1 + $0x20] sm:$0xf]
        %v808 = vld [vmem:[%s1 + $0x24] sm:$0xf]
        %v809 = vld [vmem:[%s1 + $0x28] sm:$0xf]
        %v810 = vld [vmem:[%s1 + $0x2c] sm:$0xf]
        %v811 = vld [vmem:[%s1 + $0x30] sm:$0xf]
        %v812 = vld [vmem:[%s1 + $0x34] sm:$0xf]
        %v813 = vld [vmem:[%s1 + $0x38] sm:$0xf]
        %v814 = vld [vmem:[%s1 + $0x3c] sm:$0xf]
        %v815 = vld [vmem:[%s1 + $0x40] sm:$0xf]
        %v816 = vld [vmem:[%s1 + $0x44] sm:$0xf]
        %v817 = vld [vmem:[%s1 + $0x48] sm:$0xf]
        %v818 = vld [vmem:[%s1 + $0x4c] sm:$0xf]
        %v819 = vld [vmem:[%s1 + $0x50] sm:$0xf]
        %v820 = vld [vmem:[%s1 + $0x54] sm:$0xf]
        %v821 = vld [vmem:[%s1 + $0x58] sm:$0xf]
        %v822 = vld [vmem:[%s1 + $0x5c] sm:$0xf]
        %v823 = vld [vmem:[%s1 + $0x60] sm:$0xf]
        %v824 = vld [vmem:[%s1 + $0x64] sm:$0xf]
        %v825 = vld [vmem:[%s1 + $0x68] sm:$0xf]
        %v826 = vld [vmem:[%s1 + $0x6c] sm:$0xf]
        %v827 = vld [vmem:[%s1 + $0x70] sm:$0xf]
        %v828 = vld [vmem:[%s1 + $0x74] sm:$0xf]
        %v829 = vld [vmem:[%s1 + $0x78] sm:$0xf]
        %v830 = vld [vmem:[%s1 + $0x7c] sm:$0xf]
        %v831 = vld [vmem:[%s1 + $0x80] sm:$0xf]
        %v832 = vld [vmem:[%s1 + $0x84] sm:$0xf]
        %v833 = vld [vmem:[%s1 + $0x88] sm:$0xf]
        %v834 = vld [vmem:[%s1 + $0x8c] sm:$0xf]
        %v835 = vld [vmem:[%s1 + $0x90] sm:$0xf]
        %v836 = vld [vmem:[%s1 + $0x94] sm:$0xf]
        %v837 = vld [vmem:[%s1 + $0x98] sm:$0xf]
        %v838 = vld [vmem:[%s1 + $0x9c] sm:$0xf]
        %v839 = vld [vmem:[%s1 + $0xa0] sm:$0xf]
        %v840 = vld [vmem:[%s1 + $0xa4] sm:$0xf]
        %v841 = vld [vmem:[%s1 + $0xa8] sm:$0xf]
        %v842 = vld [vmem:[%s1 + $0xac] sm:$0xf]
        %v843 = vld [vmem:[%s1 + $0xb0] sm:$0xf]
        %v844 = vld [vmem:[%s1 + $0xb4] sm:$0xf]
        %v845 = vld [vmem:[%s1 + $0xb8] sm:$0xf]
        %v846 = vld [vmem:[%s1 + $0xbc] sm:$0xf]
        %v847 = vunpack.c.l.b16 %v639
        %v848 = vunpack.c.l.b16 %v727
        %v849 = vunpack.c.h.b16 %v639
        %v850 = vunpack.c.h.b16 %v727
        %v851 = vunpack.c.l.b16 %v642
        %v852 = vunpack.c.l.b16 %v726
        %s853 = scalar_lea.vmem %s1, 192
        %v854 = vld [vmem:[%s853] sm:$0xf]
        %v855 = vld [vmem:[%s853 + $0x4] sm:$0xf]
        %v856 = vld [vmem:[%s853 + $0x8] sm:$0xf]
        %v857 = vld [vmem:[%s853 + $0xc] sm:$0xf]
        %v858 = vld [vmem:[%s853 + $0x10] sm:$0xf]
        %v859 = vld [vmem:[%s853 + $0x14] sm:$0xf]
        %v860 = vld [vmem:[%s853 + $0x18] sm:$0xf]
        %v861 = vld [vmem:[%s853 + $0x1c] sm:$0xf]
        %v862 = vld [vmem:[%s853 + $0x20] sm:$0xf]
        %v863 = vld [vmem:[%s853 + $0x24] sm:$0xf]
        %v864 = vld [vmem:[%s853 + $0x28] sm:$0xf]
        %v865 = vld [vmem:[%s853 + $0x2c] sm:$0xf]
        %v866 = vld [vmem:[%s853 + $0x30] sm:$0xf]
        %v867 = vld [vmem:[%s853 + $0x34] sm:$0xf]
        %v868 = vld [vmem:[%s853 + $0x38] sm:$0xf]
        %v869 = vld [vmem:[%s853 + $0x3c] sm:$0xf]
        %v870 = vld [vmem:[%s853 + $0x40] sm:$0xf]
        %v871 = vld [vmem:[%s853 + $0x44] sm:$0xf]
        %v872 = vld [vmem:[%s853 + $0x48] sm:$0xf]
        %v873 = vld [vmem:[%s853 + $0x4c] sm:$0xf]
        %v874 = vld [vmem:[%s853 + $0x50] sm:$0xf]
        %v875 = vld [vmem:[%s853 + $0x54] sm:$0xf]
        %v876 = vld [vmem:[%s853 + $0x58] sm:$0xf]
        %v877 = vld [vmem:[%s853 + $0x5c] sm:$0xf]
        %v878 = vld [vmem:[%s853 + $0x60] sm:$0xf]
        %v879 = vld [vmem:[%s853 + $0x64] sm:$0xf]
        %v880 = vld [vmem:[%s853 + $0x68] sm:$0xf]
        %v881 = vld [vmem:[%s853 + $0x6c] sm:$0xf]
        %v882 = vld [vmem:[%s853 + $0x70] sm:$0xf]
        %v883 = vld [vmem:[%s853 + $0x74] sm:$0xf]
        %v884 = vld [vmem:[%s853 + $0x78] sm:$0xf]
        %v885 = vld [vmem:[%s853 + $0x7c] sm:$0xf]
        %v886 = vld [vmem:[%s853 + $0x80] sm:$0xf]
        %v887 = vld [vmem:[%s853 + $0x84] sm:$0xf]
        %v888 = vld [vmem:[%s853 + $0x88] sm:$0xf]
        %v889 = vld [vmem:[%s853 + $0x8c] sm:$0xf]
        %v890 = vld [vmem:[%s853 + $0x90] sm:$0xf]
        %v891 = vld [vmem:[%s853 + $0x94] sm:$0xf]
        %v892 = vld [vmem:[%s853 + $0x98] sm:$0xf]
        %v893 = vld [vmem:[%s853 + $0x9c] sm:$0xf]
        %v894 = vld [vmem:[%s853 + $0xa0] sm:$0xf]
        %v895 = vld [vmem:[%s853 + $0xa4] sm:$0xf]
        %v896 = vld [vmem:[%s853 + $0xa8] sm:$0xf]
        %v897 = vld [vmem:[%s853 + $0xac] sm:$0xf]
        %v898 = vld [vmem:[%s853 + $0xb0] sm:$0xf]
        %v899 = vld [vmem:[%s853 + $0xb4] sm:$0xf]
        %v900 = vld [vmem:[%s853 + $0xb8] sm:$0xf]
        %v901 = vld [vmem:[%s853 + $0xbc] sm:$0xf]
        %v902 = vpack.c.b16 %v747, %v745
        %v903 = vpack.c.b16 %v748, %v746
        %v904 = vpack.c.b16 %v399, %v398
        %v905 = vpack.c.b16 %v751, %v749
        %v906 = vpack.c.b16 %v752, %v750
        %v907 = vpack.c.b16 %v401, %v400
        %v908 = vpack.c.b16 %v755, %v753
        %v909 = vpack.c.b16 %v756, %v754
        %v910 = vpack.c.b16 %v759, %v757
        %v911 = vpack.c.b16 %v760, %v758
        %v912 = vpack.c.b16 %v405, %v404
        %v913 = vpack.c.b16 %v763, %v761
        %v914 = vpack.c.b16 %v764, %v762
        %v915 = vpack.c.b16 %v407, %v406
        %v916 = vpack.c.b16 %v767, %v765
        %v917 = vpack.c.b16 %v768, %v766
        %v918 = vpack.c.b16 %v771, %v769
        %v919 = vpack.c.b16 %v772, %v770
        %v920 = vpack.c.b16 %v411, %v410
        %v921 = vpack.c.b16 %v775, %v773
        %v922 = vpack.c.b16 %v776, %v774
        %v923 = vpack.c.b16 %v413, %v412
        %v924 = vpack.c.b16 %v779, %v777
        %v925 = vpack.c.b16 %v780, %v778
        %v926 = vpack.c.b16 %v783, %v781
        %v927 = vpack.c.b16 %v784, %v782
        %v928 = vpack.c.b16 %v417, %v416
        %v929 = vpack.c.b16 %v787, %v785
        %v930 = vpack.c.b16 %v788, %v786
        %v931 = vpack.c.b16 %v419, %v418
        %v932 = vpack.c.b16 %v791, %v789
        %v933 = vpack.c.b16 %v792, %v790
        %v934 = vpack.c.b16 %v795, %v793
        %v935 = vpack.c.b16 %v796, %v794
        %v936 = vpack.c.b16 %v423, %v422
        %v937 = vpack.c.b16 %v847, %v797
        %v938 = vpack.c.b16 %v848, %v798
        %v939 = vpack.c.b16 %v425, %v424
        %v940 = vpack.c.b16 %v851, %v849
        %v941 = vpack.c.b16 %v852, %v850
        %v1035 = vunpack.c.l.b16 %v854
        %v1036 = vunpack.c.l.b16 %v855
        %v1037 = vunpack.c.l.b16 %v856
        %v1038 = vunpack.c.l.b16 %v857
        %v1039 = vunpack.c.l.b16 %v858
        %v1040 = vunpack.c.l.b16 %v859
        %v1041 = vunpack.c.l.b16 %v860
        %v1042 = vunpack.c.l.b16 %v861
        %v1043 = vunpack.c.l.b16 %v862
        %v1044 = vunpack.c.l.b16 %v863
        %v1045 = vunpack.c.l.b16 %v864
        %v1046 = vunpack.c.l.b16 %v865
        %v1047 = vunpack.c.l.b16 %v866
        %v1048 = vunpack.c.l.b16 %v867
        %v1049 = vunpack.c.l.b16 %v868
        %v1050 = vunpack.c.l.b16 %v869
        %v1051 = vunpack.c.l.b16 %v870
        %v1052 = vunpack.c.l.b16 %v871
        %v1053 = vunpack.c.l.b16 %v872
        %v1054 = vunpack.c.l.b16 %v873
        %v1055 = vunpack.c.l.b16 %v874
        %v1056 = vunpack.c.l.b16 %v875
        %v1057 = vunpack.c.l.b16 %v876
        %v1058 = vunpack.c.l.b16 %v877
        %v1059 = vunpack.c.l.b16 %v878
        %v1060 = vunpack.c.l.b16 %v879
        %v1061 = vunpack.c.l.b16 %v880
        %v1062 = vunpack.c.l.b16 %v881
        %v1063 = vunpack.c.l.b16 %v882
        %v1064 = vunpack.c.l.b16 %v883
        %v1065 = vunpack.c.l.b16 %v884
        %v1066 = vunpack.c.l.b16 %v885
        %v1067 = vunpack.c.l.b16 %v886
        %v1068 = vunpack.c.l.b16 %v887
        %v1069 = vunpack.c.l.b16 %v888
        %v1070 = vunpack.c.l.b16 %v889
        %v1071 = vunpack.c.l.b16 %v890
        %v1072 = vunpack.c.l.b16 %v891
        %v1073 = vunpack.c.l.b16 %v892
        %v1074 = vunpack.c.l.b16 %v893
        %v1075 = vunpack.c.l.b16 %v894
        %v1076 = vunpack.c.l.b16 %v895
        %v1077 = vunpack.c.l.b16 %v896
        %v1078 = vunpack.c.l.b16 %v897
        %v1079 = vunpack.c.l.b16 %v898
        %v1080 = vunpack.c.l.b16 %v899
        %v1081 = vunpack.c.l.b16 %v900
        %v1082 = vunpack.c.l.b16 %v901
        %v1083 = vpack.c.b16 %v1036, %v1035
        %v1084 = vpack.c.b16 %v1038, %v1037
        %v1085 = vpack.c.b16 %v1040, %v1039
        %v1086 = vpack.c.b16 %v1042, %v1041
        %v1087 = vpack.c.b16 %v1044, %v1043
        %v1088 = vpack.c.b16 %v1046, %v1045
        %v1089 = vpack.c.b16 %v1048, %v1047
        %v1090 = vpack.c.b16 %v1050, %v1049
        %v1091 = vpack.c.b16 %v1052, %v1051
        %v1092 = vpack.c.b16 %v1054, %v1053
        %v1093 = vpack.c.b16 %v1056, %v1055
        %v1094 = vpack.c.b16 %v1058, %v1057
        %v1095 = vpack.c.b16 %v1060, %v1059
        %v1096 = vpack.c.b16 %v1062, %v1061
        %v1097 = vpack.c.b16 %v1064, %v1063
        %v1098 = vpack.c.b16 %v1066, %v1065
        %v1099 = vpack.c.b16 %v1068, %v1067
        %v1100 = vpack.c.b16 %v1070, %v1069
        %v1101 = vpack.c.b16 %v1072, %v1071
        %v1102 = vpack.c.b16 %v1074, %v1073
        %v1103 = vpack.c.b16 %v1076, %v1075
        %v1104 = vpack.c.b16 %v1078, %v1077
        %v1105 = vpack.c.b16 %v1080, %v1079
        %v1106 = vpack.c.b16 %v1082, %v1081
        %1131 = vmatprep.subr.bf16.mxu0 0
        %1132 = vmatpush1.bf16.msra.mxu0 %v1090
        %1133 = vmatprep.subr.bf16.mxu0 0
        %1134 = vmatpush1.bf16.msra.mxu0 %v1089
        %1135 = vmatprep.subr.bf16.mxu0 0
        %1136 = vmatpush1.bf16.msra.mxu0 %v1088
        %1137 = vmatprep.subr.bf16.mxu0 0
        %1138 = vmatpush1.bf16.msra.mxu0 %v1087
        %1139 = vmatprep.subr.bf16.mxu0 0
        %1140 = vmatpush1.bf16.msra.mxu0 %v1086
        %1141 = vmatprep.subr.bf16.mxu0 0
        %1142 = vmatpush1.bf16.msra.mxu0 %v1085
        %1143 = vmatprep.subr.bf16.mxu0 0
        %1144 = vmatpush1.bf16.msra.mxu0 %v1084
        %1145 = vmatprep.subr.bf16.mxu0 0
        %1146 = vmatpush1.bf16.msra.mxu0 %v1083
        %1147 = vmatprep.subr.bf16.mxu0 0
        %1148 = vmatpush2.bf16.msra.mxu0 %v1098
        %1149 = vmatprep.subr.bf16.mxu0 0
        %1150 = vmatpush2.bf16.msra.mxu0 %v1097
        %1151 = vmatprep.subr.bf16.mxu0 0
        %1152 = vmatpush2.bf16.msra.mxu0 %v1096
        %1153 = vmatprep.subr.bf16.mxu0 0
        %1154 = vmatpush2.bf16.msra.mxu0 %v1095
        %1155 = vmatprep.subr.bf16.mxu0 0
        %1156 = vmatpush2.bf16.msra.mxu0 %v1094
        %1157 = vmatprep.subr.bf16.mxu0 0
        %1158 = vmatpush2.bf16.msra.mxu0 %v1093
        %1159 = vmatprep.subr.bf16.mxu0 0
        %1160 = vmatpush2.bf16.msra.mxu0 %v1092
        %1161 = vmatprep.subr.bf16.mxu0 0
        %1162 = vmatpush2.bf16.msra.mxu0 %v1091
        %1163 = vmatprep.mubr.bf16.mxu0 %v902
        %1164 = vmatmul.mubr.bf16.gmra.mxu0 %v455
        %v1165 = vpop.f32.mrf.mxu0
        %v1166 = vadd.f32 0.0, %v1165
        %v1167 = vpop.f32.mrf.mxu0
        %v1168 = vpop.f32.mrf.mxu0
        %v1169 = vadd.f32 0.0, %v1168
        %v1170 = vpop.f32.mrf.mxu0
        %1171 = vmatprep.mubr.bf16.mxu0 %v905
        %1172 = vmatmul.mubr.bf16.gmra.mxu0 %v904
        %v1173 = vpop.f32.mrf.mxu0
        %v1174 = vadd.f32 0.0, %v1173
        %v1175 = vpop.f32.mrf.mxu0
        %v1176 = vpop.f32.mrf.mxu0
        %v1177 = vadd.f32 0.0, %v1176
        %v1178 = vpop.f32.mrf.mxu0
        %1179 = vmatprep.mubr.bf16.mxu0 %v908
        %1180 = vmatmul.mubr.bf16.gmra.mxu0 %v907
        %v1181 = vpop.f32.mrf.mxu0
        %v1182 = vadd.f32 0.0, %v1181
        %v1183 = vpop.f32.mrf.mxu0
        %v1184 = vpop.f32.mrf.mxu0
        %v1185 = vadd.f32 0.0, %v1184
        %v1186 = vpop.f32.mrf.mxu0
        %1187 = vmatprep.mubr.bf16.mxu0 %v910
        %1188 = vmatmul.mubr.bf16.gmra.mxu0 %v459
        %v1189 = vpop.f32.mrf.mxu0
        %v1190 = vadd.f32 0.0, %v1189
        %v1191 = vpop.f32.mrf.mxu0
        %v1192 = vpop.f32.mrf.mxu0
        %v1193 = vadd.f32 0.0, %v1192
        %v1194 = vpop.f32.mrf.mxu0
        %1195 = vmatprep.mubr.bf16.mxu0 %v913
        %1196 = vmatmul.mubr.bf16.gmra.mxu0 %v912
        %v1197 = vpop.f32.mrf.mxu0
        %v1198 = vadd.f32 0.0, %v1197
        %v1199 = vpop.f32.mrf.mxu0
        %v1200 = vpop.f32.mrf.mxu0
        %v1201 = vadd.f32 0.0, %v1200
        %v1202 = vpop.f32.mrf.mxu0
        %1203 = vmatprep.mubr.bf16.mxu0 %v916
        %1204 = vmatmul.mubr.bf16.gmra.mxu0 %v915
        %v1205 = vpop.f32.mrf.mxu0
        %v1206 = vadd.f32 0.0, %v1205
        %v1207 = vpop.f32.mrf.mxu0
        %v1208 = vpop.f32.mrf.mxu0
        %v1209 = vadd.f32 0.0, %v1208
        %v1210 = vpop.f32.mrf.mxu0
        %1211 = vmatprep.mubr.bf16.mxu0 %v918
        %1212 = vmatmul.mubr.bf16.gmra.mxu0 %v463
        %v1213 = vpop.f32.mrf.mxu0
        %v1214 = vadd.f32 0.0, %v1213
        %v1215 = vpop.f32.mrf.mxu0
        %v1216 = vpop.f32.mrf.mxu0
        %v1217 = vadd.f32 0.0, %v1216
        %v1218 = vpop.f32.mrf.mxu0
        %1219 = vmatprep.mubr.bf16.mxu0 %v921
        %1220 = vmatmul.mubr.bf16.gmra.mxu0 %v920
        %v1221 = vpop.f32.mrf.mxu0
        %v1222 = vadd.f32 0.0, %v1221
        %v1223 = vpop.f32.mrf.mxu0
        %v1224 = vpop.f32.mrf.mxu0
        %v1225 = vadd.f32 0.0, %v1224
        %v1226 = vpop.f32.mrf.mxu0
        %1227 = vmatprep.mubr.bf16.mxu0 %v924
        %1228 = vmatmul.mubr.bf16.gmra.mxu0 %v923
        %v1229 = vpop.f32.mrf.mxu0
        %v1230 = vadd.f32 0.0, %v1229
        %v1231 = vpop.f32.mrf.mxu0
        %v1232 = vpop.f32.mrf.mxu0
        %v1233 = vadd.f32 0.0, %v1232
        %v1234 = vpop.f32.mrf.mxu0
        %1235 = vmatprep.mubr.bf16.mxu0 %v926
        %1236 = vmatmul.mubr.bf16.gmra.mxu0 %v467
        %v1237 = vpop.f32.mrf.mxu0
        %v1238 = vadd.f32 0.0, %v1237
        %v1239 = vpop.f32.mrf.mxu0
        %v1240 = vpop.f32.mrf.mxu0
        %v1241 = vadd.f32 0.0, %v1240
        %v1242 = vpop.f32.mrf.mxu0
        %1243 = vmatprep.mubr.bf16.mxu0 %v929
        %1244 = vmatmul.mubr.bf16.gmra.mxu0 %v928
        %v1245 = vpop.f32.mrf.mxu0
        %v1246 = vadd.f32 0.0, %v1245
        %v1247 = vpop.f32.mrf.mxu0
        %v1248 = vpop.f32.mrf.mxu0
        %v1249 = vadd.f32 0.0, %v1248
        %v1250 = vpop.f32.mrf.mxu0
        %1251 = vmatprep.mubr.bf16.mxu0 %v932
        %1252 = vmatmul.mubr.bf16.gmra.mxu0 %v931
        %v1253 = vpop.f32.mrf.mxu0
        %v1254 = vadd.f32 0.0, %v1253
        %v1255 = vpop.f32.mrf.mxu0
        %v1256 = vpop.f32.mrf.mxu0
        %v1257 = vadd.f32 0.0, %v1256
        %v1258 = vpop.f32.mrf.mxu0
        %1259 = vmatprep.mubr.bf16.mxu0 %v934
        %1260 = vmatmul.mubr.bf16.gmra.mxu0 %v471
        %v1261 = vpop.f32.mrf.mxu0
        %v1262 = vadd.f32 0.0, %v1261
        %v1263 = vpop.f32.mrf.mxu0
        %v1264 = vpop.f32.mrf.mxu0
        %v1265 = vadd.f32 0.0, %v1264
        %v1266 = vpop.f32.mrf.mxu0
        %1267 = vmatprep.mubr.bf16.mxu0 %v937
        %1268 = vmatmul.mubr.bf16.gmra.mxu0 %v936
        %v1269 = vpop.f32.mrf.mxu0
        %v1270 = vadd.f32 0.0, %v1269
        %v1271 = vpop.f32.mrf.mxu0
        %v1272 = vpop.f32.mrf.mxu0
        %v1273 = vadd.f32 0.0, %v1272
        %v1274 = vpop.f32.mrf.mxu0
        %1275 = vmatprep.mubr.bf16.mxu0 %v940
        %1276 = vmatmul.mubr.bf16.gmra.mxu0 %v939
        %v1277 = vpop.f32.mrf.mxu0
        %v1278 = vadd.f32 0.0, %v1277
        %v1279 = vpop.f32.mrf.mxu0
        %v1280 = vpop.f32.mrf.mxu0
        %v1281 = vadd.f32 0.0, %v1280
        %v1282 = vpop.f32.mrf.mxu0
        %1283 = vdwg.mxu0
        %1284 = vmatprep.subr.bf16.mxu0 0
        %1285 = vmatpush1.bf16.msra.mxu0 %v1106
        %1286 = vmatprep.subr.bf16.mxu0 0
        %1287 = vmatpush1.bf16.msra.mxu0 %v1105
        %1288 = vmatprep.subr.bf16.mxu0 0
        %1289 = vmatpush1.bf16.msra.mxu0 %v1104
        %1290 = vmatprep.subr.bf16.mxu0 0
        %1291 = vmatpush1.bf16.msra.mxu0 %v1103
        %1292 = vmatprep.subr.bf16.mxu0 0
        %1293 = vmatpush1.bf16.msra.mxu0 %v1102
        %1294 = vmatprep.subr.bf16.mxu0 0
        %1295 = vmatpush1.bf16.msra.mxu0 %v1101
        %1296 = vmatprep.subr.bf16.mxu0 0
        %1297 = vmatpush1.bf16.msra.mxu0 %v1100
        %1298 = vmatprep.subr.bf16.mxu0 0
        %1299 = vmatpush1.bf16.msra.mxu0 %v1099
        %1300 = vmatprep.subr.bf16.mxu0 0
        %1301 = vmatpush2.bf16.msra.mxu0 0
        %1302 = vmatprep.subr.bf16.mxu0 0
        %1303 = vmatpush2.bf16.msra.mxu0 0
        %1304 = vmatprep.subr.bf16.mxu0 0
        %1305 = vmatpush2.bf16.msra.mxu0 0
        %1306 = vmatprep.subr.bf16.mxu0 0
        %1307 = vmatpush2.bf16.msra.mxu0 0
        %1308 = vmatprep.subr.bf16.mxu0 0
        %1309 = vmatpush2.bf16.msra.mxu0 0
        %1310 = vmatprep.subr.bf16.mxu0 0
        %1311 = vmatpush2.bf16.msra.mxu0 0
        %1312 = vmatprep.subr.bf16.mxu0 0
        %1313 = vmatpush2.bf16.msra.mxu0 0
        %1314 = vmatprep.subr.bf16.mxu0 0
        %1315 = vmatpush2.bf16.msra.mxu0 0
        %1316 = vmatprep.mubr.bf16.mxu0 0
        %1317 = vmatmul.mubr.bf16.gmra.mxu0 %v903
        %v1318 = vpop.f32.mrf.mxu0
        %v1319 = vadd.f32 %v1166, %v1318
        %v1320 = vpop.f32.mrf.mxu0
        %v1321 = vpop.f32.mrf.mxu0
        %v1322 = vadd.f32 %v1169, %v1321
        %v1323 = vpop.f32.mrf.mxu0
        %1324 = vmatprep.mubr.bf16.mxu0 0
        %1325 = vmatmul.mubr.bf16.gmra.mxu0 %v906
        %v1326 = vpop.f32.mrf.mxu0
        %v1327 = vadd.f32 %v1174, %v1326
        %v1328 = vpop.f32.mrf.mxu0
        %v1329 = vpop.f32.mrf.mxu0
        %v1330 = vadd.f32 %v1177, %v1329
        %v1331 = vpop.f32.mrf.mxu0
        %1332 = vmatprep.mubr.bf16.mxu0 0
        %1333 = vmatmul.mubr.bf16.gmra.mxu0 %v909
        %v1334 = vpop.f32.mrf.mxu0
        %v1335 = vadd.f32 %v1182, %v1334
        %v1336 = vpop.f32.mrf.mxu0
        %v1337 = vpop.f32.mrf.mxu0
        %v1338 = vadd.f32 %v1185, %v1337
        %v1339 = vpop.f32.mrf.mxu0
        %1340 = vmatprep.mubr.bf16.mxu0 0
        %1341 = vmatmul.mubr.bf16.gmra.mxu0 %v911
        %v1342 = vpop.f32.mrf.mxu0
        %v1343 = vadd.f32 %v1190, %v1342
        %v1344 = vpop.f32.mrf.mxu0
        %v1345 = vpop.f32.mrf.mxu0
        %v1346 = vadd.f32 %v1193, %v1345
        %v1347 = vpop.f32.mrf.mxu0
        %1348 = vmatprep.mubr.bf16.mxu0 0
        %1349 = vmatmul.mubr.bf16.gmra.mxu0 %v914
        %v1350 = vpop.f32.mrf.mxu0
        %v1351 = vadd.f32 %v1198, %v1350
        %v1352 = vpop.f32.mrf.mxu0
        %v1353 = vpop.f32.mrf.mxu0
        %v1354 = vadd.f32 %v1201, %v1353
        %v1355 = vpop.f32.mrf.mxu0
        %1356 = vmatprep.mubr.bf16.mxu0 0
        %1357 = vmatmul.mubr.bf16.gmra.mxu0 %v917
        %v1358 = vpop.f32.mrf.mxu0
        %v1359 = vadd.f32 %v1206, %v1358
        %v1360 = vpop.f32.mrf.mxu0
        %v1361 = vpop.f32.mrf.mxu0
        %v1362 = vadd.f32 %v1209, %v1361
        %v1363 = vpop.f32.mrf.mxu0
        %1364 = vmatprep.mubr.bf16.mxu0 0
        %1365 = vmatmul.mubr.bf16.gmra.mxu0 %v919
        %v1366 = vpop.f32.mrf.mxu0
        %v1367 = vadd.f32 %v1214, %v1366
        %v1368 = vpop.f32.mrf.mxu0
        %v1369 = vpop.f32.mrf.mxu0
        %v1370 = vadd.f32 %v1217, %v1369
        %v1371 = vpop.f32.mrf.mxu0
        %1372 = vmatprep.mubr.bf16.mxu0 0
        %1373 = vmatmul.mubr.bf16.gmra.mxu0 %v922
        %v1374 = vpop.f32.mrf.mxu0
        %v1375 = vadd.f32 %v1222, %v1374
        %v1376 = vpop.f32.mrf.mxu0
        %v1377 = vpop.f32.mrf.mxu0
        %v1378 = vadd.f32 %v1225, %v1377
        %v1379 = vpop.f32.mrf.mxu0
        %1380 = vmatprep.mubr.bf16.mxu0 0
        %1381 = vmatmul.mubr.bf16.gmra.mxu0 %v925
        %v1382 = vpop.f32.mrf.mxu0
        %v1383 = vadd.f32 %v1230, %v1382
        %v1384 = vpop.f32.mrf.mxu0
        %v1385 = vpop.f32.mrf.mxu0
        %v1386 = vadd.f32 %v1233, %v1385
        %v1387 = vpop.f32.mrf.mxu0
        %1388 = vmatprep.mubr.bf16.mxu0 0
        %1389 = vmatmul.mubr.bf16.gmra.mxu0 %v927
        %v1390 = vpop.f32.mrf.mxu0
        %v1391 = vadd.f32 %v1238, %v1390
        %v1392 = vpop.f32.mrf.mxu0
        %v1393 = vpop.f32.mrf.mxu0
        %v1394 = vadd.f32 %v1241, %v1393
        %v1395 = vpop.f32.mrf.mxu0
        %1396 = vmatprep.mubr.bf16.mxu0 0
        %1397 = vmatmul.mubr.bf16.gmra.mxu0 %v930
        %v1398 = vpop.f32.mrf.mxu0
        %v1399 = vadd.f32 %v1246, %v1398
        %v1400 = vpop.f32.mrf.mxu0
        %v1401 = vpop.f32.mrf.mxu0
        %v1402 = vadd.f32 %v1249, %v1401
        %v1403 = vpop.f32.mrf.mxu0
        %1404 = vmatprep.mubr.bf16.mxu0 0
        %1405 = vmatmul.mubr.bf16.gmra.mxu0 %v933
        %v1406 = vpop.f32.mrf.mxu0
        %v1407 = vadd.f32 %v1254, %v1406
        %v1408 = vpop.f32.mrf.mxu0
        %v1409 = vpop.f32.mrf.mxu0
        %v1410 = vadd.f32 %v1257, %v1409
        %v1411 = vpop.f32.mrf.mxu0
        %1412 = vmatprep.mubr.bf16.mxu0 0
        %1413 = vmatmul.mubr.bf16.gmra.mxu0 %v935
        %v1414 = vpop.f32.mrf.mxu0
        %v1415 = vadd.f32 %v1262, %v1414
        %v1416 = vpop.f32.mrf.mxu0
        %v1417 = vpop.f32.mrf.mxu0
        %v1418 = vadd.f32 %v1265, %v1417
        %v1419 = vpop.f32.mrf.mxu0
        %1420 = vmatprep.mubr.bf16.mxu0 0
        %1421 = vmatmul.mubr.bf16.gmra.mxu0 %v938
        %v1422 = vpop.f32.mrf.mxu0
        %v1423 = vadd.f32 %v1270, %v1422
        %v1424 = vpop.f32.mrf.mxu0
        %v1425 = vpop.f32.mrf.mxu0
        %v1426 = vadd.f32 %v1273, %v1425
        %v1427 = vpop.f32.mrf.mxu0
        %1428 = vmatprep.mubr.bf16.mxu0 0
        %1429 = vmatmul.mubr.bf16.gmra.mxu0 %v941
        %v1430 = vpop.f32.mrf.mxu0
        %v1431 = vadd.f32 %v1278, %v1430
        %v1432 = vpop.f32.mrf.mxu0
        %v1433 = vpop.f32.mrf.mxu0
        %v1434 = vadd.f32 %v1281, %v1433
        %v1435 = vpop.f32.mrf.mxu0
        %1436 = vdwg.mxu0
        %v1437 = vpack.c.b16 %v741, %v739
        %v1438 = vpack.c.b16 %v742, %v740
        %v1439 = vpack.c.b16 %v396, %v395
        %v1440 = vpack.c.b16 %v745, %v743
        %v1441 = vpack.c.b16 %v746, %v744
        %v1442 = vpack.c.b16 %v398, %v397
        %v1443 = vpack.c.b16 %v749, %v747
        %v1444 = vpack.c.b16 %v750, %v748
        %v1445 = vpack.c.b16 %v753, %v751
        %v1446 = vpack.c.b16 %v754, %v752
        %v1447 = vpack.c.b16 %v402, %v401
        %v1448 = vpack.c.b16 %v757, %v755
        %v1449 = vpack.c.b16 %v758, %v756
        %v1450 = vpack.c.b16 %v404, %v403
        %v1451 = vpack.c.b16 %v761, %v759
        %v1452 = vpack.c.b16 %v762, %v760
        %v1453 = vpack.c.b16 %v765, %v763
        %v1454 = vpack.c.b16 %v766, %v764
        %v1455 = vpack.c.b16 %v408, %v407
        %v1456 = vpack.c.b16 %v769, %v767
        %v1457 = vpack.c.b16 %v770, %v768
        %v1458 = vpack.c.b16 %v410, %v409
        %v1459 = vpack.c.b16 %v773, %v771
        %v1460 = vpack.c.b16 %v774, %v772
        %v1461 = vpack.c.b16 %v777, %v775
        %v1462 = vpack.c.b16 %v778, %v776
        %v1463 = vpack.c.b16 %v414, %v413
        %v1464 = vpack.c.b16 %v781, %v779
        %v1465 = vpack.c.b16 %v782, %v780
        %v1466 = vpack.c.b16 %v416, %v415
        %v1467 = vpack.c.b16 %v785, %v783
        %v1468 = vpack.c.b16 %v786, %v784
        %v1469 = vpack.c.b16 %v789, %v787
        %v1470 = vpack.c.b16 %v790, %v788
        %v1471 = vpack.c.b16 %v420, %v419
        %v1472 = vpack.c.b16 %v793, %v791
        %v1473 = vpack.c.b16 %v794, %v792
        %v1474 = vpack.c.b16 %v422, %v421
        %v1475 = vpack.c.b16 %v797, %v795
        %v1476 = vpack.c.b16 %v798, %v796
        %v1570 = vunpack.c.l.b16 %v799
        %v1571 = vunpack.c.l.b16 %v800
        %v1572 = vunpack.c.l.b16 %v801
        %v1573 = vunpack.c.l.b16 %v802
        %v1574 = vunpack.c.l.b16 %v803
        %v1575 = vunpack.c.l.b16 %v804
        %v1576 = vunpack.c.l.b16 %v805
        %v1577 = vunpack.c.l.b16 %v806
        %v1578 = vunpack.c.l.b16 %v807
        %v1579 = vunpack.c.l.b16 %v808
        %v1580 = vunpack.c.l.b16 %v809
        %v1581 = vunpack.c.l.b16 %v810
        %v1582 = vunpack.c.l.b16 %v811
        %v1583 = vunpack.c.l.b16 %v812
        %v1584 = vunpack.c.l.b16 %v813
        %v1585 = vunpack.c.l.b16 %v814
        %v1586 = vunpack.c.l.b16 %v815
        %v1587 = vunpack.c.l.b16 %v816
        %v1588 = vunpack.c.l.b16 %v817
        %v1589 = vunpack.c.l.b16 %v818
        %v1590 = vunpack.c.l.b16 %v819
        %v1591 = vunpack.c.l.b16 %v820
        %v1592 = vunpack.c.l.b16 %v821
        %v1593 = vunpack.c.l.b16 %v822
        %v1594 = vunpack.c.l.b16 %v823
        %v1595 = vunpack.c.l.b16 %v824
        %v1596 = vunpack.c.l.b16 %v825
        %v1597 = vunpack.c.l.b16 %v826
        %v1598 = vunpack.c.l.b16 %v827
        %v1599 = vunpack.c.l.b16 %v828
        %v1600 = vunpack.c.l.b16 %v829
        %v1601 = vunpack.c.l.b16 %v830
        %v1602 = vunpack.c.l.b16 %v831
        %v1603 = vunpack.c.l.b16 %v832
        %v1604 = vunpack.c.l.b16 %v833
        %v1605 = vunpack.c.l.b16 %v834
        %v1606 = vunpack.c.l.b16 %v835
        %v1607 = vunpack.c.l.b16 %v836
        %v1608 = vunpack.c.l.b16 %v837
        %v1609 = vunpack.c.l.b16 %v838
        %v1610 = vunpack.c.l.b16 %v839
        %v1611 = vunpack.c.l.b16 %v840
        %v1612 = vunpack.c.l.b16 %v841
        %v1613 = vunpack.c.l.b16 %v842
        %v1614 = vunpack.c.l.b16 %v843
        %v1615 = vunpack.c.l.b16 %v844
        %v1616 = vunpack.c.l.b16 %v845
        %v1617 = vunpack.c.l.b16 %v846
        %v1618 = vpack.c.b16 %v1571, %v1570
        %v1619 = vpack.c.b16 %v1573, %v1572
        %v1620 = vpack.c.b16 %v1575, %v1574
        %v1621 = vpack.c.b16 %v1577, %v1576
        %v1622 = vpack.c.b16 %v1579, %v1578
        %v1623 = vpack.c.b16 %v1581, %v1580
        %v1624 = vpack.c.b16 %v1583, %v1582
        %v1625 = vpack.c.b16 %v1585, %v1584
        %v1626 = vpack.c.b16 %v1587, %v1586
        %v1627 = vpack.c.b16 %v1589, %v1588
        %v1628 = vpack.c.b16 %v1591, %v1590
        %v1629 = vpack.c.b16 %v1593, %v1592
        %v1630 = vpack.c.b16 %v1595, %v1594
        %v1631 = vpack.c.b16 %v1597, %v1596
        %v1632 = vpack.c.b16 %v1599, %v1598
        %v1633 = vpack.c.b16 %v1601, %v1600
        %v1634 = vpack.c.b16 %v1603, %v1602
        %v1635 = vpack.c.b16 %v1605, %v1604
        %v1636 = vpack.c.b16 %v1607, %v1606
        %v1637 = vpack.c.b16 %v1609, %v1608
        %v1638 = vpack.c.b16 %v1611, %v1610
        %v1639 = vpack.c.b16 %v1613, %v1612
        %v1640 = vpack.c.b16 %v1615, %v1614
        %v1641 = vpack.c.b16 %v1617, %v1616
        %1666 = vmatprep.subr.bf16.mxu0 0
        %1667 = vmatpush1.bf16.msra.mxu0 %v1625
        %1668 = vmatprep.subr.bf16.mxu0 0
        %1669 = vmatpush1.bf16.msra.mxu0 %v1624
        %1670 = vmatprep.subr.bf16.mxu0 0
        %1671 = vmatpush1.bf16.msra.mxu0 %v1623
        %1672 = vmatprep.subr.bf16.mxu0 0
        %1673 = vmatpush1.bf16.msra.mxu0 %v1622
        %1674 = vmatprep.subr.bf16.mxu0 0
        %1675 = vmatpush1.bf16.msra.mxu0 %v1621
        %1676 = vmatprep.subr.bf16.mxu0 0
        %1677 = vmatpush1.bf16.msra.mxu0 %v1620
        %1678 = vmatprep.subr.bf16.mxu0 0
        %1679 = vmatpush1.bf16.msra.mxu0 %v1619
        %1680 = vmatprep.subr.bf16.mxu0 0
        %1681 = vmatpush1.bf16.msra.mxu0 %v1618
        %1682 = vmatprep.subr.bf16.mxu0 0
        %1683 = vmatpush2.bf16.msra.mxu0 %v1633
        %1684 = vmatprep.subr.bf16.mxu0 0
        %1685 = vmatpush2.bf16.msra.mxu0 %v1632
        %1686 = vmatprep.subr.bf16.mxu0 0
        %1687 = vmatpush2.bf16.msra.mxu0 %v1631
        %1688 = vmatprep.subr.bf16.mxu0 0
        %1689 = vmatpush2.bf16.msra.mxu0 %v1630
        %1690 = vmatprep.subr.bf16.mxu0 0
        %1691 = vmatpush2.bf16.msra.mxu0 %v1629
        %1692 = vmatprep.subr.bf16.mxu0 0
        %1693 = vmatpush2.bf16.msra.mxu0 %v1628
        %1694 = vmatprep.subr.bf16.mxu0 0
        %1695 = vmatpush2.bf16.msra.mxu0 %v1627
        %1696 = vmatprep.subr.bf16.mxu0 0
        %1697 = vmatpush2.bf16.msra.mxu0 %v1626
        %1698 = vmatprep.mubr.bf16.mxu0 %v1437
        %1699 = vmatmul.mubr.bf16.gmra.mxu0 %v453
        %v1700 = vpop.f32.mrf.mxu0
        %v1701 = vadd.f32 %v1319, %v1700
        %v1702 = vpop.f32.mrf.mxu0
        %v1703 = vpop.f32.mrf.mxu0
        %v1704 = vadd.f32 %v1322, %v1703
        %v1705 = vpop.f32.mrf.mxu0
        %1706 = vmatprep.mubr.bf16.mxu0 %v1440
        %1707 = vmatmul.mubr.bf16.gmra.mxu0 %v1439
        %v1708 = vpop.f32.mrf.mxu0
        %v1709 = vadd.f32 %v1327, %v1708
        %v1710 = vpop.f32.mrf.mxu0
        %v1711 = vpop.f32.mrf.mxu0
        %v1712 = vadd.f32 %v1330, %v1711
        %v1713 = vpop.f32.mrf.mxu0
        %1714 = vmatprep.mubr.bf16.mxu0 %v1443
        %1715 = vmatmul.mubr.bf16.gmra.mxu0 %v1442
        %v1716 = vpop.f32.mrf.mxu0
        %v1717 = vadd.f32 %v1335, %v1716
        %v1718 = vpop.f32.mrf.mxu0
        %v1719 = vpop.f32.mrf.mxu0
        %v1720 = vadd.f32 %v1338, %v1719
        %v1721 = vpop.f32.mrf.mxu0
        %1722 = vmatprep.mubr.bf16.mxu0 %v1445
        %1723 = vmatmul.mubr.bf16.gmra.mxu0 %v457
        %v1724 = vpop.f32.mrf.mxu0
        %v1725 = vadd.f32 %v1343, %v1724
        %v1726 = vpop.f32.mrf.mxu0
        %v1727 = vpop.f32.mrf.mxu0
        %v1728 = vadd.f32 %v1346, %v1727
        %v1729 = vpop.f32.mrf.mxu0
        %1730 = vmatprep.mubr.bf16.mxu0 %v1448
        %1731 = vmatmul.mubr.bf16.gmra.mxu0 %v1447
        %v1732 = vpop.f32.mrf.mxu0
        %v1733 = vadd.f32 %v1351, %v1732
        %v1734 = vpop.f32.mrf.mxu0
        %v1735 = vpop.f32.mrf.mxu0
        %v1736 = vadd.f32 %v1354, %v1735
        %v1737 = vpop.f32.mrf.mxu0
        %1738 = vmatprep.mubr.bf16.mxu0 %v1451
        %1739 = vmatmul.mubr.bf16.gmra.mxu0 %v1450
        %v1740 = vpop.f32.mrf.mxu0
        %v1741 = vadd.f32 %v1359, %v1740
        %v1742 = vpop.f32.mrf.mxu0
        %v1743 = vpop.f32.mrf.mxu0
        %v1744 = vadd.f32 %v1362, %v1743
        %v1745 = vpop.f32.mrf.mxu0
        %1746 = vmatprep.mubr.bf16.mxu0 %v1453
        %1747 = vmatmul.mubr.bf16.gmra.mxu0 %v461
        %v1748 = vpop.f32.mrf.mxu0
        %v1749 = vadd.f32 %v1367, %v1748
        %v1750 = vpop.f32.mrf.mxu0
        %v1751 = vpop.f32.mrf.mxu0
        %v1752 = vadd.f32 %v1370, %v1751
        %v1753 = vpop.f32.mrf.mxu0
        %1754 = vmatprep.mubr.bf16.mxu0 %v1456
        %1755 = vmatmul.mubr.bf16.gmra.mxu0 %v1455
        %v1756 = vpop.f32.mrf.mxu0
        %v1757 = vadd.f32 %v1375, %v1756
        %v1758 = vpop.f32.mrf.mxu0
        %v1759 = vpop.f32.mrf.mxu0
        %v1760 = vadd.f32 %v1378, %v1759
        %v1761 = vpop.f32.mrf.mxu0
        %1762 = vmatprep.mubr.bf16.mxu0 %v1459
        %1763 = vmatmul.mubr.bf16.gmra.mxu0 %v1458
        %v1764 = vpop.f32.mrf.mxu0
        %v1765 = vadd.f32 %v1383, %v1764
        %v1766 = vpop.f32.mrf.mxu0
        %v1767 = vpop.f32.mrf.mxu0
        %v1768 = vadd.f32 %v1386, %v1767
        %v1769 = vpop.f32.mrf.mxu0
        %1770 = vmatprep.mubr.bf16.mxu0 %v1461
        %1771 = vmatmul.mubr.bf16.gmra.mxu0 %v465
        %v1772 = vpop.f32.mrf.mxu0
        %v1773 = vadd.f32 %v1391, %v1772
        %v1774 = vpop.f32.mrf.mxu0
        %v1775 = vpop.f32.mrf.mxu0
        %v1776 = vadd.f32 %v1394, %v1775
        %v1777 = vpop.f32.mrf.mxu0
        %1778 = vmatprep.mubr.bf16.mxu0 %v1464
        %1779 = vmatmul.mubr.bf16.gmra.mxu0 %v1463
        %v1780 = vpop.f32.mrf.mxu0
        %v1781 = vadd.f32 %v1399, %v1780
        %v1782 = vpop.f32.mrf.mxu0
        %v1783 = vpop.f32.mrf.mxu0
        %v1784 = vadd.f32 %v1402, %v1783
        %v1785 = vpop.f32.mrf.mxu0
        %1786 = vmatprep.mubr.bf16.mxu0 %v1467
        %1787 = vmatmul.mubr.bf16.gmra.mxu0 %v1466
        %v1788 = vpop.f32.mrf.mxu0
        %v1789 = vadd.f32 %v1407, %v1788
        %v1790 = vpop.f32.mrf.mxu0
        %v1791 = vpop.f32.mrf.mxu0
        %v1792 = vadd.f32 %v1410, %v1791
        %v1793 = vpop.f32.mrf.mxu0
        %1794 = vmatprep.mubr.bf16.mxu0 %v1469
        %1795 = vmatmul.mubr.bf16.gmra.mxu0 %v469
        %v1796 = vpop.f32.mrf.mxu0
        %v1797 = vadd.f32 %v1415, %v1796
        %v1798 = vpop.f32.mrf.mxu0
        %v1799 = vpop.f32.mrf.mxu0
        %v1800 = vadd.f32 %v1418, %v1799
        %v1801 = vpop.f32.mrf.mxu0
        %1802 = vmatprep.mubr.bf16.mxu0 %v1472
        %1803 = vmatmul.mubr.bf16.gmra.mxu0 %v1471
        %v1804 = vpop.f32.mrf.mxu0
        %v1805 = vadd.f32 %v1423, %v1804
        %v1806 = vpop.f32.mrf.mxu0
        %v1807 = vpop.f32.mrf.mxu0
        %v1808 = vadd.f32 %v1426, %v1807
        %v1809 = vpop.f32.mrf.mxu0
        %1810 = vmatprep.mubr.bf16.mxu0 %v1475
        %1811 = vmatmul.mubr.bf16.gmra.mxu0 %v1474
        %v1812 = vpop.f32.mrf.mxu0
        %v1813 = vadd.f32 %v1431, %v1812
        %v1814 = vpop.f32.mrf.mxu0
        %v1815 = vpop.f32.mrf.mxu0
        %v1816 = vadd.f32 %v1434, %v1815
        %v1817 = vpop.f32.mrf.mxu0
        %1818 = vdwg.mxu0
        %1819 = vmatprep.subr.bf16.mxu0 0
        %1820 = vmatpush1.bf16.msra.mxu0 %v1641
        %1821 = vmatprep.subr.bf16.mxu0 0
        %1822 = vmatpush1.bf16.msra.mxu0 %v1640
        %1823 = vmatprep.subr.bf16.mxu0 0
        %1824 = vmatpush1.bf16.msra.mxu0 %v1639
        %1825 = vmatprep.subr.bf16.mxu0 0
        %1826 = vmatpush1.bf16.msra.mxu0 %v1638
        %1827 = vmatprep.subr.bf16.mxu0 0
        %1828 = vmatpush1.bf16.msra.mxu0 %v1637
        %1829 = vmatprep.subr.bf16.mxu0 0
        %1830 = vmatpush1.bf16.msra.mxu0 %v1636
        %1831 = vmatprep.subr.bf16.mxu0 0
        %1832 = vmatpush1.bf16.msra.mxu0 %v1635
        %1833 = vmatprep.subr.bf16.mxu0 0
        %1834 = vmatpush1.bf16.msra.mxu0 %v1634
        %1835 = vmatprep.subr.bf16.mxu0 0
        %1836 = vmatpush2.bf16.msra.mxu0 0
        %1837 = vmatprep.subr.bf16.mxu0 0
        %1838 = vmatpush2.bf16.msra.mxu0 0
        %1839 = vmatprep.subr.bf16.mxu0 0
        %1840 = vmatpush2.bf16.msra.mxu0 0
        %1841 = vmatprep.subr.bf16.mxu0 0
        %1842 = vmatpush2.bf16.msra.mxu0 0
        %1843 = vmatprep.subr.bf16.mxu0 0
        %1844 = vmatpush2.bf16.msra.mxu0 0
        %1845 = vmatprep.subr.bf16.mxu0 0
        %1846 = vmatpush2.bf16.msra.mxu0 0
        %1847 = vmatprep.subr.bf16.mxu0 0
        %1848 = vmatpush2.bf16.msra.mxu0 0
        %1849 = vmatprep.subr.bf16.mxu0 0
        %1850 = vmatpush2.bf16.msra.mxu0 0
        %1851 = vmatprep.mubr.bf16.mxu0 0
        %1852 = vmatmul.mubr.bf16.gmra.mxu0 %v1438
        %v1853 = vpop.f32.mrf.mxu0
        %v1854 = vadd.f32 %v1701, %v1853
        %v1855 = vpop.f32.mrf.mxu0
        %v1856 = vpop.f32.mrf.mxu0
        %v1857 = vadd.f32 %v1704, %v1856
        %v1858 = vpop.f32.mrf.mxu0
        %1859 = vmatprep.mubr.bf16.mxu0 0
        %1860 = vmatmul.mubr.bf16.gmra.mxu0 %v1441
        %v1861 = vpop.f32.mrf.mxu0
        %v1862 = vadd.f32 %v1709, %v1861
        %v1863 = vpop.f32.mrf.mxu0
        %v1864 = vpop.f32.mrf.mxu0
        %v1865 = vadd.f32 %v1712, %v1864
        %v1866 = vpop.f32.mrf.mxu0
        %1867 = vmatprep.mubr.bf16.mxu0 0
        %1868 = vmatmul.mubr.bf16.gmra.mxu0 %v1444
        %v1869 = vpop.f32.mrf.mxu0
        %v1870 = vadd.f32 %v1717, %v1869
        %v1871 = vpop.f32.mrf.mxu0
        %v1872 = vpop.f32.mrf.mxu0
        %v1873 = vadd.f32 %v1720, %v1872
        %v1874 = vpop.f32.mrf.mxu0
        %1875 = vmatprep.mubr.bf16.mxu0 0
        %1876 = vmatmul.mubr.bf16.gmra.mxu0 %v1446
        %v1877 = vpop.f32.mrf.mxu0
        %v1878 = vadd.f32 %v1725, %v1877
        %v1879 = vpop.f32.mrf.mxu0
        %v1880 = vpop.f32.mrf.mxu0
        %v1881 = vadd.f32 %v1728, %v1880
        %v1882 = vpop.f32.mrf.mxu0
        %1883 = vmatprep.mubr.bf16.mxu0 0
        %1884 = vmatmul.mubr.bf16.gmra.mxu0 %v1449
        %v1885 = vpop.f32.mrf.mxu0
        %v1886 = vadd.f32 %v1733, %v1885
        %v1887 = vpop.f32.mrf.mxu0
        %v1888 = vpop.f32.mrf.mxu0
        %v1889 = vadd.f32 %v1736, %v1888
        %v1890 = vpop.f32.mrf.mxu0
        %1891 = vmatprep.mubr.bf16.mxu0 0
        %1892 = vmatmul.mubr.bf16.gmra.mxu0 %v1452
        %v1893 = vpop.f32.mrf.mxu0
        %v1894 = vadd.f32 %v1741, %v1893
        %v1895 = vpop.f32.mrf.mxu0
        %v1896 = vpop.f32.mrf.mxu0
        %v1897 = vadd.f32 %v1744, %v1896
        %v1898 = vpop.f32.mrf.mxu0
        %1899 = vmatprep.mubr.bf16.mxu0 0
        %1900 = vmatmul.mubr.bf16.gmra.mxu0 %v1454
        %v1901 = vpop.f32.mrf.mxu0
        %v1902 = vadd.f32 %v1749, %v1901
        %v1903 = vpop.f32.mrf.mxu0
        %v1904 = vpop.f32.mrf.mxu0
        %v1905 = vadd.f32 %v1752, %v1904
        %v1906 = vpop.f32.mrf.mxu0
        %1907 = vmatprep.mubr.bf16.mxu0 0
        %1908 = vmatmul.mubr.bf16.gmra.mxu0 %v1457
        %v1909 = vpop.f32.mrf.mxu0
        %v1910 = vadd.f32 %v1757, %v1909
        %v1911 = vpop.f32.mrf.mxu0
        %v1912 = vpop.f32.mrf.mxu0
        %v1913 = vadd.f32 %v1760, %v1912
        %v1914 = vpop.f32.mrf.mxu0
        %1915 = vmatprep.mubr.bf16.mxu0 0
        %1916 = vmatmul.mubr.bf16.gmra.mxu0 %v1460
        %v1917 = vpop.f32.mrf.mxu0
        %v1918 = vadd.f32 %v1765, %v1917
        %v1919 = vpop.f32.mrf.mxu0
        %v1920 = vpop.f32.mrf.mxu0
        %v1921 = vadd.f32 %v1768, %v1920
        %v1922 = vpop.f32.mrf.mxu0
        %1923 = vmatprep.mubr.bf16.mxu0 0
        %1924 = vmatmul.mubr.bf16.gmra.mxu0 %v1462
        %v1925 = vpop.f32.mrf.mxu0
        %v1926 = vadd.f32 %v1773, %v1925
        %v1927 = vpop.f32.mrf.mxu0
        %v1928 = vpop.f32.mrf.mxu0
        %v1929 = vadd.f32 %v1776, %v1928
        %v1930 = vpop.f32.mrf.mxu0
        %1931 = vmatprep.mubr.bf16.mxu0 0
        %1932 = vmatmul.mubr.bf16.gmra.mxu0 %v1465
        %v1933 = vpop.f32.mrf.mxu0
        %v1934 = vadd.f32 %v1781, %v1933
        %v1935 = vpop.f32.mrf.mxu0
        %v1936 = vpop.f32.mrf.mxu0
        %v1937 = vadd.f32 %v1784, %v1936
        %v1938 = vpop.f32.mrf.mxu0
        %1939 = vmatprep.mubr.bf16.mxu0 0
        %1940 = vmatmul.mubr.bf16.gmra.mxu0 %v1468
        %v1941 = vpop.f32.mrf.mxu0
        %v1942 = vadd.f32 %v1789, %v1941
        %v1943 = vpop.f32.mrf.mxu0
        %v1944 = vpop.f32.mrf.mxu0
        %v1945 = vadd.f32 %v1792, %v1944
        %v1946 = vpop.f32.mrf.mxu0
        %1947 = vmatprep.mubr.bf16.mxu0 0
        %1948 = vmatmul.mubr.bf16.gmra.mxu0 %v1470
        %v1949 = vpop.f32.mrf.mxu0
        %v1950 = vadd.f32 %v1797, %v1949
        %v1951 = vpop.f32.mrf.mxu0
        %v1952 = vpop.f32.mrf.mxu0
        %v1953 = vadd.f32 %v1800, %v1952
        %v1954 = vpop.f32.mrf.mxu0
        %1955 = vmatprep.mubr.bf16.mxu0 0
        %1956 = vmatmul.mubr.bf16.gmra.mxu0 %v1473
        %v1957 = vpop.f32.mrf.mxu0
        %v1958 = vadd.f32 %v1805, %v1957
        %v1959 = vpop.f32.mrf.mxu0
        %v1960 = vpop.f32.mrf.mxu0
        %v1961 = vadd.f32 %v1808, %v1960
        %v1962 = vpop.f32.mrf.mxu0
        %1963 = vmatprep.mubr.bf16.mxu0 0
        %1964 = vmatmul.mubr.bf16.gmra.mxu0 %v1476
        %v1965 = vpop.f32.mrf.mxu0
        %v1966 = vadd.f32 %v1813, %v1965
        %v1967 = vpop.f32.mrf.mxu0
        %v1968 = vpop.f32.mrf.mxu0
        %v1969 = vadd.f32 %v1816, %v1968
        %v1970 = vpop.f32.mrf.mxu0
        %1971 = vdwg.mxu0
        %v1972 = vunpack.c.l.b16 %v654
        %v1973 = vunpack.c.l.b16 %v730
        %v1974 = vunpack.c.h.b16 %v654
        %v1975 = vunpack.c.h.b16 %v730
        %v1976 = vunpack.c.l.b16 %v657
        %v1977 = vunpack.c.l.b16 %v729
        %s1978 = scalar_lea.vmem %s1, 384
        %v1979 = vld [vmem:[%s1978] sm:$0xf]
        %v1980 = vld [vmem:[%s1978 + $0x4] sm:$0xf]
        %v1981 = vld [vmem:[%s1978 + $0x8] sm:$0xf]
        %v1982 = vld [vmem:[%s1978 + $0xc] sm:$0xf]
        %v1983 = vld [vmem:[%s1978 + $0x10] sm:$0xf]
        %v1984 = vld [vmem:[%s1978 + $0x14] sm:$0xf]
        %v1985 = vld [vmem:[%s1978 + $0x18] sm:$0xf]
        %v1986 = vld [vmem:[%s1978 + $0x1c] sm:$0xf]
        %v1987 = vld [vmem:[%s1978 + $0x20] sm:$0xf]
        %v1988 = vld [vmem:[%s1978 + $0x24] sm:$0xf]
        %v1989 = vld [vmem:[%s1978 + $0x28] sm:$0xf]
        %v1990 = vld [vmem:[%s1978 + $0x2c] sm:$0xf]
        %v1991 = vld [vmem:[%s1978 + $0x30] sm:$0xf]
        %v1992 = vld [vmem:[%s1978 + $0x34] sm:$0xf]
        %v1993 = vld [vmem:[%s1978 + $0x38] sm:$0xf]
        %v1994 = vld [vmem:[%s1978 + $0x3c] sm:$0xf]
        %v1995 = vld [vmem:[%s1978 + $0x40] sm:$0xf]
        %v1996 = vld [vmem:[%s1978 + $0x44] sm:$0xf]
        %v1997 = vld [vmem:[%s1978 + $0x48] sm:$0xf]
        %v1998 = vld [vmem:[%s1978 + $0x4c] sm:$0xf]
        %v1999 = vld [vmem:[%s1978 + $0x50] sm:$0xf]
        %v2000 = vld [vmem:[%s1978 + $0x54] sm:$0xf]
        %v2001 = vld [vmem:[%s1978 + $0x58] sm:$0xf]
        %v2002 = vld [vmem:[%s1978 + $0x5c] sm:$0xf]
        %v2003 = vld [vmem:[%s1978 + $0x60] sm:$0xf]
        %v2004 = vld [vmem:[%s1978 + $0x64] sm:$0xf]
        %v2005 = vld [vmem:[%s1978 + $0x68] sm:$0xf]
        %v2006 = vld [vmem:[%s1978 + $0x6c] sm:$0xf]
        %v2007 = vld [vmem:[%s1978 + $0x70] sm:$0xf]
        %v2008 = vld [vmem:[%s1978 + $0x74] sm:$0xf]
        %v2009 = vld [vmem:[%s1978 + $0x78] sm:$0xf]
        %v2010 = vld [vmem:[%s1978 + $0x7c] sm:$0xf]
        %v2011 = vld [vmem:[%s1978 + $0x80] sm:$0xf]
        %v2012 = vld [vmem:[%s1978 + $0x84] sm:$0xf]
        %v2013 = vld [vmem:[%s1978 + $0x88] sm:$0xf]
        %v2014 = vld [vmem:[%s1978 + $0x8c] sm:$0xf]
        %v2015 = vld [vmem:[%s1978 + $0x90] sm:$0xf]
        %v2016 = vld [vmem:[%s1978 + $0x94] sm:$0xf]
        %v2017 = vld [vmem:[%s1978 + $0x98] sm:$0xf]
        %v2018 = vld [vmem:[%s1978 + $0x9c] sm:$0xf]
        %v2019 = vld [vmem:[%s1978 + $0xa0] sm:$0xf]
        %v2020 = vld [vmem:[%s1978 + $0xa4] sm:$0xf]
        %v2021 = vld [vmem:[%s1978 + $0xa8] sm:$0xf]
        %v2022 = vld [vmem:[%s1978 + $0xac] sm:$0xf]
        %v2023 = vld [vmem:[%s1978 + $0xb0] sm:$0xf]
        %v2024 = vld [vmem:[%s1978 + $0xb4] sm:$0xf]
        %v2025 = vld [vmem:[%s1978 + $0xb8] sm:$0xf]
        %v2026 = vld [vmem:[%s1978 + $0xbc] sm:$0xf]
        %v2027 = vpack.c.b16 %v849, %v847
        %v2028 = vpack.c.b16 %v850, %v848
        %v2029 = vpack.c.b16 %v426, %v425
        %v2030 = vpack.c.b16 %v1972, %v851
        %v2031 = vpack.c.b16 %v1973, %v852
        %v2032 = vpack.c.b16 %v428, %v427
        %v2033 = vpack.c.b16 %v1976, %v1974
        %v2034 = vpack.c.b16 %v1977, %v1975
        %v2092 = vunpack.c.l.b16 %v1979
        %v2093 = vunpack.c.l.b16 %v1980
        %v2094 = vunpack.c.l.b16 %v1981
        %v2095 = vunpack.c.l.b16 %v1982
        %v2096 = vunpack.c.l.b16 %v1983
        %v2097 = vunpack.c.l.b16 %v1984
        %v2098 = vunpack.c.l.b16 %v1985
        %v2099 = vunpack.c.l.b16 %v1986
        %v2100 = vunpack.c.l.b16 %v1987
        %v2101 = vunpack.c.l.b16 %v1988
        %v2102 = vunpack.c.l.b16 %v1989
        %v2103 = vunpack.c.l.b16 %v1990
        %v2104 = vunpack.c.l.b16 %v1991
        %v2105 = vunpack.c.l.b16 %v1992
        %v2106 = vunpack.c.l.b16 %v1993
        %v2107 = vunpack.c.l.b16 %v1994
        %v2108 = vunpack.c.l.b16 %v1995
        %v2109 = vunpack.c.l.b16 %v1996
        %v2110 = vunpack.c.l.b16 %v1997
        %v2111 = vunpack.c.l.b16 %v1998
        %v2112 = vunpack.c.l.b16 %v1999
        %v2113 = vunpack.c.l.b16 %v2000
        %v2114 = vunpack.c.l.b16 %v2001
        %v2115 = vunpack.c.l.b16 %v2002
        %v2116 = vunpack.c.l.b16 %v2003
        %v2117 = vunpack.c.l.b16 %v2004
        %v2118 = vunpack.c.l.b16 %v2005
        %v2119 = vunpack.c.l.b16 %v2006
        %v2120 = vunpack.c.l.b16 %v2007
        %v2121 = vunpack.c.l.b16 %v2008
        %v2122 = vunpack.c.l.b16 %v2009
        %v2123 = vunpack.c.l.b16 %v2010
        %v2124 = vunpack.c.l.b16 %v2011
        %v2125 = vunpack.c.l.b16 %v2012
        %v2126 = vunpack.c.l.b16 %v2013
        %v2127 = vunpack.c.l.b16 %v2014
        %v2128 = vunpack.c.l.b16 %v2015
        %v2129 = vunpack.c.l.b16 %v2016
        %v2130 = vunpack.c.l.b16 %v2017
        %v2131 = vunpack.c.l.b16 %v2018
        %v2132 = vunpack.c.l.b16 %v2019
        %v2133 = vunpack.c.l.b16 %v2020
        %v2134 = vunpack.c.l.b16 %v2021
        %v2135 = vunpack.c.l.b16 %v2022
        %v2136 = vunpack.c.l.b16 %v2023
        %v2137 = vunpack.c.l.b16 %v2024
        %v2138 = vunpack.c.l.b16 %v2025
        %v2139 = vunpack.c.l.b16 %v2026
        %v2140 = vpack.c.b16 %v2093, %v2092
        %v2141 = vpack.c.b16 %v2095, %v2094
        %v2142 = vpack.c.b16 %v2097, %v2096
        %v2143 = vpack.c.b16 %v2099, %v2098
        %v2144 = vpack.c.b16 %v2101, %v2100
        %v2145 = vpack.c.b16 %v2103, %v2102
        %v2146 = vpack.c.b16 %v2105, %v2104
        %v2147 = vpack.c.b16 %v2107, %v2106
        %v2148 = vpack.c.b16 %v2109, %v2108
        %v2149 = vpack.c.b16 %v2111, %v2110
        %v2150 = vpack.c.b16 %v2113, %v2112
        %v2151 = vpack.c.b16 %v2115, %v2114
        %v2152 = vpack.c.b16 %v2117, %v2116
        %v2153 = vpack.c.b16 %v2119, %v2118
        %v2154 = vpack.c.b16 %v2121, %v2120
        %v2155 = vpack.c.b16 %v2123, %v2122
        %v2156 = vpack.c.b16 %v2125, %v2124
        %v2157 = vpack.c.b16 %v2127, %v2126
        %v2158 = vpack.c.b16 %v2129, %v2128
        %v2159 = vpack.c.b16 %v2131, %v2130
        %v2160 = vpack.c.b16 %v2133, %v2132
        %v2161 = vpack.c.b16 %v2135, %v2134
        %v2162 = vpack.c.b16 %v2137, %v2136
        %v2163 = vpack.c.b16 %v2139, %v2138
        %2188 = vmatprep.subr.bf16.mxu0 0
        %2189 = vmatpush1.bf16.msra.mxu0 %v2147
        %2190 = vmatprep.subr.bf16.mxu0 0
        %2191 = vmatpush1.bf16.msra.mxu0 %v2146
        %2192 = vmatprep.subr.bf16.mxu0 0
        %2193 = vmatpush1.bf16.msra.mxu0 %v2145
        %2194 = vmatprep.subr.bf16.mxu0 0
        %2195 = vmatpush1.bf16.msra.mxu0 %v2144
        %2196 = vmatprep.subr.bf16.mxu0 0
        %2197 = vmatpush1.bf16.msra.mxu0 %v2143
        %2198 = vmatprep.subr.bf16.mxu0 0
        %2199 = vmatpush1.bf16.msra.mxu0 %v2142
        %2200 = vmatprep.subr.bf16.mxu0 0
        %2201 = vmatpush1.bf16.msra.mxu0 %v2141
        %2202 = vmatprep.subr.bf16.mxu0 0
        %2203 = vmatpush1.bf16.msra.mxu0 %v2140
        %2204 = vmatprep.subr.bf16.mxu0 0
        %2205 = vmatpush2.bf16.msra.mxu0 %v2155
        %2206 = vmatprep.subr.bf16.mxu0 0
        %2207 = vmatpush2.bf16.msra.mxu0 %v2154
        %2208 = vmatprep.subr.bf16.mxu0 0
        %2209 = vmatpush2.bf16.msra.mxu0 %v2153
        %2210 = vmatprep.subr.bf16.mxu0 0
        %2211 = vmatpush2.bf16.msra.mxu0 %v2152
        %2212 = vmatprep.subr.bf16.mxu0 0
        %2213 = vmatpush2.bf16.msra.mxu0 %v2151
        %2214 = vmatprep.subr.bf16.mxu0 0
        %2215 = vmatpush2.bf16.msra.mxu0 %v2150
        %2216 = vmatprep.subr.bf16.mxu0 0
        %2217 = vmatpush2.bf16.msra.mxu0 %v2149
        %2218 = vmatprep.subr.bf16.mxu0 0
        %2219 = vmatpush2.bf16.msra.mxu0 %v2148
        %2220 = vmatprep.mubr.bf16.mxu0 %v1445
        %2221 = vmatmul.mubr.bf16.gmra.mxu0 %v457
        %v2222 = vpop.f32.mrf.mxu0
        %v2223 = vadd.f32 0.0, %v2222
        %v2224 = vpop.f32.mrf.mxu0
        %v2225 = vpop.f32.mrf.mxu0
        %v2226 = vadd.f32 0.0, %v2225
        %v2227 = vpop.f32.mrf.mxu0
        %2228 = vmatprep.mubr.bf16.mxu0 %v1448
        %2229 = vmatmul.mubr.bf16.gmra.mxu0 %v1447
        %v2230 = vpop.f32.mrf.mxu0
        %v2231 = vadd.f32 0.0, %v2230
        %v2232 = vpop.f32.mrf.mxu0
        %v2233 = vpop.f32.mrf.mxu0
        %v2234 = vadd.f32 0.0, %v2233
        %v2235 = vpop.f32.mrf.mxu0
        %2236 = vmatprep.mubr.bf16.mxu0 %v1451
        %2237 = vmatmul.mubr.bf16.gmra.mxu0 %v1450
        %v2238 = vpop.f32.mrf.mxu0
        %v2239 = vadd.f32 0.0, %v2238
        %v2240 = vpop.f32.mrf.mxu0
        %v2241 = vpop.f32.mrf.mxu0
        %v2242 = vadd.f32 0.0, %v2241
        %v2243 = vpop.f32.mrf.mxu0
        %2244 = vmatprep.mubr.bf16.mxu0 %v1453
        %2245 = vmatmul.mubr.bf16.gmra.mxu0 %v461
        %v2246 = vpop.f32.mrf.mxu0
        %v2247 = vadd.f32 0.0, %v2246
        %v2248 = vpop.f32.mrf.mxu0
        %v2249 = vpop.f32.mrf.mxu0
        %v2250 = vadd.f32 0.0, %v2249
        %v2251 = vpop.f32.mrf.mxu0
        %2252 = vmatprep.mubr.bf16.mxu0 %v1456
        %2253 = vmatmul.mubr.bf16.gmra.mxu0 %v1455
        %v2254 = vpop.f32.mrf.mxu0
        %v2255 = vadd.f32 0.0, %v2254
        %v2256 = vpop.f32.mrf.mxu0
        %v2257 = vpop.f32.mrf.mxu0
        %v2258 = vadd.f32 0.0, %v2257
        %v2259 = vpop.f32.mrf.mxu0
        %2260 = vmatprep.mubr.bf16.mxu0 %v1459
        %2261 = vmatmul.mubr.bf16.gmra.mxu0 %v1458
        %v2262 = vpop.f32.mrf.mxu0
        %v2263 = vadd.f32 0.0, %v2262
        %v2264 = vpop.f32.mrf.mxu0
        %v2265 = vpop.f32.mrf.mxu0
        %v2266 = vadd.f32 0.0, %v2265
        %v2267 = vpop.f32.mrf.mxu0
        %2268 = vmatprep.mubr.bf16.mxu0 %v1461
        %2269 = vmatmul.mubr.bf16.gmra.mxu0 %v465
        %v2270 = vpop.f32.mrf.mxu0
        %v2271 = vadd.f32 0.0, %v2270
        %v2272 = vpop.f32.mrf.mxu0
        %v2273 = vpop.f32.mrf.mxu0
        %v2274 = vadd.f32 0.0, %v2273
        %v2275 = vpop.f32.mrf.mxu0
        %2276 = vmatprep.mubr.bf16.mxu0 %v1464
        %2277 = vmatmul.mubr.bf16.gmra.mxu0 %v1463
        %v2278 = vpop.f32.mrf.mxu0
        %v2279 = vadd.f32 0.0, %v2278
        %v2280 = vpop.f32.mrf.mxu0
        %v2281 = vpop.f32.mrf.mxu0
        %v2282 = vadd.f32 0.0, %v2281
        %v2283 = vpop.f32.mrf.mxu0
        %2284 = vmatprep.mubr.bf16.mxu0 %v1467
        %2285 = vmatmul.mubr.bf16.gmra.mxu0 %v1466
        %v2286 = vpop.f32.mrf.mxu0
        %v2287 = vadd.f32 0.0, %v2286
        %v2288 = vpop.f32.mrf.mxu0
        %v2289 = vpop.f32.mrf.mxu0
        %v2290 = vadd.f32 0.0, %v2289
        %v2291 = vpop.f32.mrf.mxu0
        %2292 = vmatprep.mubr.bf16.mxu0 %v1469
        %2293 = vmatmul.mubr.bf16.gmra.mxu0 %v469
        %v2294 = vpop.f32.mrf.mxu0
        %v2295 = vadd.f32 0.0, %v2294
        %v2296 = vpop.f32.mrf.mxu0
        %v2297 = vpop.f32.mrf.mxu0
        %v2298 = vadd.f32 0.0, %v2297
        %v2299 = vpop.f32.mrf.mxu0
        %2300 = vmatprep.mubr.bf16.mxu0 %v1472
        %2301 = vmatmul.mubr.bf16.gmra.mxu0 %v1471
        %v2302 = vpop.f32.mrf.mxu0
        %v2303 = vadd.f32 0.0, %v2302
        %v2304 = vpop.f32.mrf.mxu0
        %v2305 = vpop.f32.mrf.mxu0
        %v2306 = vadd.f32 0.0, %v2305
        %v2307 = vpop.f32.mrf.mxu0
        %2308 = vmatprep.mubr.bf16.mxu0 %v1475
        %2309 = vmatmul.mubr.bf16.gmra.mxu0 %v1474
        %v2310 = vpop.f32.mrf.mxu0
        %v2311 = vadd.f32 0.0, %v2310
        %v2312 = vpop.f32.mrf.mxu0
        %v2313 = vpop.f32.mrf.mxu0
        %v2314 = vadd.f32 0.0, %v2313
        %v2315 = vpop.f32.mrf.mxu0
        %2316 = vmatprep.mubr.bf16.mxu0 %v2027
        %2317 = vmatmul.mubr.bf16.gmra.mxu0 %v473
        %v2318 = vpop.f32.mrf.mxu0
        %v2319 = vadd.f32 0.0, %v2318
        %v2320 = vpop.f32.mrf.mxu0
        %v2321 = vpop.f32.mrf.mxu0
        %v2322 = vadd.f32 0.0, %v2321
        %v2323 = vpop.f32.mrf.mxu0
        %2324 = vmatprep.mubr.bf16.mxu0 %v2030
        %2325 = vmatmul.mubr.bf16.gmra.mxu0 %v2029
        %v2326 = vpop.f32.mrf.mxu0
        %v2327 = vadd.f32 0.0, %v2326
        %v2328 = vpop.f32.mrf.mxu0
        %v2329 = vpop.f32.mrf.mxu0
        %v2330 = vadd.f32 0.0, %v2329
        %v2331 = vpop.f32.mrf.mxu0
        %2332 = vmatprep.mubr.bf16.mxu0 %v2033
        %2333 = vmatmul.mubr.bf16.gmra.mxu0 %v2032
        %v2334 = vpop.f32.mrf.mxu0
        %v2335 = vadd.f32 0.0, %v2334
        %v2336 = vpop.f32.mrf.mxu0
        %v2337 = vpop.f32.mrf.mxu0
        %v2338 = vadd.f32 0.0, %v2337
        %v2339 = vpop.f32.mrf.mxu0
        %2340 = vdwg.mxu0
        %2341 = vmatprep.subr.bf16.mxu0 0
        %2342 = vmatpush1.bf16.msra.mxu0 %v2163
        %2343 = vmatprep.subr.bf16.mxu0 0
        %2344 = vmatpush1.bf16.msra.mxu0 %v2162
        %2345 = vmatprep.subr.bf16.mxu0 0
        %2346 = vmatpush1.bf16.msra.mxu0 %v2161
        %2347 = vmatprep.subr.bf16.mxu0 0
        %2348 = vmatpush1.bf16.msra.mxu0 %v2160
        %2349 = vmatprep.subr.bf16.mxu0 0
        %2350 = vmatpush1.bf16.msra.mxu0 %v2159
        %2351 = vmatprep.subr.bf16.mxu0 0
        %2352 = vmatpush1.bf16.msra.mxu0 %v2158
        %2353 = vmatprep.subr.bf16.mxu0 0
        %2354 = vmatpush1.bf16.msra.mxu0 %v2157
        %2355 = vmatprep.subr.bf16.mxu0 0
        %2356 = vmatpush1.bf16.msra.mxu0 %v2156
        %2357 = vmatprep.subr.bf16.mxu0 0
        %2358 = vmatpush2.bf16.msra.mxu0 0
        %2359 = vmatprep.subr.bf16.mxu0 0
        %2360 = vmatpush2.bf16.msra.mxu0 0
        %2361 = vmatprep.subr.bf16.mxu0 0
        %2362 = vmatpush2.bf16.msra.mxu0 0
        %2363 = vmatprep.subr.bf16.mxu0 0
        %2364 = vmatpush2.bf16.msra.mxu0 0
        %2365 = vmatprep.subr.bf16.mxu0 0
        %2366 = vmatpush2.bf16.msra.mxu0 0
        %2367 = vmatprep.subr.bf16.mxu0 0
        %2368 = vmatpush2.bf16.msra.mxu0 0
        %2369 = vmatprep.subr.bf16.mxu0 0
        %2370 = vmatpush2.bf16.msra.mxu0 0
        %2371 = vmatprep.subr.bf16.mxu0 0
        %2372 = vmatpush2.bf16.msra.mxu0 0
        %2373 = vmatprep.mubr.bf16.mxu0 0
        %2374 = vmatmul.mubr.bf16.gmra.mxu0 %v1446
        %v2375 = vpop.f32.mrf.mxu0
        %v2376 = vadd.f32 %v2223, %v2375
        %v2377 = vpop.f32.mrf.mxu0
        %v2378 = vpop.f32.mrf.mxu0
        %v2379 = vadd.f32 %v2226, %v2378
        %v2380 = vpop.f32.mrf.mxu0
        %2381 = vmatprep.mubr.bf16.mxu0 0
        %2382 = vmatmul.mubr.bf16.gmra.mxu0 %v1449
        %v2383 = vpop.f32.mrf.mxu0
        %v2384 = vadd.f32 %v2231, %v2383
        %v2385 = vpop.f32.mrf.mxu0
        %v2386 = vpop.f32.mrf.mxu0
        %v2387 = vadd.f32 %v2234, %v2386
        %v2388 = vpop.f32.mrf.mxu0
        %2389 = vmatprep.mubr.bf16.mxu0 0
        %2390 = vmatmul.mubr.bf16.gmra.mxu0 %v1452
        %v2391 = vpop.f32.mrf.mxu0
        %v2392 = vadd.f32 %v2239, %v2391
        %v2393 = vpop.f32.mrf.mxu0
        %v2394 = vpop.f32.mrf.mxu0
        %v2395 = vadd.f32 %v2242, %v2394
        %v2396 = vpop.f32.mrf.mxu0
        %2397 = vmatprep.mubr.bf16.mxu0 0
        %2398 = vmatmul.mubr.bf16.gmra.mxu0 %v1454
        %v2399 = vpop.f32.mrf.mxu0
        %v2400 = vadd.f32 %v2247, %v2399
        %v2401 = vpop.f32.mrf.mxu0
        %v2402 = vpop.f32.mrf.mxu0
        %v2403 = vadd.f32 %v2250, %v2402
        %v2404 = vpop.f32.mrf.mxu0
        %2405 = vmatprep.mubr.bf16.mxu0 0
        %2406 = vmatmul.mubr.bf16.gmra.mxu0 %v1457
        %v2407 = vpop.f32.mrf.mxu0
        %v2408 = vadd.f32 %v2255, %v2407
        %v2409 = vpop.f32.mrf.mxu0
        %v2410 = vpop.f32.mrf.mxu0
        %v2411 = vadd.f32 %v2258, %v2410
        %v2412 = vpop.f32.mrf.mxu0
        %2413 = vmatprep.mubr.bf16.mxu0 0
        %2414 = vmatmul.mubr.bf16.gmra.mxu0 %v1460
        %v2415 = vpop.f32.mrf.mxu0
        %v2416 = vadd.f32 %v2263, %v2415
        %v2417 = vpop.f32.mrf.mxu0
        %v2418 = vpop.f32.mrf.mxu0
        %v2419 = vadd.f32 %v2266, %v2418
        %v2420 = vpop.f32.mrf.mxu0
        %2421 = vmatprep.mubr.bf16.mxu0 0
        %2422 = vmatmul.mubr.bf16.gmra.mxu0 %v1462
        %v2423 = vpop.f32.mrf.mxu0
        %v2424 = vadd.f32 %v2271, %v2423
        %v2425 = vpop.f32.mrf.mxu0
        %v2426 = vpop.f32.mrf.mxu0
        %v2427 = vadd.f32 %v2274, %v2426
        %v2428 = vpop.f32.mrf.mxu0
        %2429 = vmatprep.mubr.bf16.mxu0 0
        %2430 = vmatmul.mubr.bf16.gmra.mxu0 %v1465
        %v2431 = vpop.f32.mrf.mxu0
        %v2432 = vadd.f32 %v2279, %v2431
        %v2433 = vpop.f32.mrf.mxu0
        %v2434 = vpop.f32.mrf.mxu0
        %v2435 = vadd.f32 %v2282, %v2434
        %v2436 = vpop.f32.mrf.mxu0
        %2437 = vmatprep.mubr.bf16.mxu0 0
        %2438 = vmatmul.mubr.bf16.gmra.mxu0 %v1468
        %v2439 = vpop.f32.mrf.mxu0
        %v2440 = vadd.f32 %v2287, %v2439
        %v2441 = vpop.f32.mrf.mxu0
        %v2442 = vpop.f32.mrf.mxu0
        %v2443 = vadd.f32 %v2290, %v2442
        %v2444 = vpop.f32.mrf.mxu0
        %2445 = vmatprep.mubr.bf16.mxu0 0
        %2446 = vmatmul.mubr.bf16.gmra.mxu0 %v1470
        %v2447 = vpop.f32.mrf.mxu0
        %v2448 = vadd.f32 %v2295, %v2447
        %v2449 = vpop.f32.mrf.mxu0
        %v2450 = vpop.f32.mrf.mxu0
        %v2451 = vadd.f32 %v2298, %v2450
        %v2452 = vpop.f32.mrf.mxu0
        %2453 = vmatprep.mubr.bf16.mxu0 0
        %2454 = vmatmul.mubr.bf16.gmra.mxu0 %v1473
        %v2455 = vpop.f32.mrf.mxu0
        %v2456 = vadd.f32 %v2303, %v2455
        %v2457 = vpop.f32.mrf.mxu0
        %v2458 = vpop.f32.mrf.mxu0
        %v2459 = vadd.f32 %v2306, %v2458
        %v2460 = vpop.f32.mrf.mxu0
        %2461 = vmatprep.mubr.bf16.mxu0 0
        %2462 = vmatmul.mubr.bf16.gmra.mxu0 %v1476
        %v2463 = vpop.f32.mrf.mxu0
        %v2464 = vadd.f32 %v2311, %v2463
        %v2465 = vpop.f32.mrf.mxu0
        %v2466 = vpop.f32.mrf.mxu0
        %v2467 = vadd.f32 %v2314, %v2466
        %v2468 = vpop.f32.mrf.mxu0
        %2469 = vmatprep.mubr.bf16.mxu0 0
        %2470 = vmatmul.mubr.bf16.gmra.mxu0 %v2028
        %v2471 = vpop.f32.mrf.mxu0
        %v2472 = vadd.f32 %v2319, %v2471
        %v2473 = vpop.f32.mrf.mxu0
        %v2474 = vpop.f32.mrf.mxu0
        %v2475 = vadd.f32 %v2322, %v2474
        %v2476 = vpop.f32.mrf.mxu0
        %2477 = vmatprep.mubr.bf16.mxu0 0
        %2478 = vmatmul.mubr.bf16.gmra.mxu0 %v2031
        %v2479 = vpop.f32.mrf.mxu0
        %v2480 = vadd.f32 %v2327, %v2479
        %v2481 = vpop.f32.mrf.mxu0
        %v2482 = vpop.f32.mrf.mxu0
        %v2483 = vadd.f32 %v2330, %v2482
        %v2484 = vpop.f32.mrf.mxu0
        %2485 = vmatprep.mubr.bf16.mxu0 0
        %2486 = vmatmul.mubr.bf16.gmra.mxu0 %v2034
        %v2487 = vpop.f32.mrf.mxu0
        %v2488 = vadd.f32 %v2335, %v2487
        %v2489 = vpop.f32.mrf.mxu0
        %v2490 = vpop.f32.mrf.mxu0
        %v2491 = vadd.f32 %v2338, %v2490
        %v2492 = vpop.f32.mrf.mxu0
        %2493 = vdwg.mxu0
        %v2494 = vadd.f32 %v1854, %v2376
        %v2495 = vadd.f32 %v1857, %v2379
        %v2496 = vadd.f32 %v1862, %v2384
        %v2497 = vadd.f32 %v1865, %v2387
        %v2498 = vadd.f32 %v1870, %v2392
        %v2499 = vadd.f32 %v1873, %v2395
        %v2500 = vadd.f32 %v1878, %v2400
        %v2501 = vadd.f32 %v1881, %v2403
        %v2502 = vadd.f32 %v1886, %v2408
        %v2503 = vadd.f32 %v1889, %v2411
        %v2504 = vadd.f32 %v1894, %v2416
        %v2505 = vadd.f32 %v1897, %v2419
        %v2506 = vadd.f32 %v1902, %v2424
        %v2507 = vadd.f32 %v1905, %v2427
        %v2508 = vadd.f32 %v1910, %v2432
        %v2509 = vadd.f32 %v1913, %v2435
        %v2510 = vadd.f32 %v1918, %v2440
        %v2511 = vadd.f32 %v1921, %v2443
        %v2512 = vadd.f32 %v1926, %v2448
        %v2513 = vadd.f32 %v1929, %v2451
        %v2514 = vadd.f32 %v1934, %v2456
        %v2515 = vadd.f32 %v1937, %v2459
        %v2516 = vadd.f32 %v1942, %v2464
        %v2517 = vadd.f32 %v1945, %v2467
        %v2518 = vadd.f32 %v1950, %v2472
        %v2519 = vadd.f32 %v1953, %v2475
        %v2520 = vadd.f32 %v1958, %v2480
        %v2521 = vadd.f32 %v1961, %v2483
        %v2522 = vadd.f32 %v1966, %v2488
        %v2523 = vadd.f32 %v1969, %v2491
        %v2524 = vld [vmem:[%s2] sm:$0x1]
        %v2526 = vlaneseq
        %v2527 = vshrl.u32 %v2526, 7
        %v2528 = vsub.s32 0, %v2527
        %v2529 = vrot.slane %v2524, %v2528
        %v2531 = vmul.f32 %v2494, %v2529
        %v2532 = vmul.f32 %v2495, %v2529
        %v2533 = vmul.f32 %v2496, %v2529
        %v2534 = vmul.f32 %v2497, %v2529
        %v2535 = vmul.f32 %v2498, %v2529
        %v2536 = vmul.f32 %v2499, %v2529
        %v2537 = vmul.f32 %v2500, %v2529
        %v2538 = vmul.f32 %v2501, %v2529
        %v2539 = vmul.f32 %v2502, %v2529
        %v2540 = vmul.f32 %v2503, %v2529
        %v2541 = vmul.f32 %v2504, %v2529
        %v2542 = vmul.f32 %v2505, %v2529
        %v2543 = vmul.f32 %v2506, %v2529
        %v2544 = vmul.f32 %v2507, %v2529
        %v2545 = vmul.f32 %v2508, %v2529
        %v2546 = vmul.f32 %v2509, %v2529
        %v2547 = vmul.f32 %v2510, %v2529
        %v2548 = vmul.f32 %v2511, %v2529
        %v2549 = vmul.f32 %v2512, %v2529
        %v2550 = vmul.f32 %v2513, %v2529
        %v2551 = vmul.f32 %v2514, %v2529
        %v2552 = vmul.f32 %v2515, %v2529
        %v2553 = vmul.f32 %v2516, %v2529
        %v2554 = vmul.f32 %v2517, %v2529
        %v2555 = vmul.f32 %v2518, %v2529
        %v2556 = vmul.f32 %v2519, %v2529
        %v2557 = vmul.f32 %v2520, %v2529
        %v2558 = vmul.f32 %v2521, %v2529
        %v2559 = vmul.f32 %v2522, %v2529
        %v2560 = vmul.f32 %v2523, %v2529
        %v2561 = vld [vmem:[%s3] sm:$0x1]
        %v2563 = vlaneseq
        %v2564 = vshrl.u32 %v2563, 7
        %v2565 = vsub.s32 0, %v2564
        %v2566 = vrot.slane %v2561, %v2565
        %v2568 = vadd.f32 %v2531, %v2566
        %v2569 = vadd.f32 %v2532, %v2566
        %v2570 = vadd.f32 %v2533, %v2566
        %v2571 = vadd.f32 %v2534, %v2566
        %v2572 = vadd.f32 %v2535, %v2566
        %v2573 = vadd.f32 %v2536, %v2566
        %v2574 = vadd.f32 %v2537, %v2566
        %v2575 = vadd.f32 %v2538, %v2566
        %v2576 = vadd.f32 %v2539, %v2566
        %v2577 = vadd.f32 %v2540, %v2566
        %v2578 = vadd.f32 %v2541, %v2566
        %v2579 = vadd.f32 %v2542, %v2566
        %v2580 = vadd.f32 %v2543, %v2566
        %v2581 = vadd.f32 %v2544, %v2566
        %v2582 = vadd.f32 %v2545, %v2566
        %v2583 = vadd.f32 %v2546, %v2566
        %v2584 = vadd.f32 %v2547, %v2566
        %v2585 = vadd.f32 %v2548, %v2566
        %v2586 = vadd.f32 %v2549, %v2566
        %v2587 = vadd.f32 %v2550, %v2566
        %v2588 = vadd.f32 %v2551, %v2566
        %v2589 = vadd.f32 %v2552, %v2566
        %v2590 = vadd.f32 %v2553, %v2566
        %v2591 = vadd.f32 %v2554, %v2566
        %v2592 = vadd.f32 %v2555, %v2566
        %v2593 = vadd.f32 %v2556, %v2566
        %v2594 = vadd.f32 %v2557, %v2566
        %v2595 = vadd.f32 %v2558, %v2566
        %v2596 = vadd.f32 %v2559, %v2566
        %v2597 = vadd.f32 %v2560, %v2566
        %v2598 = vmax.f32 %v2568, 0.0
        %v2599 = vmax.f32 %v2569, 0.0
        %v2600 = vmax.f32 %v2570, 0.0
        %v2601 = vmax.f32 %v2571, 0.0
        %v2602 = vmax.f32 %v2572, 0.0
        %v2603 = vmax.f32 %v2573, 0.0
        %v2604 = vmax.f32 %v2574, 0.0
        %v2605 = vmax.f32 %v2575, 0.0
        %v2606 = vmax.f32 %v2576, 0.0
        %v2607 = vmax.f32 %v2577, 0.0
        %v2608 = vmax.f32 %v2578, 0.0
        %v2609 = vmax.f32 %v2579, 0.0
        %v2610 = vmax.f32 %v2580, 0.0
        %v2611 = vmax.f32 %v2581, 0.0
        %v2612 = vmax.f32 %v2582, 0.0
        %v2613 = vmax.f32 %v2583, 0.0
        %v2614 = vmax.f32 %v2584, 0.0
        %v2615 = vmax.f32 %v2585, 0.0
        %v2616 = vmax.f32 %v2586, 0.0
        %v2617 = vmax.f32 %v2587, 0.0
        %v2618 = vmax.f32 %v2588, 0.0
        %v2619 = vmax.f32 %v2589, 0.0
        %v2620 = vmax.f32 %v2590, 0.0
        %v2621 = vmax.f32 %v2591, 0.0
        %v2622 = vmax.f32 %v2592, 0.0
        %v2623 = vmax.f32 %v2593, 0.0
        %v2624 = vmax.f32 %v2594, 0.0
        %v2625 = vmax.f32 %v2595, 0.0
        %v2626 = vmax.f32 %v2596, 0.0
        %v2627 = vmax.f32 %v2597, 0.0
        %s2628 = ssub.s32 %s293, 1
        %v2629 = vstv %s2628
        %v2630 = vadd.s32 %v2629, 1
        %v2631 = vadd.s32 %v2629, 2
        %v2632 = vadd.s32 %v2629, 3
        %v2633 = vadd.s32 %v2629, 4
        %v2634 = vadd.s32 %v2629, 5
        %v2635 = vadd.s32 %v2629, 6
        %v2636 = vadd.s32 %v2629, 7
        %v2637 = vadd.s32 %v2629, 8
        %v2638 = vadd.s32 %v2629, 9
        %v2639 = vlaneseq
        %v2640 = vshrl.u32 %v2639, 7
        %v2641 = vadd.s32 %v2640, 8
        %v2642 = vadd.s32 %v2640, 16
        %vm2643 = vcmp.ge.s32.totalorder %v2629, 0
        %vm2644 = vcmp.ge.s32.totalorder %v2630, 0
        %vm2645 = vcmp.ge.s32.totalorder %v2631, 0
        %vm2646 = vcmp.ge.s32.totalorder %v2632, 0
        %vm2647 = vcmp.ge.s32.totalorder %v2633, 0
        %vm2648 = vcmp.ge.s32.totalorder %v2634, 0
        %vm2649 = vcmp.ge.s32.totalorder %v2635, 0
        %vm2650 = vcmp.ge.s32.totalorder %v2636, 0
        %vm2651 = vcmp.ge.s32.totalorder %v2637, 0
        %vm2652 = vcmp.ge.s32.totalorder %v2638, 0
        %vm2653 = vcmp.lt.s32.totalorder %v2629, 16
        %vm2654 = vcmp.lt.s32.totalorder %v2630, 16
        %vm2655 = vcmp.lt.s32.totalorder %v2631, 16
        %vm2656 = vcmp.lt.s32.totalorder %v2632, 16
        %vm2657 = vcmp.lt.s32.totalorder %v2633, 16
        %vm2658 = vcmp.lt.s32.totalorder %v2634, 16
        %vm2659 = vcmp.lt.s32.totalorder %v2635, 16
        %vm2660 = vcmp.lt.s32.totalorder %v2636, 16
        %vm2661 = vcmp.lt.s32.totalorder %v2637, 16
        %vm2662 = vcmp.lt.s32.totalorder %v2638, 16
        %vm2663 = vmand %vm2643, %vm2653
        %vm2664 = vmand %vm2644, %vm2654
        %vm2665 = vmand %vm2645, %vm2655
        %vm2666 = vmand %vm2646, %vm2656
        %vm2667 = vmand %vm2647, %vm2657
        %vm2668 = vmand %vm2648, %vm2658
        %vm2669 = vmand %vm2649, %vm2659
        %vm2670 = vmand %vm2650, %vm2660
        %vm2671 = vmand %vm2651, %vm2661
        %vm2672 = vmand %vm2652, %vm2662
        %vm2673 = vcmp.ge.s32.totalorder %v2640, 1
        %vm2674 = vcmp.ge.s32.totalorder %v2641, 1
        %vm2675 = vcmp.ge.s32.totalorder %v2642, 1
        %vm2676 = vmand %vm2663, %vm2673
        %vm2677 = vmand %vm2663, %vm2674
        %vm2678 = vmand %vm2663, %vm2675
        %vm2679 = vmand %vm2664, %vm2673
        %vm2680 = vmand %vm2664, %vm2674
        %vm2681 = vmand %vm2664, %vm2675
        %vm2682 = vmand %vm2665, %vm2673
        %vm2683 = vmand %vm2665, %vm2674
        %vm2684 = vmand %vm2665, %vm2675
        %vm2685 = vmand %vm2666, %vm2673
        %vm2686 = vmand %vm2666, %vm2674
        %vm2687 = vmand %vm2666, %vm2675
        %vm2688 = vmand %vm2667, %vm2673
        %vm2689 = vmand %vm2667, %vm2674
        %vm2690 = vmand %vm2667, %vm2675
        %vm2691 = vmand %vm2668, %vm2673
        %vm2692 = vmand %vm2668, %vm2674
        %vm2693 = vmand %vm2668, %vm2675
        %vm2694 = vmand %vm2669, %vm2673
        %vm2695 = vmand %vm2669, %vm2674
        %vm2696 = vmand %vm2669, %vm2675
        %vm2697 = vmand %vm2670, %vm2673
        %vm2698 = vmand %vm2670, %vm2674
        %vm2699 = vmand %vm2670, %vm2675
        %vm2700 = vmand %vm2671, %vm2673
        %vm2701 = vmand %vm2671, %vm2674
        %vm2702 = vmand %vm2671, %vm2675
        %vm2703 = vmand %vm2672, %vm2673
        %vm2704 = vmand %vm2672, %vm2674
        %vm2705 = vmand %vm2672, %vm2675
        %vm2706 = vcmp.lt.s32.totalorder %v2640, 17
        %vm2707 = vcmp.lt.s32.totalorder %v2641, 17
        %vm2708 = vcmp.lt.s32.totalorder %v2642, 17
        %vm2709 = vmand %vm2676, %vm2706
        %vm2710 = vmand %vm2677, %vm2707
        %vm2711 = vmand %vm2678, %vm2708
        %vm2712 = vmand %vm2679, %vm2706
        %vm2713 = vmand %vm2680, %vm2707
        %vm2714 = vmand %vm2681, %vm2708
        %vm2715 = vmand %vm2682, %vm2706
        %vm2716 = vmand %vm2683, %vm2707
        %vm2717 = vmand %vm2684, %vm2708
        %vm2718 = vmand %vm2685, %vm2706
        %vm2719 = vmand %vm2686, %vm2707
        %vm2720 = vmand %vm2687, %vm2708
        %vm2721 = vmand %vm2688, %vm2706
        %vm2722 = vmand %vm2689, %vm2707
        %vm2723 = vmand %vm2690, %vm2708
        %vm2724 = vmand %vm2691, %vm2706
        %vm2725 = vmand %vm2692, %vm2707
        %vm2726 = vmand %vm2693, %vm2708
        %vm2727 = vmand %vm2694, %vm2706
        %vm2728 = vmand %vm2695, %vm2707
        %vm2729 = vmand %vm2696, %vm2708
        %vm2730 = vmand %vm2697, %vm2706
        %vm2731 = vmand %vm2698, %vm2707
        %vm2732 = vmand %vm2699, %vm2708
        %vm2733 = vmand %vm2700, %vm2706
        %vm2734 = vmand %vm2701, %vm2707
        %vm2735 = vmand %vm2702, %vm2708
        %vm2736 = vmand %vm2703, %vm2706
        %vm2737 = vmand %vm2704, %vm2707
        %vm2738 = vmand %vm2705, %vm2708
        %v2739 = vsel %vm2709, 1, 0
        %v2740 = vsel %vm2710, 1, 0
        %v2741 = vsel %vm2711, 1, 0
        %v2742 = vsel %vm2712, 1, 0
        %v2743 = vsel %vm2713, 1, 0
        %v2744 = vsel %vm2714, 1, 0
        %v2745 = vsel %vm2715, 1, 0
        %v2746 = vsel %vm2716, 1, 0
        %v2747 = vsel %vm2717, 1, 0
        %v2748 = vsel %vm2718, 1, 0
        %v2749 = vsel %vm2719, 1, 0
        %v2750 = vsel %vm2720, 1, 0
        %v2751 = vsel %vm2721, 1, 0
        %v2752 = vsel %vm2722, 1, 0
        %v2753 = vsel %vm2723, 1, 0
        %v2754 = vsel %vm2724, 1, 0
        %v2755 = vsel %vm2725, 1, 0
        %v2756 = vsel %vm2726, 1, 0
        %v2757 = vsel %vm2727, 1, 0
        %v2758 = vsel %vm2728, 1, 0
        %v2759 = vsel %vm2729, 1, 0
        %v2760 = vsel %vm2730, 1, 0
        %v2761 = vsel %vm2731, 1, 0
        %v2762 = vsel %vm2732, 1, 0
        %v2763 = vsel %vm2733, 1, 0
        %v2764 = vsel %vm2734, 1, 0
        %v2765 = vsel %vm2735, 1, 0
        %v2766 = vsel %vm2736, 1, 0
        %v2767 = vsel %vm2737, 1, 0
        %v2768 = vsel %vm2738, 1, 0
        %vm2769 = vcmp.eq.s32.totalorder %v2739, 1
        %vm2770 = vcmp.eq.s32.totalorder %v2740, 1
        %vm2771 = vcmp.eq.s32.totalorder %v2741, 1
        %vm2772 = vcmp.eq.s32.totalorder %v2742, 1
        %vm2773 = vcmp.eq.s32.totalorder %v2743, 1
        %vm2774 = vcmp.eq.s32.totalorder %v2744, 1
        %vm2775 = vcmp.eq.s32.totalorder %v2745, 1
        %vm2776 = vcmp.eq.s32.totalorder %v2746, 1
        %vm2777 = vcmp.eq.s32.totalorder %v2747, 1
        %vm2778 = vcmp.eq.s32.totalorder %v2748, 1
        %vm2779 = vcmp.eq.s32.totalorder %v2749, 1
        %vm2780 = vcmp.eq.s32.totalorder %v2750, 1
        %vm2781 = vcmp.eq.s32.totalorder %v2751, 1
        %vm2782 = vcmp.eq.s32.totalorder %v2752, 1
        %vm2783 = vcmp.eq.s32.totalorder %v2753, 1
        %vm2784 = vcmp.eq.s32.totalorder %v2754, 1
        %vm2785 = vcmp.eq.s32.totalorder %v2755, 1
        %vm2786 = vcmp.eq.s32.totalorder %v2756, 1
        %vm2787 = vcmp.eq.s32.totalorder %v2757, 1
        %vm2788 = vcmp.eq.s32.totalorder %v2758, 1
        %vm2789 = vcmp.eq.s32.totalorder %v2759, 1
        %vm2790 = vcmp.eq.s32.totalorder %v2760, 1
        %vm2791 = vcmp.eq.s32.totalorder %v2761, 1
        %vm2792 = vcmp.eq.s32.totalorder %v2762, 1
        %vm2793 = vcmp.eq.s32.totalorder %v2763, 1
        %vm2794 = vcmp.eq.s32.totalorder %v2764, 1
        %vm2795 = vcmp.eq.s32.totalorder %v2765, 1
        %vm2796 = vcmp.eq.s32.totalorder %v2766, 1
        %vm2797 = vcmp.eq.s32.totalorder %v2767, 1
        %vm2798 = vcmp.eq.s32.totalorder %v2768, 1
        %v2799 = vsel %vm2769, %v2598, 0.0
        %v2800 = vsel %vm2770, %v2599, 0.0
        %v2801 = vsel %vm2771, %v2600, 0.0
        %v2802 = vsel %vm2772, %v2601, 0.0
        %v2803 = vsel %vm2773, %v2602, 0.0
        %v2804 = vsel %vm2774, %v2603, 0.0
        %v2805 = vsel %vm2775, %v2604, 0.0
        %v2806 = vsel %vm2776, %v2605, 0.0
        %v2807 = vsel %vm2777, %v2606, 0.0
        %v2808 = vsel %vm2778, %v2607, 0.0
        %v2809 = vsel %vm2779, %v2608, 0.0
        %v2810 = vsel %vm2780, %v2609, 0.0
        %v2811 = vsel %vm2781, %v2610, 0.0
        %v2812 = vsel %vm2782, %v2611, 0.0
        %v2813 = vsel %vm2783, %v2612, 0.0
        %v2814 = vsel %vm2784, %v2613, 0.0
        %v2815 = vsel %vm2785, %v2614, 0.0
        %v2816 = vsel %vm2786, %v2615, 0.0
        %v2817 = vsel %vm2787, %v2616, 0.0
        %v2818 = vsel %vm2788, %v2617, 0.0
        %v2819 = vsel %vm2789, %v2618, 0.0
        %v2820 = vsel %vm2790, %v2619, 0.0
        %v2821 = vsel %vm2791, %v2620, 0.0
        %v2822 = vsel %vm2792, %v2621, 0.0
        %v2823 = vsel %vm2793, %v2622, 0.0
        %v2824 = vsel %vm2794, %v2623, 0.0
        %v2825 = vsel %vm2795, %v2624, 0.0
        %v2826 = vsel %vm2796, %v2625, 0.0
        %v2827 = vsel %vm2797, %v2626, 0.0
        %v2828 = vsel %vm2798, %v2627, 0.0
        %v2829 = vpack.c.bf16 %v2800, %v2799
        %v2830 = vpack.c.bf16 %v2801, %v2801
        %v2831 = vpack.c.bf16 %v2803, %v2802
        %v2832 = vpack.c.bf16 %v2804, %v2804
        %v2833 = vpack.c.bf16 %v2806, %v2805
        %v2834 = vpack.c.bf16 %v2807, %v2807
        %v2835 = vpack.c.bf16 %v2809, %v2808
        %v2836 = vpack.c.bf16 %v2810, %v2810
        %v2837 = vpack.c.bf16 %v2812, %v2811
        %v2838 = vpack.c.bf16 %v2813, %v2813
        %v2839 = vpack.c.bf16 %v2815, %v2814
        %v2840 = vpack.c.bf16 %v2816, %v2816
        %v2841 = vpack.c.bf16 %v2818, %v2817
        %v2842 = vpack.c.bf16 %v2819, %v2819
        %v2843 = vpack.c.bf16 %v2821, %v2820
        %v2844 = vpack.c.bf16 %v2822, %v2822
        %v2845 = vpack.c.bf16 %v2824, %v2823
        %v2846 = vpack.c.bf16 %v2825, %v2825
        %v2847 = vpack.c.bf16 %v2827, %v2826
        %v2848 = vpack.c.bf16 %v2828, %v2828
        %v2850 = vshrl.u32 %v2829, 16
        %v2852 = vshll.u32 %v2829, 16
        %v2854 = vrot.slane %v2852, 1
        %v2855 = vor.u32 %v2850, %v2854
        %v2857 = vshll.u32 %v2830, 16
        %v2859 = vrot.slane %v2857, 1
        %v2860 = vsel %vm477, %v2855, %v2859
        %v2862 = vshrl.u32 %v2831, 16
        %v2864 = vshll.u32 %v2831, 16
        %v2866 = vrot.slane %v2864, 1
        %v2867 = vor.u32 %v2862, %v2866
        %v2869 = vshll.u32 %v2832, 16
        %v2871 = vrot.slane %v2869, 1
        %v2872 = vsel %vm477, %v2867, %v2871
        %v2874 = vshrl.u32 %v2833, 16
        %v2876 = vshll.u32 %v2833, 16
        %v2878 = vrot.slane %v2876, 1
        %v2879 = vor.u32 %v2874, %v2878
        %v2881 = vshll.u32 %v2834, 16
        %v2883 = vrot.slane %v2881, 1
        %v2884 = vsel %vm477, %v2879, %v2883
        %v2886 = vshrl.u32 %v2835, 16
        %v2888 = vshll.u32 %v2835, 16
        %v2890 = vrot.slane %v2888, 1
        %v2891 = vor.u32 %v2886, %v2890
        %v2893 = vshll.u32 %v2836, 16
        %v2895 = vrot.slane %v2893, 1
        %v2896 = vsel %vm477, %v2891, %v2895
        %v2898 = vshrl.u32 %v2837, 16
        %v2900 = vshll.u32 %v2837, 16
        %v2902 = vrot.slane %v2900, 1
        %v2903 = vor.u32 %v2898, %v2902
        %v2905 = vshll.u32 %v2838, 16
        %v2907 = vrot.slane %v2905, 1
        %v2908 = vsel %vm477, %v2903, %v2907
        %v2910 = vshrl.u32 %v2839, 16
        %v2912 = vshll.u32 %v2839, 16
        %v2914 = vrot.slane %v2912, 1
        %v2915 = vor.u32 %v2910, %v2914
        %v2917 = vshll.u32 %v2840, 16
        %v2919 = vrot.slane %v2917, 1
        %v2920 = vsel %vm477, %v2915, %v2919
        %v2922 = vshrl.u32 %v2841, 16
        %v2924 = vshll.u32 %v2841, 16
        %v2926 = vrot.slane %v2924, 1
        %v2927 = vor.u32 %v2922, %v2926
        %v2929 = vshll.u32 %v2842, 16
        %v2931 = vrot.slane %v2929, 1
        %v2932 = vsel %vm477, %v2927, %v2931
        %v2934 = vshrl.u32 %v2843, 16
        %v2936 = vshll.u32 %v2843, 16
        %v2938 = vrot.slane %v2936, 1
        %v2939 = vor.u32 %v2934, %v2938
        %v2941 = vshll.u32 %v2844, 16
        %v2943 = vrot.slane %v2941, 1
        %v2944 = vsel %vm477, %v2939, %v2943
        %v2946 = vshrl.u32 %v2845, 16
        %v2948 = vshll.u32 %v2845, 16
        %v2950 = vrot.slane %v2948, 1
        %v2951 = vor.u32 %v2946, %v2950
        %v2953 = vshll.u32 %v2846, 16
        %v2955 = vrot.slane %v2953, 1
        %v2956 = vsel %vm477, %v2951, %v2955
        %v2958 = vshrl.u32 %v2847, 16
        %v2960 = vshll.u32 %v2847, 16
        %v2962 = vrot.slane %v2960, 1
        %v2963 = vor.u32 %v2958, %v2962
        %v2965 = vshll.u32 %v2848, 16
        %v2967 = vrot.slane %v2965, 1
        %v2968 = vsel %vm477, %v2963, %v2967
        %v2999 = vrot.slane %v2829, 1
        %v3000 = vrot.slane %v2830, 1
        %v3001 = vsel %vm694, %v2999, %v3000
        %v3002 = vrot.slane %v2831, 1
        %v3003 = vrot.slane %v2832, 1
        %v3004 = vsel %vm694, %v3002, %v3003
        %v3005 = vrot.slane %v2833, 1
        %v3006 = vrot.slane %v2834, 1
        %v3007 = vsel %vm694, %v3005, %v3006
        %v3008 = vrot.slane %v2835, 1
        %v3009 = vrot.slane %v2836, 1
        %v3010 = vsel %vm694, %v3008, %v3009
        %v3011 = vrot.slane %v2837, 1
        %v3012 = vrot.slane %v2838, 1
        %v3013 = vsel %vm694, %v3011, %v3012
        %v3014 = vrot.slane %v2839, 1
        %v3015 = vrot.slane %v2840, 1
        %v3016 = vsel %vm694, %v3014, %v3015
        %v3017 = vrot.slane %v2841, 1
        %v3018 = vrot.slane %v2842, 1
        %v3019 = vsel %vm694, %v3017, %v3018
        %v3020 = vrot.slane %v2843, 1
        %v3021 = vrot.slane %v2844, 1
        %v3022 = vsel %vm694, %v3020, %v3021
        %v3023 = vrot.slane %v2845, 1
        %v3024 = vrot.slane %v2846, 1
        %v3025 = vsel %vm694, %v3023, %v3024
        %v3026 = vrot.slane %v2847, 1
        %v3027 = vrot.slane %v2848, 1
        %v3028 = vsel %vm694, %v3026, %v3027
        %v3039 = vld [vmem:[%s4] sm:$0xf]
        %v3040 = vld [vmem:[%s4 + $0x4] sm:$0xf]
        %v3041 = vld [vmem:[%s4 + $0x8] sm:$0xf]
        %v3042 = vld [vmem:[%s4 + $0xc] sm:$0xf]
        %v3043 = vld [vmem:[%s4 + $0x10] sm:$0xf]
        %v3044 = vld [vmem:[%s4 + $0x14] sm:$0xf]
        %v3045 = vld [vmem:[%s4 + $0x18] sm:$0xf]
        %v3046 = vld [vmem:[%s4 + $0x1c] sm:$0xf]
        %v3047 = vld [vmem:[%s4 + $0x20] sm:$0xf]
        %v3048 = vld [vmem:[%s4 + $0x24] sm:$0xf]
        %v3049 = vld [vmem:[%s4 + $0x28] sm:$0xf]
        %v3050 = vld [vmem:[%s4 + $0x2c] sm:$0xf]
        %v3051 = vld [vmem:[%s4 + $0x30] sm:$0xf]
        %v3052 = vld [vmem:[%s4 + $0x34] sm:$0xf]
        %v3053 = vld [vmem:[%s4 + $0x38] sm:$0xf]
        %v3054 = vld [vmem:[%s4 + $0x3c] sm:$0xf]
        %v3055 = vld [vmem:[%s4 + $0x40] sm:$0xf]
        %v3056 = vld [vmem:[%s4 + $0x44] sm:$0xf]
        %v3057 = vld [vmem:[%s4 + $0x48] sm:$0xf]
        %v3058 = vld [vmem:[%s4 + $0x4c] sm:$0xf]
        %v3059 = vld [vmem:[%s4 + $0x50] sm:$0xf]
        %v3060 = vld [vmem:[%s4 + $0x54] sm:$0xf]
        %v3061 = vld [vmem:[%s4 + $0x58] sm:$0xf]
        %v3062 = vld [vmem:[%s4 + $0x5c] sm:$0xf]
        %v3063 = vld [vmem:[%s4 + $0x60] sm:$0xf]
        %v3064 = vld [vmem:[%s4 + $0x64] sm:$0xf]
        %v3065 = vld [vmem:[%s4 + $0x68] sm:$0xf]
        %v3066 = vld [vmem:[%s4 + $0x6c] sm:$0xf]
        %v3067 = vld [vmem:[%s4 + $0x70] sm:$0xf]
        %v3068 = vld [vmem:[%s4 + $0x74] sm:$0xf]
        %v3069 = vld [vmem:[%s4 + $0x78] sm:$0xf]
        %v3070 = vld [vmem:[%s4 + $0x7c] sm:$0xf]
        %v3071 = vld [vmem:[%s4 + $0x80] sm:$0xf]
        %v3072 = vld [vmem:[%s4 + $0x84] sm:$0xf]
        %v3073 = vld [vmem:[%s4 + $0x88] sm:$0xf]
        %v3074 = vld [vmem:[%s4 + $0x8c] sm:$0xf]
        %v3075 = vld [vmem:[%s4 + $0x90] sm:$0xf]
        %v3076 = vld [vmem:[%s4 + $0x94] sm:$0xf]
        %v3077 = vld [vmem:[%s4 + $0x98] sm:$0xf]
        %v3078 = vld [vmem:[%s4 + $0x9c] sm:$0xf]
        %v3079 = vld [vmem:[%s4 + $0xa0] sm:$0xf]
        %v3080 = vld [vmem:[%s4 + $0xa4] sm:$0xf]
        %v3081 = vld [vmem:[%s4 + $0xa8] sm:$0xf]
        %v3082 = vld [vmem:[%s4 + $0xac] sm:$0xf]
        %v3083 = vld [vmem:[%s4 + $0xb0] sm:$0xf]
        %v3084 = vld [vmem:[%s4 + $0xb4] sm:$0xf]
        %v3085 = vld [vmem:[%s4 + $0xb8] sm:$0xf]
        %v3086 = vld [vmem:[%s4 + $0xbc] sm:$0xf]
        %s3087 = scalar_lea.vmem %s4, 192
        %v3088 = vld [vmem:[%s3087] sm:$0xf]
        %v3089 = vld [vmem:[%s3087 + $0x4] sm:$0xf]
        %v3090 = vld [vmem:[%s3087 + $0x8] sm:$0xf]
        %v3091 = vld [vmem:[%s3087 + $0xc] sm:$0xf]
        %v3092 = vld [vmem:[%s3087 + $0x10] sm:$0xf]
        %v3093 = vld [vmem:[%s3087 + $0x14] sm:$0xf]
        %v3094 = vld [vmem:[%s3087 + $0x18] sm:$0xf]
        %v3095 = vld [vmem:[%s3087 + $0x1c] sm:$0xf]
        %v3096 = vld [vmem:[%s3087 + $0x20] sm:$0xf]
        %v3097 = vld [vmem:[%s3087 + $0x24] sm:$0xf]
        %v3098 = vld [vmem:[%s3087 + $0x28] sm:$0xf]
        %v3099 = vld [vmem:[%s3087 + $0x2c] sm:$0xf]
        %v3100 = vld [vmem:[%s3087 + $0x30] sm:$0xf]
        %v3101 = vld [vmem:[%s3087 + $0x34] sm:$0xf]
        %v3102 = vld [vmem:[%s3087 + $0x38] sm:$0xf]
        %v3103 = vld [vmem:[%s3087 + $0x3c] sm:$0xf]
        %v3104 = vld [vmem:[%s3087 + $0x40] sm:$0xf]
        %v3105 = vld [vmem:[%s3087 + $0x44] sm:$0xf]
        %v3106 = vld [vmem:[%s3087 + $0x48] sm:$0xf]
        %v3107 = vld [vmem:[%s3087 + $0x4c] sm:$0xf]
        %v3108 = vld [vmem:[%s3087 + $0x50] sm:$0xf]
        %v3109 = vld [vmem:[%s3087 + $0x54] sm:$0xf]
        %v3110 = vld [vmem:[%s3087 + $0x58] sm:$0xf]
        %v3111 = vld [vmem:[%s3087 + $0x5c] sm:$0xf]
        %v3112 = vld [vmem:[%s3087 + $0x60] sm:$0xf]
        %v3113 = vld [vmem:[%s3087 + $0x64] sm:$0xf]
        %v3114 = vld [vmem:[%s3087 + $0x68] sm:$0xf]
        %v3115 = vld [vmem:[%s3087 + $0x6c] sm:$0xf]
        %v3116 = vld [vmem:[%s3087 + $0x70] sm:$0xf]
        %v3117 = vld [vmem:[%s3087 + $0x74] sm:$0xf]
        %v3118 = vld [vmem:[%s3087 + $0x78] sm:$0xf]
        %v3119 = vld [vmem:[%s3087 + $0x7c] sm:$0xf]
        %v3120 = vld [vmem:[%s3087 + $0x80] sm:$0xf]
        %v3121 = vld [vmem:[%s3087 + $0x84] sm:$0xf]
        %v3122 = vld [vmem:[%s3087 + $0x88] sm:$0xf]
        %v3123 = vld [vmem:[%s3087 + $0x8c] sm:$0xf]
        %v3124 = vld [vmem:[%s3087 + $0x90] sm:$0xf]
        %v3125 = vld [vmem:[%s3087 + $0x94] sm:$0xf]
        %v3126 = vld [vmem:[%s3087 + $0x98] sm:$0xf]
        %v3127 = vld [vmem:[%s3087 + $0x9c] sm:$0xf]
        %v3128 = vld [vmem:[%s3087 + $0xa0] sm:$0xf]
        %v3129 = vld [vmem:[%s3087 + $0xa4] sm:$0xf]
        %v3130 = vld [vmem:[%s3087 + $0xa8] sm:$0xf]
        %v3131 = vld [vmem:[%s3087 + $0xac] sm:$0xf]
        %v3132 = vld [vmem:[%s3087 + $0xb0] sm:$0xf]
        %v3133 = vld [vmem:[%s3087 + $0xb4] sm:$0xf]
        %v3134 = vld [vmem:[%s3087 + $0xb8] sm:$0xf]
        %v3135 = vld [vmem:[%s3087 + $0xbc] sm:$0xf]
        %v3184 = vunpack.c.l.b16 %v3088
        %v3185 = vunpack.c.l.b16 %v3089
        %v3186 = vunpack.c.l.b16 %v3090
        %v3187 = vunpack.c.l.b16 %v3091
        %v3188 = vunpack.c.l.b16 %v3092
        %v3189 = vunpack.c.l.b16 %v3093
        %v3190 = vunpack.c.l.b16 %v3094
        %v3191 = vunpack.c.l.b16 %v3095
        %v3192 = vunpack.c.l.b16 %v3096
        %v3193 = vunpack.c.l.b16 %v3097
        %v3194 = vunpack.c.l.b16 %v3098
        %v3195 = vunpack.c.l.b16 %v3099
        %v3196 = vunpack.c.l.b16 %v3100
        %v3197 = vunpack.c.l.b16 %v3101
        %v3198 = vunpack.c.l.b16 %v3102
        %v3199 = vunpack.c.l.b16 %v3103
        %v3200 = vunpack.c.l.b16 %v3104
        %v3201 = vunpack.c.l.b16 %v3105
        %v3202 = vunpack.c.l.b16 %v3106
        %v3203 = vunpack.c.l.b16 %v3107
        %v3204 = vunpack.c.l.b16 %v3108
        %v3205 = vunpack.c.l.b16 %v3109
        %v3206 = vunpack.c.l.b16 %v3110
        %v3207 = vunpack.c.l.b16 %v3111
        %v3208 = vunpack.c.l.b16 %v3112
        %v3209 = vunpack.c.l.b16 %v3113
        %v3210 = vunpack.c.l.b16 %v3114
        %v3211 = vunpack.c.l.b16 %v3115
        %v3212 = vunpack.c.l.b16 %v3116
        %v3213 = vunpack.c.l.b16 %v3117
        %v3214 = vunpack.c.l.b16 %v3118
        %v3215 = vunpack.c.l.b16 %v3119
        %v3216 = vunpack.c.l.b16 %v3120
        %v3217 = vunpack.c.l.b16 %v3121
        %v3218 = vunpack.c.l.b16 %v3122
        %v3219 = vunpack.c.l.b16 %v3123
        %v3220 = vunpack.c.l.b16 %v3124
        %v3221 = vunpack.c.l.b16 %v3125
        %v3222 = vunpack.c.l.b16 %v3126
        %v3223 = vunpack.c.l.b16 %v3127
        %v3224 = vunpack.c.l.b16 %v3128
        %v3225 = vunpack.c.l.b16 %v3129
        %v3226 = vunpack.c.l.b16 %v3130
        %v3227 = vunpack.c.l.b16 %v3131
        %v3228 = vunpack.c.l.b16 %v3132
        %v3229 = vunpack.c.l.b16 %v3133
        %v3230 = vunpack.c.l.b16 %v3134
        %v3231 = vunpack.c.l.b16 %v3135
        %v3232 = vpack.c.b16 %v3185, %v3184
        %v3233 = vpack.c.b16 %v3187, %v3186
        %v3234 = vpack.c.b16 %v3189, %v3188
        %v3235 = vpack.c.b16 %v3191, %v3190
        %v3236 = vpack.c.b16 %v3193, %v3192
        %v3237 = vpack.c.b16 %v3195, %v3194
        %v3238 = vpack.c.b16 %v3197, %v3196
        %v3239 = vpack.c.b16 %v3199, %v3198
        %v3240 = vpack.c.b16 %v3201, %v3200
        %v3241 = vpack.c.b16 %v3203, %v3202
        %v3242 = vpack.c.b16 %v3205, %v3204
        %v3243 = vpack.c.b16 %v3207, %v3206
        %v3244 = vpack.c.b16 %v3209, %v3208
        %v3245 = vpack.c.b16 %v3211, %v3210
        %v3246 = vpack.c.b16 %v3213, %v3212
        %v3247 = vpack.c.b16 %v3215, %v3214
        %v3248 = vpack.c.b16 %v3217, %v3216
        %v3249 = vpack.c.b16 %v3219, %v3218
        %v3250 = vpack.c.b16 %v3221, %v3220
        %v3251 = vpack.c.b16 %v3223, %v3222
        %v3252 = vpack.c.b16 %v3225, %v3224
        %v3253 = vpack.c.b16 %v3227, %v3226
        %v3254 = vpack.c.b16 %v3229, %v3228
        %v3255 = vpack.c.b16 %v3231, %v3230
        %3280 = vmatprep.subr.bf16.mxu0 0
        %3281 = vmatpush1.bf16.msra.mxu0 %v3239
        %3282 = vmatprep.subr.bf16.mxu0 0
        %3283 = vmatpush1.bf16.msra.mxu0 %v3238
        %3284 = vmatprep.subr.bf16.mxu0 0
        %3285 = vmatpush1.bf16.msra.mxu0 %v3237
        %3286 = vmatprep.subr.bf16.mxu0 0
        %3287 = vmatpush1.bf16.msra.mxu0 %v3236
        %3288 = vmatprep.subr.bf16.mxu0 0
        %3289 = vmatpush1.bf16.msra.mxu0 %v3235
        %3290 = vmatprep.subr.bf16.mxu0 0
        %3291 = vmatpush1.bf16.msra.mxu0 %v3234
        %3292 = vmatprep.subr.bf16.mxu0 0
        %3293 = vmatpush1.bf16.msra.mxu0 %v3233
        %3294 = vmatprep.subr.bf16.mxu0 0
        %3295 = vmatpush1.bf16.msra.mxu0 %v3232
        %3296 = vmatprep.subr.bf16.mxu0 0
        %3297 = vmatpush2.bf16.msra.mxu0 %v3247
        %3298 = vmatprep.subr.bf16.mxu0 0
        %3299 = vmatpush2.bf16.msra.mxu0 %v3246
        %3300 = vmatprep.subr.bf16.mxu0 0
        %3301 = vmatpush2.bf16.msra.mxu0 %v3245
        %3302 = vmatprep.subr.bf16.mxu0 0
        %3303 = vmatpush2.bf16.msra.mxu0 %v3244
        %3304 = vmatprep.subr.bf16.mxu0 0
        %3305 = vmatpush2.bf16.msra.mxu0 %v3243
        %3306 = vmatprep.subr.bf16.mxu0 0
        %3307 = vmatpush2.bf16.msra.mxu0 %v3242
        %3308 = vmatprep.subr.bf16.mxu0 0
        %3309 = vmatpush2.bf16.msra.mxu0 %v3241
        %3310 = vmatprep.subr.bf16.mxu0 0
        %3311 = vmatpush2.bf16.msra.mxu0 %v3240
        %3312 = vmatprep.mubr.bf16.mxu0 %v2872
        %3313 = vmatmul.mubr.bf16.gmra.mxu0 %v2831
        %v3314 = vpop.f32.mrf.mxu0
        %v3315 = vadd.f32 0.0, %v3314
        %v3316 = vpop.f32.mrf.mxu0
        %v3317 = vpop.f32.mrf.mxu0
        %v3318 = vadd.f32 0.0, %v3317
        %v3319 = vpop.f32.mrf.mxu0
        %3320 = vmatprep.mubr.bf16.mxu0 %v2884
        %3321 = vmatmul.mubr.bf16.gmra.mxu0 %v2833
        %v3322 = vpop.f32.mrf.mxu0
        %v3323 = vadd.f32 0.0, %v3322
        %v3324 = vpop.f32.mrf.mxu0
        %v3325 = vpop.f32.mrf.mxu0
        %v3326 = vadd.f32 0.0, %v3325
        %v3327 = vpop.f32.mrf.mxu0
        %3328 = vmatprep.mubr.bf16.mxu0 %v2896
        %3329 = vmatmul.mubr.bf16.gmra.mxu0 %v2835
        %v3330 = vpop.f32.mrf.mxu0
        %v3331 = vadd.f32 0.0, %v3330
        %v3332 = vpop.f32.mrf.mxu0
        %v3333 = vpop.f32.mrf.mxu0
        %v3334 = vadd.f32 0.0, %v3333
        %v3335 = vpop.f32.mrf.mxu0
        %3336 = vmatprep.mubr.bf16.mxu0 %v2908
        %3337 = vmatmul.mubr.bf16.gmra.mxu0 %v2837
        %v3338 = vpop.f32.mrf.mxu0
        %v3339 = vadd.f32 0.0, %v3338
        %v3340 = vpop.f32.mrf.mxu0
        %v3341 = vpop.f32.mrf.mxu0
        %v3342 = vadd.f32 0.0, %v3341
        %v3343 = vpop.f32.mrf.mxu0
        %3344 = vmatprep.mubr.bf16.mxu0 %v2920
        %3345 = vmatmul.mubr.bf16.gmra.mxu0 %v2839
        %v3346 = vpop.f32.mrf.mxu0
        %v3347 = vadd.f32 0.0, %v3346
        %v3348 = vpop.f32.mrf.mxu0
        %v3349 = vpop.f32.mrf.mxu0
        %v3350 = vadd.f32 0.0, %v3349
        %v3351 = vpop.f32.mrf.mxu0
        %3352 = vmatprep.mubr.bf16.mxu0 %v2932
        %3353 = vmatmul.mubr.bf16.gmra.mxu0 %v2841
        %v3354 = vpop.f32.mrf.mxu0
        %v3355 = vadd.f32 0.0, %v3354
        %v3356 = vpop.f32.mrf.mxu0
        %v3357 = vpop.f32.mrf.mxu0
        %v3358 = vadd.f32 0.0, %v3357
        %v3359 = vpop.f32.mrf.mxu0
        %3360 = vmatprep.mubr.bf16.mxu0 %v2944
        %3361 = vmatmul.mubr.bf16.gmra.mxu0 %v2843
        %v3362 = vpop.f32.mrf.mxu0
        %v3363 = vadd.f32 0.0, %v3362
        %v3364 = vpop.f32.mrf.mxu0
        %v3365 = vpop.f32.mrf.mxu0
        %v3366 = vadd.f32 0.0, %v3365
        %v3367 = vpop.f32.mrf.mxu0
        %3368 = vmatprep.mubr.bf16.mxu0 %v2956
        %3369 = vmatmul.mubr.bf16.gmra.mxu0 %v2845
        %v3370 = vpop.f32.mrf.mxu0
        %v3371 = vadd.f32 0.0, %v3370
        %v3372 = vpop.f32.mrf.mxu0
        %v3373 = vpop.f32.mrf.mxu0
        %v3374 = vadd.f32 0.0, %v3373
        %v3375 = vpop.f32.mrf.mxu0
        %3376 = vdwg.mxu0
        %3377 = vmatprep.subr.bf16.mxu0 0
        %3378 = vmatpush1.bf16.msra.mxu0 %v3255
        %3379 = vmatprep.subr.bf16.mxu0 0
        %3380 = vmatpush1.bf16.msra.mxu0 %v3254
        %3381 = vmatprep.subr.bf16.mxu0 0
        %3382 = vmatpush1.bf16.msra.mxu0 %v3253
        %3383 = vmatprep.subr.bf16.mxu0 0
        %3384 = vmatpush1.bf16.msra.mxu0 %v3252
        %3385 = vmatprep.subr.bf16.mxu0 0
        %3386 = vmatpush1.bf16.msra.mxu0 %v3251
        %3387 = vmatprep.subr.bf16.mxu0 0
        %3388 = vmatpush1.bf16.msra.mxu0 %v3250
        %3389 = vmatprep.subr.bf16.mxu0 0
        %3390 = vmatpush1.bf16.msra.mxu0 %v3249
        %3391 = vmatprep.subr.bf16.mxu0 0
        %3392 = vmatpush1.bf16.msra.mxu0 %v3248
        %3393 = vmatprep.subr.bf16.mxu0 0
        %3394 = vmatpush2.bf16.msra.mxu0 0
        %3395 = vmatprep.subr.bf16.mxu0 0
        %3396 = vmatpush2.bf16.msra.mxu0 0
        %3397 = vmatprep.subr.bf16.mxu0 0
        %3398 = vmatpush2.bf16.msra.mxu0 0
        %3399 = vmatprep.subr.bf16.mxu0 0
        %3400 = vmatpush2.bf16.msra.mxu0 0
        %3401 = vmatprep.subr.bf16.mxu0 0
        %3402 = vmatpush2.bf16.msra.mxu0 0
        %3403 = vmatprep.subr.bf16.mxu0 0
        %3404 = vmatpush2.bf16.msra.mxu0 0
        %3405 = vmatprep.subr.bf16.mxu0 0
        %3406 = vmatpush2.bf16.msra.mxu0 0
        %3407 = vmatprep.subr.bf16.mxu0 0
        %3408 = vmatpush2.bf16.msra.mxu0 0
        %3409 = vmatprep.mubr.bf16.mxu0 0
        %3410 = vmatmul.mubr.bf16.gmra.mxu0 %v3004
        %v3411 = vpop.f32.mrf.mxu0
        %v3412 = vadd.f32 %v3315, %v3411
        %v3413 = vpop.f32.mrf.mxu0
        %v3414 = vpop.f32.mrf.mxu0
        %v3415 = vadd.f32 %v3318, %v3414
        %v3416 = vpop.f32.mrf.mxu0
        %3417 = vmatprep.mubr.bf16.mxu0 0
        %3418 = vmatmul.mubr.bf16.gmra.mxu0 %v3007
        %v3419 = vpop.f32.mrf.mxu0
        %v3420 = vadd.f32 %v3323, %v3419
        %v3421 = vpop.f32.mrf.mxu0
        %v3422 = vpop.f32.mrf.mxu0
        %v3423 = vadd.f32 %v3326, %v3422
        %v3424 = vpop.f32.mrf.mxu0
        %3425 = vmatprep.mubr.bf16.mxu0 0
        %3426 = vmatmul.mubr.bf16.gmra.mxu0 %v3010
        %v3427 = vpop.f32.mrf.mxu0
        %v3428 = vadd.f32 %v3331, %v3427
        %v3429 = vpop.f32.mrf.mxu0
        %v3430 = vpop.f32.mrf.mxu0
        %v3431 = vadd.f32 %v3334, %v3430
        %v3432 = vpop.f32.mrf.mxu0
        %3433 = vmatprep.mubr.bf16.mxu0 0
        %3434 = vmatmul.mubr.bf16.gmra.mxu0 %v3013
        %v3435 = vpop.f32.mrf.mxu0
        %v3436 = vadd.f32 %v3339, %v3435
        %v3437 = vpop.f32.mrf.mxu0
        %v3438 = vpop.f32.mrf.mxu0
        %v3439 = vadd.f32 %v3342, %v3438
        %v3440 = vpop.f32.mrf.mxu0
        %3441 = vmatprep.mubr.bf16.mxu0 0
        %3442 = vmatmul.mubr.bf16.gmra.mxu0 %v3016
        %v3443 = vpop.f32.mrf.mxu0
        %v3444 = vadd.f32 %v3347, %v3443
        %v3445 = vpop.f32.mrf.mxu0
        %v3446 = vpop.f32.mrf.mxu0
        %v3447 = vadd.f32 %v3350, %v3446
        %v3448 = vpop.f32.mrf.mxu0
        %3449 = vmatprep.mubr.bf16.mxu0 0
        %3450 = vmatmul.mubr.bf16.gmra.mxu0 %v3019
        %v3451 = vpop.f32.mrf.mxu0
        %v3452 = vadd.f32 %v3355, %v3451
        %v3453 = vpop.f32.mrf.mxu0
        %v3454 = vpop.f32.mrf.mxu0
        %v3455 = vadd.f32 %v3358, %v3454
        %v3456 = vpop.f32.mrf.mxu0
        %3457 = vmatprep.mubr.bf16.mxu0 0
        %3458 = vmatmul.mubr.bf16.gmra.mxu0 %v3022
        %v3459 = vpop.f32.mrf.mxu0
        %v3460 = vadd.f32 %v3363, %v3459
        %v3461 = vpop.f32.mrf.mxu0
        %v3462 = vpop.f32.mrf.mxu0
        %v3463 = vadd.f32 %v3366, %v3462
        %v3464 = vpop.f32.mrf.mxu0
        %3465 = vmatprep.mubr.bf16.mxu0 0
        %3466 = vmatmul.mubr.bf16.gmra.mxu0 %v3025
        %v3467 = vpop.f32.mrf.mxu0
        %v3468 = vadd.f32 %v3371, %v3467
        %v3469 = vpop.f32.mrf.mxu0
        %v3470 = vpop.f32.mrf.mxu0
        %v3471 = vadd.f32 %v3374, %v3470
        %v3472 = vpop.f32.mrf.mxu0
        %3473 = vdwg.mxu0
        %v3522 = vunpack.c.l.b16 %v3039
        %v3523 = vunpack.c.l.b16 %v3040
        %v3524 = vunpack.c.l.b16 %v3041
        %v3525 = vunpack.c.l.b16 %v3042
        %v3526 = vunpack.c.l.b16 %v3043
        %v3527 = vunpack.c.l.b16 %v3044
        %v3528 = vunpack.c.l.b16 %v3045
        %v3529 = vunpack.c.l.b16 %v3046
        %v3530 = vunpack.c.l.b16 %v3047
        %v3531 = vunpack.c.l.b16 %v3048
        %v3532 = vunpack.c.l.b16 %v3049
        %v3533 = vunpack.c.l.b16 %v3050
        %v3534 = vunpack.c.l.b16 %v3051
        %v3535 = vunpack.c.l.b16 %v3052
        %v3536 = vunpack.c.l.b16 %v3053
        %v3537 = vunpack.c.l.b16 %v3054
        %v3538 = vunpack.c.l.b16 %v3055
        %v3539 = vunpack.c.l.b16 %v3056
        %v3540 = vunpack.c.l.b16 %v3057
        %v3541 = vunpack.c.l.b16 %v3058
        %v3542 = vunpack.c.l.b16 %v3059
        %v3543 = vunpack.c.l.b16 %v3060
        %v3544 = vunpack.c.l.b16 %v3061
        %v3545 = vunpack.c.l.b16 %v3062
        %v3546 = vunpack.c.l.b16 %v3063
        %v3547 = vunpack.c.l.b16 %v3064
        %v3548 = vunpack.c.l.b16 %v3065
        %v3549 = vunpack.c.l.b16 %v3066
        %v3550 = vunpack.c.l.b16 %v3067
        %v3551 = vunpack.c.l.b16 %v3068
        %v3552 = vunpack.c.l.b16 %v3069
        %v3553 = vunpack.c.l.b16 %v3070
        %v3554 = vunpack.c.l.b16 %v3071
        %v3555 = vunpack.c.l.b16 %v3072
        %v3556 = vunpack.c.l.b16 %v3073
        %v3557 = vunpack.c.l.b16 %v3074
        %v3558 = vunpack.c.l.b16 %v3075
        %v3559 = vunpack.c.l.b16 %v3076
        %v3560 = vunpack.c.l.b16 %v3077
        %v3561 = vunpack.c.l.b16 %v3078
        %v3562 = vunpack.c.l.b16 %v3079
        %v3563 = vunpack.c.l.b16 %v3080
        %v3564 = vunpack.c.l.b16 %v3081
        %v3565 = vunpack.c.l.b16 %v3082
        %v3566 = vunpack.c.l.b16 %v3083
        %v3567 = vunpack.c.l.b16 %v3084
        %v3568 = vunpack.c.l.b16 %v3085
        %v3569 = vunpack.c.l.b16 %v3086
        %v3570 = vpack.c.b16 %v3523, %v3522
        %v3571 = vpack.c.b16 %v3525, %v3524
        %v3572 = vpack.c.b16 %v3527, %v3526
        %v3573 = vpack.c.b16 %v3529, %v3528
        %v3574 = vpack.c.b16 %v3531, %v3530
        %v3575 = vpack.c.b16 %v3533, %v3532
        %v3576 = vpack.c.b16 %v3535, %v3534
        %v3577 = vpack.c.b16 %v3537, %v3536
        %v3578 = vpack.c.b16 %v3539, %v3538
        %v3579 = vpack.c.b16 %v3541, %v3540
        %v3580 = vpack.c.b16 %v3543, %v3542
        %v3581 = vpack.c.b16 %v3545, %v3544
        %v3582 = vpack.c.b16 %v3547, %v3546
        %v3583 = vpack.c.b16 %v3549, %v3548
        %v3584 = vpack.c.b16 %v3551, %v3550
        %v3585 = vpack.c.b16 %v3553, %v3552
        %v3586 = vpack.c.b16 %v3555, %v3554
        %v3587 = vpack.c.b16 %v3557, %v3556
        %v3588 = vpack.c.b16 %v3559, %v3558
        %v3589 = vpack.c.b16 %v3561, %v3560
        %v3590 = vpack.c.b16 %v3563, %v3562
        %v3591 = vpack.c.b16 %v3565, %v3564
        %v3592 = vpack.c.b16 %v3567, %v3566
        %v3593 = vpack.c.b16 %v3569, %v3568
        %3618 = vmatprep.subr.bf16.mxu0 0
        %3619 = vmatpush1.bf16.msra.mxu0 %v3577
        %3620 = vmatprep.subr.bf16.mxu0 0
        %3621 = vmatpush1.bf16.msra.mxu0 %v3576
        %3622 = vmatprep.subr.bf16.mxu0 0
        %3623 = vmatpush1.bf16.msra.mxu0 %v3575
        %3624 = vmatprep.subr.bf16.mxu0 0
        %3625 = vmatpush1.bf16.msra.mxu0 %v3574
        %3626 = vmatprep.subr.bf16.mxu0 0
        %3627 = vmatpush1.bf16.msra.mxu0 %v3573
        %3628 = vmatprep.subr.bf16.mxu0 0
        %3629 = vmatpush1.bf16.msra.mxu0 %v3572
        %3630 = vmatprep.subr.bf16.mxu0 0
        %3631 = vmatpush1.bf16.msra.mxu0 %v3571
        %3632 = vmatprep.subr.bf16.mxu0 0
        %3633 = vmatpush1.bf16.msra.mxu0 %v3570
        %3634 = vmatprep.subr.bf16.mxu0 0
        %3635 = vmatpush2.bf16.msra.mxu0 %v3585
        %3636 = vmatprep.subr.bf16.mxu0 0
        %3637 = vmatpush2.bf16.msra.mxu0 %v3584
        %3638 = vmatprep.subr.bf16.mxu0 0
        %3639 = vmatpush2.bf16.msra.mxu0 %v3583
        %3640 = vmatprep.subr.bf16.mxu0 0
        %3641 = vmatpush2.bf16.msra.mxu0 %v3582
        %3642 = vmatprep.subr.bf16.mxu0 0
        %3643 = vmatpush2.bf16.msra.mxu0 %v3581
        %3644 = vmatprep.subr.bf16.mxu0 0
        %3645 = vmatpush2.bf16.msra.mxu0 %v3580
        %3646 = vmatprep.subr.bf16.mxu0 0
        %3647 = vmatpush2.bf16.msra.mxu0 %v3579
        %3648 = vmatprep.subr.bf16.mxu0 0
        %3649 = vmatpush2.bf16.msra.mxu0 %v3578
        %3650 = vmatprep.mubr.bf16.mxu0 %v2860
        %3651 = vmatmul.mubr.bf16.gmra.mxu0 %v2829
        %v3652 = vpop.f32.mrf.mxu0
        %v3653 = vadd.f32 %v3412, %v3652
        %v3654 = vpop.f32.mrf.mxu0
        %v3655 = vpop.f32.mrf.mxu0
        %v3656 = vadd.f32 %v3415, %v3655
        %v3657 = vpop.f32.mrf.mxu0
        %3658 = vmatprep.mubr.bf16.mxu0 %v2872
        %3659 = vmatmul.mubr.bf16.gmra.mxu0 %v2831
        %v3660 = vpop.f32.mrf.mxu0
        %v3661 = vadd.f32 %v3420, %v3660
        %v3662 = vpop.f32.mrf.mxu0
        %v3663 = vpop.f32.mrf.mxu0
        %v3664 = vadd.f32 %v3423, %v3663
        %v3665 = vpop.f32.mrf.mxu0
        %3666 = vmatprep.mubr.bf16.mxu0 %v2884
        %3667 = vmatmul.mubr.bf16.gmra.mxu0 %v2833
        %v3668 = vpop.f32.mrf.mxu0
        %v3669 = vadd.f32 %v3428, %v3668
        %v3670 = vpop.f32.mrf.mxu0
        %v3671 = vpop.f32.mrf.mxu0
        %v3672 = vadd.f32 %v3431, %v3671
        %v3673 = vpop.f32.mrf.mxu0
        %3674 = vmatprep.mubr.bf16.mxu0 %v2896
        %3675 = vmatmul.mubr.bf16.gmra.mxu0 %v2835
        %v3676 = vpop.f32.mrf.mxu0
        %v3677 = vadd.f32 %v3436, %v3676
        %v3678 = vpop.f32.mrf.mxu0
        %v3679 = vpop.f32.mrf.mxu0
        %v3680 = vadd.f32 %v3439, %v3679
        %v3681 = vpop.f32.mrf.mxu0
        %3682 = vmatprep.mubr.bf16.mxu0 %v2908
        %3683 = vmatmul.mubr.bf16.gmra.mxu0 %v2837
        %v3684 = vpop.f32.mrf.mxu0
        %v3685 = vadd.f32 %v3444, %v3684
        %v3686 = vpop.f32.mrf.mxu0
        %v3687 = vpop.f32.mrf.mxu0
        %v3688 = vadd.f32 %v3447, %v3687
        %v3689 = vpop.f32.mrf.mxu0
        %3690 = vmatprep.mubr.bf16.mxu0 %v2920
        %3691 = vmatmul.mubr.bf16.gmra.mxu0 %v2839
        %v3692 = vpop.f32.mrf.mxu0
        %v3693 = vadd.f32 %v3452, %v3692
        %v3694 = vpop.f32.mrf.mxu0
        %v3695 = vpop.f32.mrf.mxu0
        %v3696 = vadd.f32 %v3455, %v3695
        %v3697 = vpop.f32.mrf.mxu0
        %3698 = vmatprep.mubr.bf16.mxu0 %v2932
        %3699 = vmatmul.mubr.bf16.gmra.mxu0 %v2841
        %v3700 = vpop.f32.mrf.mxu0
        %v3701 = vadd.f32 %v3460, %v3700
        %v3702 = vpop.f32.mrf.mxu0
        %v3703 = vpop.f32.mrf.mxu0
        %v3704 = vadd.f32 %v3463, %v3703
        %v3705 = vpop.f32.mrf.mxu0
        %3706 = vmatprep.mubr.bf16.mxu0 %v2944
        %3707 = vmatmul.mubr.bf16.gmra.mxu0 %v2843
        %v3708 = vpop.f32.mrf.mxu0
        %v3709 = vadd.f32 %v3468, %v3708
        %v3710 = vpop.f32.mrf.mxu0
        %v3711 = vpop.f32.mrf.mxu0
        %v3712 = vadd.f32 %v3471, %v3711
        %v3713 = vpop.f32.mrf.mxu0
        %3714 = vdwg.mxu0
        %3715 = vmatprep.subr.bf16.mxu0 0
        %3716 = vmatpush1.bf16.msra.mxu0 %v3593
        %3717 = vmatprep.subr.bf16.mxu0 0
        %3718 = vmatpush1.bf16.msra.mxu0 %v3592
        %3719 = vmatprep.subr.bf16.mxu0 0
        %3720 = vmatpush1.bf16.msra.mxu0 %v3591
        %3721 = vmatprep.subr.bf16.mxu0 0
        %3722 = vmatpush1.bf16.msra.mxu0 %v3590
        %3723 = vmatprep.subr.bf16.mxu0 0
        %3724 = vmatpush1.bf16.msra.mxu0 %v3589
        %3725 = vmatprep.subr.bf16.mxu0 0
        %3726 = vmatpush1.bf16.msra.mxu0 %v3588
        %3727 = vmatprep.subr.bf16.mxu0 0
        %3728 = vmatpush1.bf16.msra.mxu0 %v3587
        %3729 = vmatprep.subr.bf16.mxu0 0
        %3730 = vmatpush1.bf16.msra.mxu0 %v3586
        %3731 = vmatprep.subr.bf16.mxu0 0
        %3732 = vmatpush2.bf16.msra.mxu0 0
        %3733 = vmatprep.subr.bf16.mxu0 0
        %3734 = vmatpush2.bf16.msra.mxu0 0
        %3735 = vmatprep.subr.bf16.mxu0 0
        %3736 = vmatpush2.bf16.msra.mxu0 0
        %3737 = vmatprep.subr.bf16.mxu0 0
        %3738 = vmatpush2.bf16.msra.mxu0 0
        %3739 = vmatprep.subr.bf16.mxu0 0
        %3740 = vmatpush2.bf16.msra.mxu0 0
        %3741 = vmatprep.subr.bf16.mxu0 0
        %3742 = vmatpush2.bf16.msra.mxu0 0
        %3743 = vmatprep.subr.bf16.mxu0 0
        %3744 = vmatpush2.bf16.msra.mxu0 0
        %3745 = vmatprep.subr.bf16.mxu0 0
        %3746 = vmatpush2.bf16.msra.mxu0 0
        %3747 = vmatprep.mubr.bf16.mxu0 0
        %3748 = vmatmul.mubr.bf16.gmra.mxu0 %v3001
        %v3749 = vpop.f32.mrf.mxu0
        %v3750 = vadd.f32 %v3653, %v3749
        %v3751 = vpop.f32.mrf.mxu0
        %v3752 = vpop.f32.mrf.mxu0
        %v3753 = vadd.f32 %v3656, %v3752
        %v3754 = vpop.f32.mrf.mxu0
        %3755 = vmatprep.mubr.bf16.mxu0 0
        %3756 = vmatmul.mubr.bf16.gmra.mxu0 %v3004
        %v3757 = vpop.f32.mrf.mxu0
        %v3758 = vadd.f32 %v3661, %v3757
        %v3759 = vpop.f32.mrf.mxu0
        %v3760 = vpop.f32.mrf.mxu0
        %v3761 = vadd.f32 %v3664, %v3760
        %v3762 = vpop.f32.mrf.mxu0
        %3763 = vmatprep.mubr.bf16.mxu0 0
        %3764 = vmatmul.mubr.bf16.gmra.mxu0 %v3007
        %v3765 = vpop.f32.mrf.mxu0
        %v3766 = vadd.f32 %v3669, %v3765
        %v3767 = vpop.f32.mrf.mxu0
        %v3768 = vpop.f32.mrf.mxu0
        %v3769 = vadd.f32 %v3672, %v3768
        %v3770 = vpop.f32.mrf.mxu0
        %3771 = vmatprep.mubr.bf16.mxu0 0
        %3772 = vmatmul.mubr.bf16.gmra.mxu0 %v3010
        %v3773 = vpop.f32.mrf.mxu0
        %v3774 = vadd.f32 %v3677, %v3773
        %v3775 = vpop.f32.mrf.mxu0
        %v3776 = vpop.f32.mrf.mxu0
        %v3777 = vadd.f32 %v3680, %v3776
        %v3778 = vpop.f32.mrf.mxu0
        %3779 = vmatprep.mubr.bf16.mxu0 0
        %3780 = vmatmul.mubr.bf16.gmra.mxu0 %v3013
        %v3781 = vpop.f32.mrf.mxu0
        %v3782 = vadd.f32 %v3685, %v3781
        %v3783 = vpop.f32.mrf.mxu0
        %v3784 = vpop.f32.mrf.mxu0
        %v3785 = vadd.f32 %v3688, %v3784
        %v3786 = vpop.f32.mrf.mxu0
        %3787 = vmatprep.mubr.bf16.mxu0 0
        %3788 = vmatmul.mubr.bf16.gmra.mxu0 %v3016
        %v3789 = vpop.f32.mrf.mxu0
        %v3790 = vadd.f32 %v3693, %v3789
        %v3791 = vpop.f32.mrf.mxu0
        %v3792 = vpop.f32.mrf.mxu0
        %v3793 = vadd.f32 %v3696, %v3792
        %v3794 = vpop.f32.mrf.mxu0
        %3795 = vmatprep.mubr.bf16.mxu0 0
        %3796 = vmatmul.mubr.bf16.gmra.mxu0 %v3019
        %v3797 = vpop.f32.mrf.mxu0
        %v3798 = vadd.f32 %v3701, %v3797
        %v3799 = vpop.f32.mrf.mxu0
        %v3800 = vpop.f32.mrf.mxu0
        %v3801 = vadd.f32 %v3704, %v3800
        %v3802 = vpop.f32.mrf.mxu0
        %3803 = vmatprep.mubr.bf16.mxu0 0
        %3804 = vmatmul.mubr.bf16.gmra.mxu0 %v3022
        %v3805 = vpop.f32.mrf.mxu0
        %v3806 = vadd.f32 %v3709, %v3805
        %v3807 = vpop.f32.mrf.mxu0
        %v3808 = vpop.f32.mrf.mxu0
        %v3809 = vadd.f32 %v3712, %v3808
        %v3810 = vpop.f32.mrf.mxu0
        %3811 = vdwg.mxu0
        %s3812 = scalar_lea.vmem %s4, 384
        %v3813 = vld [vmem:[%s3812] sm:$0xf]
        %v3814 = vld [vmem:[%s3812 + $0x4] sm:$0xf]
        %v3815 = vld [vmem:[%s3812 + $0x8] sm:$0xf]
        %v3816 = vld [vmem:[%s3812 + $0xc] sm:$0xf]
        %v3817 = vld [vmem:[%s3812 + $0x10] sm:$0xf]
        %v3818 = vld [vmem:[%s3812 + $0x14] sm:$0xf]
        %v3819 = vld [vmem:[%s3812 + $0x18] sm:$0xf]
        %v3820 = vld [vmem:[%s3812 + $0x1c] sm:$0xf]
        %v3821 = vld [vmem:[%s3812 + $0x20] sm:$0xf]
        %v3822 = vld [vmem:[%s3812 + $0x24] sm:$0xf]
        %v3823 = vld [vmem:[%s3812 + $0x28] sm:$0xf]
        %v3824 = vld [vmem:[%s3812 + $0x2c] sm:$0xf]
        %v3825 = vld [vmem:[%s3812 + $0x30] sm:$0xf]
        %v3826 = vld [vmem:[%s3812 + $0x34] sm:$0xf]
        %v3827 = vld [vmem:[%s3812 + $0x38] sm:$0xf]
        %v3828 = vld [vmem:[%s3812 + $0x3c] sm:$0xf]
        %v3829 = vld [vmem:[%s3812 + $0x40] sm:$0xf]
        %v3830 = vld [vmem:[%s3812 + $0x44] sm:$0xf]
        %v3831 = vld [vmem:[%s3812 + $0x48] sm:$0xf]
        %v3832 = vld [vmem:[%s3812 + $0x4c] sm:$0xf]
        %v3833 = vld [vmem:[%s3812 + $0x50] sm:$0xf]
        %v3834 = vld [vmem:[%s3812 + $0x54] sm:$0xf]
        %v3835 = vld [vmem:[%s3812 + $0x58] sm:$0xf]
        %v3836 = vld [vmem:[%s3812 + $0x5c] sm:$0xf]
        %v3837 = vld [vmem:[%s3812 + $0x60] sm:$0xf]
        %v3838 = vld [vmem:[%s3812 + $0x64] sm:$0xf]
        %v3839 = vld [vmem:[%s3812 + $0x68] sm:$0xf]
        %v3840 = vld [vmem:[%s3812 + $0x6c] sm:$0xf]
        %v3841 = vld [vmem:[%s3812 + $0x70] sm:$0xf]
        %v3842 = vld [vmem:[%s3812 + $0x74] sm:$0xf]
        %v3843 = vld [vmem:[%s3812 + $0x78] sm:$0xf]
        %v3844 = vld [vmem:[%s3812 + $0x7c] sm:$0xf]
        %v3845 = vld [vmem:[%s3812 + $0x80] sm:$0xf]
        %v3846 = vld [vmem:[%s3812 + $0x84] sm:$0xf]
        %v3847 = vld [vmem:[%s3812 + $0x88] sm:$0xf]
        %v3848 = vld [vmem:[%s3812 + $0x8c] sm:$0xf]
        %v3849 = vld [vmem:[%s3812 + $0x90] sm:$0xf]
        %v3850 = vld [vmem:[%s3812 + $0x94] sm:$0xf]
        %v3851 = vld [vmem:[%s3812 + $0x98] sm:$0xf]
        %v3852 = vld [vmem:[%s3812 + $0x9c] sm:$0xf]
        %v3853 = vld [vmem:[%s3812 + $0xa0] sm:$0xf]
        %v3854 = vld [vmem:[%s3812 + $0xa4] sm:$0xf]
        %v3855 = vld [vmem:[%s3812 + $0xa8] sm:$0xf]
        %v3856 = vld [vmem:[%s3812 + $0xac] sm:$0xf]
        %v3857 = vld [vmem:[%s3812 + $0xb0] sm:$0xf]
        %v3858 = vld [vmem:[%s3812 + $0xb4] sm:$0xf]
        %v3859 = vld [vmem:[%s3812 + $0xb8] sm:$0xf]
        %v3860 = vld [vmem:[%s3812 + $0xbc] sm:$0xf]
        %v3909 = vunpack.c.l.b16 %v3813
        %v3910 = vunpack.c.l.b16 %v3814
        %v3911 = vunpack.c.l.b16 %v3815
        %v3912 = vunpack.c.l.b16 %v3816
        %v3913 = vunpack.c.l.b16 %v3817
        %v3914 = vunpack.c.l.b16 %v3818
        %v3915 = vunpack.c.l.b16 %v3819
        %v3916 = vunpack.c.l.b16 %v3820
        %v3917 = vunpack.c.l.b16 %v3821
        %v3918 = vunpack.c.l.b16 %v3822
        %v3919 = vunpack.c.l.b16 %v3823
        %v3920 = vunpack.c.l.b16 %v3824
        %v3921 = vunpack.c.l.b16 %v3825
        %v3922 = vunpack.c.l.b16 %v3826
        %v3923 = vunpack.c.l.b16 %v3827
        %v3924 = vunpack.c.l.b16 %v3828
        %v3925 = vunpack.c.l.b16 %v3829
        %v3926 = vunpack.c.l.b16 %v3830
        %v3927 = vunpack.c.l.b16 %v3831
        %v3928 = vunpack.c.l.b16 %v3832
        %v3929 = vunpack.c.l.b16 %v3833
        %v3930 = vunpack.c.l.b16 %v3834
        %v3931 = vunpack.c.l.b16 %v3835
        %v3932 = vunpack.c.l.b16 %v3836
        %v3933 = vunpack.c.l.b16 %v3837
        %v3934 = vunpack.c.l.b16 %v3838
        %v3935 = vunpack.c.l.b16 %v3839
        %v3936 = vunpack.c.l.b16 %v3840
        %v3937 = vunpack.c.l.b16 %v3841
        %v3938 = vunpack.c.l.b16 %v3842
        %v3939 = vunpack.c.l.b16 %v3843
        %v3940 = vunpack.c.l.b16 %v3844
        %v3941 = vunpack.c.l.b16 %v3845
        %v3942 = vunpack.c.l.b16 %v3846
        %v3943 = vunpack.c.l.b16 %v3847
        %v3944 = vunpack.c.l.b16 %v3848
        %v3945 = vunpack.c.l.b16 %v3849
        %v3946 = vunpack.c.l.b16 %v3850
        %v3947 = vunpack.c.l.b16 %v3851
        %v3948 = vunpack.c.l.b16 %v3852
        %v3949 = vunpack.c.l.b16 %v3853
        %v3950 = vunpack.c.l.b16 %v3854
        %v3951 = vunpack.c.l.b16 %v3855
        %v3952 = vunpack.c.l.b16 %v3856
        %v3953 = vunpack.c.l.b16 %v3857
        %v3954 = vunpack.c.l.b16 %v3858
        %v3955 = vunpack.c.l.b16 %v3859
        %v3956 = vunpack.c.l.b16 %v3860
        %v3957 = vpack.c.b16 %v3910, %v3909
        %v3958 = vpack.c.b16 %v3912, %v3911
        %v3959 = vpack.c.b16 %v3914, %v3913
        %v3960 = vpack.c.b16 %v3916, %v3915
        %v3961 = vpack.c.b16 %v3918, %v3917
        %v3962 = vpack.c.b16 %v3920, %v3919
        %v3963 = vpack.c.b16 %v3922, %v3921
        %v3964 = vpack.c.b16 %v3924, %v3923
        %v3965 = vpack.c.b16 %v3926, %v3925
        %v3966 = vpack.c.b16 %v3928, %v3927
        %v3967 = vpack.c.b16 %v3930, %v3929
        %v3968 = vpack.c.b16 %v3932, %v3931
        %v3969 = vpack.c.b16 %v3934, %v3933
        %v3970 = vpack.c.b16 %v3936, %v3935
        %v3971 = vpack.c.b16 %v3938, %v3937
        %v3972 = vpack.c.b16 %v3940, %v3939
        %v3973 = vpack.c.b16 %v3942, %v3941
        %v3974 = vpack.c.b16 %v3944, %v3943
        %v3975 = vpack.c.b16 %v3946, %v3945
        %v3976 = vpack.c.b16 %v3948, %v3947
        %v3977 = vpack.c.b16 %v3950, %v3949
        %v3978 = vpack.c.b16 %v3952, %v3951
        %v3979 = vpack.c.b16 %v3954, %v3953
        %v3980 = vpack.c.b16 %v3956, %v3955
        %4005 = vmatprep.subr.bf16.mxu0 0
        %4006 = vmatpush1.bf16.msra.mxu0 %v3964
        %4007 = vmatprep.subr.bf16.mxu0 0
        %4008 = vmatpush1.bf16.msra.mxu0 %v3963
        %4009 = vmatprep.subr.bf16.mxu0 0
        %4010 = vmatpush1.bf16.msra.mxu0 %v3962
        %4011 = vmatprep.subr.bf16.mxu0 0
        %4012 = vmatpush1.bf16.msra.mxu0 %v3961
        %4013 = vmatprep.subr.bf16.mxu0 0
        %4014 = vmatpush1.bf16.msra.mxu0 %v3960
        %4015 = vmatprep.subr.bf16.mxu0 0
        %4016 = vmatpush1.bf16.msra.mxu0 %v3959
        %4017 = vmatprep.subr.bf16.mxu0 0
        %4018 = vmatpush1.bf16.msra.mxu0 %v3958
        %4019 = vmatprep.subr.bf16.mxu0 0
        %4020 = vmatpush1.bf16.msra.mxu0 %v3957
        %4021 = vmatprep.subr.bf16.mxu0 0
        %4022 = vmatpush2.bf16.msra.mxu0 %v3972
        %4023 = vmatprep.subr.bf16.mxu0 0
        %4024 = vmatpush2.bf16.msra.mxu0 %v3971
        %4025 = vmatprep.subr.bf16.mxu0 0
        %4026 = vmatpush2.bf16.msra.mxu0 %v3970
        %4027 = vmatprep.subr.bf16.mxu0 0
        %4028 = vmatpush2.bf16.msra.mxu0 %v3969
        %4029 = vmatprep.subr.bf16.mxu0 0
        %4030 = vmatpush2.bf16.msra.mxu0 %v3968
        %4031 = vmatprep.subr.bf16.mxu0 0
        %4032 = vmatpush2.bf16.msra.mxu0 %v3967
        %4033 = vmatprep.subr.bf16.mxu0 0
        %4034 = vmatpush2.bf16.msra.mxu0 %v3966
        %4035 = vmatprep.subr.bf16.mxu0 0
        %4036 = vmatpush2.bf16.msra.mxu0 %v3965
        %4037 = vmatprep.mubr.bf16.mxu0 %v2884
        %4038 = vmatmul.mubr.bf16.gmra.mxu0 %v2833
        %v4039 = vpop.f32.mrf.mxu0
        %v4040 = vadd.f32 0.0, %v4039
        %v4041 = vpop.f32.mrf.mxu0
        %v4042 = vpop.f32.mrf.mxu0
        %v4043 = vadd.f32 0.0, %v4042
        %v4044 = vpop.f32.mrf.mxu0
        %4045 = vmatprep.mubr.bf16.mxu0 %v2896
        %4046 = vmatmul.mubr.bf16.gmra.mxu0 %v2835
        %v4047 = vpop.f32.mrf.mxu0
        %v4048 = vadd.f32 0.0, %v4047
        %v4049 = vpop.f32.mrf.mxu0
        %v4050 = vpop.f32.mrf.mxu0
        %v4051 = vadd.f32 0.0, %v4050
        %v4052 = vpop.f32.mrf.mxu0
        %4053 = vmatprep.mubr.bf16.mxu0 %v2908
        %4054 = vmatmul.mubr.bf16.gmra.mxu0 %v2837
        %v4055 = vpop.f32.mrf.mxu0
        %v4056 = vadd.f32 0.0, %v4055
        %v4057 = vpop.f32.mrf.mxu0
        %v4058 = vpop.f32.mrf.mxu0
        %v4059 = vadd.f32 0.0, %v4058
        %v4060 = vpop.f32.mrf.mxu0
        %4061 = vmatprep.mubr.bf16.mxu0 %v2920
        %4062 = vmatmul.mubr.bf16.gmra.mxu0 %v2839
        %v4063 = vpop.f32.mrf.mxu0
        %v4064 = vadd.f32 0.0, %v4063
        %v4065 = vpop.f32.mrf.mxu0
        %v4066 = vpop.f32.mrf.mxu0
        %v4067 = vadd.f32 0.0, %v4066
        %v4068 = vpop.f32.mrf.mxu0
        %4069 = vmatprep.mubr.bf16.mxu0 %v2932
        %4070 = vmatmul.mubr.bf16.gmra.mxu0 %v2841
        %v4071 = vpop.f32.mrf.mxu0
        %v4072 = vadd.f32 0.0, %v4071
        %v4073 = vpop.f32.mrf.mxu0
        %v4074 = vpop.f32.mrf.mxu0
        %v4075 = vadd.f32 0.0, %v4074
        %v4076 = vpop.f32.mrf.mxu0
        %4077 = vmatprep.mubr.bf16.mxu0 %v2944
        %4078 = vmatmul.mubr.bf16.gmra.mxu0 %v2843
        %v4079 = vpop.f32.mrf.mxu0
        %v4080 = vadd.f32 0.0, %v4079
        %v4081 = vpop.f32.mrf.mxu0
        %v4082 = vpop.f32.mrf.mxu0
        %v4083 = vadd.f32 0.0, %v4082
        %v4084 = vpop.f32.mrf.mxu0
        %4085 = vmatprep.mubr.bf16.mxu0 %v2956
        %4086 = vmatmul.mubr.bf16.gmra.mxu0 %v2845
        %v4087 = vpop.f32.mrf.mxu0
        %v4088 = vadd.f32 0.0, %v4087
        %v4089 = vpop.f32.mrf.mxu0
        %v4090 = vpop.f32.mrf.mxu0
        %v4091 = vadd.f32 0.0, %v4090
        %v4092 = vpop.f32.mrf.mxu0
        %4093 = vmatprep.mubr.bf16.mxu0 %v2968
        %4094 = vmatmul.mubr.bf16.gmra.mxu0 %v2847
        %v4095 = vpop.f32.mrf.mxu0
        %v4096 = vadd.f32 0.0, %v4095
        %v4097 = vpop.f32.mrf.mxu0
        %v4098 = vpop.f32.mrf.mxu0
        %v4099 = vadd.f32 0.0, %v4098
        %v4100 = vpop.f32.mrf.mxu0
        %4101 = vdwg.mxu0
        %4102 = vmatprep.subr.bf16.mxu0 0
        %4103 = vmatpush1.bf16.msra.mxu0 %v3980
        %4104 = vmatprep.subr.bf16.mxu0 0
        %4105 = vmatpush1.bf16.msra.mxu0 %v3979
        %4106 = vmatprep.subr.bf16.mxu0 0
        %4107 = vmatpush1.bf16.msra.mxu0 %v3978
        %4108 = vmatprep.subr.bf16.mxu0 0
        %4109 = vmatpush1.bf16.msra.mxu0 %v3977
        %4110 = vmatprep.subr.bf16.mxu0 0
        %4111 = vmatpush1.bf16.msra.mxu0 %v3976
        %4112 = vmatprep.subr.bf16.mxu0 0
        %4113 = vmatpush1.bf16.msra.mxu0 %v3975
        %4114 = vmatprep.subr.bf16.mxu0 0
        %4115 = vmatpush1.bf16.msra.mxu0 %v3974
        %4116 = vmatprep.subr.bf16.mxu0 0
        %4117 = vmatpush1.bf16.msra.mxu0 %v3973
        %4118 = vmatprep.subr.bf16.mxu0 0
        %4119 = vmatpush2.bf16.msra.mxu0 0
        %4120 = vmatprep.subr.bf16.mxu0 0
        %4121 = vmatpush2.bf16.msra.mxu0 0
        %4122 = vmatprep.subr.bf16.mxu0 0
        %4123 = vmatpush2.bf16.msra.mxu0 0
        %4124 = vmatprep.subr.bf16.mxu0 0
        %4125 = vmatpush2.bf16.msra.mxu0 0
        %4126 = vmatprep.subr.bf16.mxu0 0
        %4127 = vmatpush2.bf16.msra.mxu0 0
        %4128 = vmatprep.subr.bf16.mxu0 0
        %4129 = vmatpush2.bf16.msra.mxu0 0
        %4130 = vmatprep.subr.bf16.mxu0 0
        %4131 = vmatpush2.bf16.msra.mxu0 0
        %4132 = vmatprep.subr.bf16.mxu0 0
        %4133 = vmatpush2.bf16.msra.mxu0 0
        %4134 = vmatprep.mubr.bf16.mxu0 0
        %4135 = vmatmul.mubr.bf16.gmra.mxu0 %v3007
        %v4136 = vpop.f32.mrf.mxu0
        %v4137 = vadd.f32 %v4040, %v4136
        %v4138 = vpop.f32.mrf.mxu0
        %v4139 = vpop.f32.mrf.mxu0
        %v4140 = vadd.f32 %v4043, %v4139
        %v4141 = vpop.f32.mrf.mxu0
        %4142 = vmatprep.mubr.bf16.mxu0 0
        %4143 = vmatmul.mubr.bf16.gmra.mxu0 %v3010
        %v4144 = vpop.f32.mrf.mxu0
        %v4145 = vadd.f32 %v4048, %v4144
        %v4146 = vpop.f32.mrf.mxu0
        %v4147 = vpop.f32.mrf.mxu0
        %v4148 = vadd.f32 %v4051, %v4147
        %v4149 = vpop.f32.mrf.mxu0
        %4150 = vmatprep.mubr.bf16.mxu0 0
        %4151 = vmatmul.mubr.bf16.gmra.mxu0 %v3013
        %v4152 = vpop.f32.mrf.mxu0
        %v4153 = vadd.f32 %v4056, %v4152
        %v4154 = vpop.f32.mrf.mxu0
        %v4155 = vpop.f32.mrf.mxu0
        %v4156 = vadd.f32 %v4059, %v4155
        %v4157 = vpop.f32.mrf.mxu0
        %4158 = vmatprep.mubr.bf16.mxu0 0
        %4159 = vmatmul.mubr.bf16.gmra.mxu0 %v3016
        %v4160 = vpop.f32.mrf.mxu0
        %v4161 = vadd.f32 %v4064, %v4160
        %v4162 = vpop.f32.mrf.mxu0
        %v4163 = vpop.f32.mrf.mxu0
        %v4164 = vadd.f32 %v4067, %v4163
        %v4165 = vpop.f32.mrf.mxu0
        %4166 = vmatprep.mubr.bf16.mxu0 0
        %4167 = vmatmul.mubr.bf16.gmra.mxu0 %v3019
        %v4168 = vpop.f32.mrf.mxu0
        %v4169 = vadd.f32 %v4072, %v4168
        %v4170 = vpop.f32.mrf.mxu0
        %v4171 = vpop.f32.mrf.mxu0
        %v4172 = vadd.f32 %v4075, %v4171
        %v4173 = vpop.f32.mrf.mxu0
        %4174 = vmatprep.mubr.bf16.mxu0 0
        %4175 = vmatmul.mubr.bf16.gmra.mxu0 %v3022
        %v4176 = vpop.f32.mrf.mxu0
        %v4177 = vadd.f32 %v4080, %v4176
        %v4178 = vpop.f32.mrf.mxu0
        %v4179 = vpop.f32.mrf.mxu0
        %v4180 = vadd.f32 %v4083, %v4179
        %v4181 = vpop.f32.mrf.mxu0
        %4182 = vmatprep.mubr.bf16.mxu0 0
        %4183 = vmatmul.mubr.bf16.gmra.mxu0 %v3025
        %v4184 = vpop.f32.mrf.mxu0
        %v4185 = vadd.f32 %v4088, %v4184
        %v4186 = vpop.f32.mrf.mxu0
        %v4187 = vpop.f32.mrf.mxu0
        %v4188 = vadd.f32 %v4091, %v4187
        %v4189 = vpop.f32.mrf.mxu0
        %4190 = vmatprep.mubr.bf16.mxu0 0
        %4191 = vmatmul.mubr.bf16.gmra.mxu0 %v3028
        %v4192 = vpop.f32.mrf.mxu0
        %v4193 = vadd.f32 %v4096, %v4192
        %v4194 = vpop.f32.mrf.mxu0
        %v4195 = vpop.f32.mrf.mxu0
        %v4196 = vadd.f32 %v4099, %v4195
        %v4197 = vpop.f32.mrf.mxu0
        %4198 = vdwg.mxu0
        %v4199 = vadd.f32 %v3750, %v4137
        %v4200 = vadd.f32 %v3753, %v4140
        %v4201 = vadd.f32 %v3758, %v4145
        %v4202 = vadd.f32 %v3761, %v4148
        %v4203 = vadd.f32 %v3766, %v4153
        %v4204 = vadd.f32 %v3769, %v4156
        %v4205 = vadd.f32 %v3774, %v4161
        %v4206 = vadd.f32 %v3777, %v4164
        %v4207 = vadd.f32 %v3782, %v4169
        %v4208 = vadd.f32 %v3785, %v4172
        %v4209 = vadd.f32 %v3790, %v4177
        %v4210 = vadd.f32 %v3793, %v4180
        %v4211 = vadd.f32 %v3798, %v4185
        %v4212 = vadd.f32 %v3801, %v4188
        %v4213 = vadd.f32 %v3806, %v4193
        %v4214 = vadd.f32 %v3809, %v4196
        %v4215 = vunpack.c.l.bf16 %v703
        %v4216 = vunpack.c.h.bf16 %v703
        %v4217 = vunpack.c.l.bf16 %v706
        %v4218 = vunpack.c.h.bf16 %v706
        %v4219 = vunpack.c.l.bf16 %v709
        %v4220 = vunpack.c.h.bf16 %v709
        %v4221 = vunpack.c.l.bf16 %v712
        %v4222 = vunpack.c.h.bf16 %v712
        %v4223 = vunpack.c.l.bf16 %v715
        %v4224 = vunpack.c.h.bf16 %v715
        %v4225 = vunpack.c.l.bf16 %v718
        %v4226 = vunpack.c.h.bf16 %v718
        %v4227 = vunpack.c.l.bf16 %v721
        %v4228 = vunpack.c.h.bf16 %v721
        %v4229 = vunpack.c.l.bf16 %v724
        %v4230 = vunpack.c.h.bf16 %v724
        %v4231 = vld [vmem:[%s5] sm:$0x1]
        %v4233 = vlaneseq
        %v4234 = vshrl.u32 %v4233, 7
        %v4235 = vsub.s32 0, %v4234
        %v4236 = vrot.slane %v4231, %v4235
        %v4238 = vmul.f32 %v4199, %v4236
        %v4239 = vmul.f32 %v4200, %v4236
        %v4240 = vmul.f32 %v4201, %v4236
        %v4241 = vmul.f32 %v4202, %v4236
        %v4242 = vmul.f32 %v4203, %v4236
        %v4243 = vmul.f32 %v4204, %v4236
        %v4244 = vmul.f32 %v4205, %v4236
        %v4245 = vmul.f32 %v4206, %v4236
        %v4246 = vmul.f32 %v4207, %v4236
        %v4247 = vmul.f32 %v4208, %v4236
        %v4248 = vmul.f32 %v4209, %v4236
        %v4249 = vmul.f32 %v4210, %v4236
        %v4250 = vmul.f32 %v4211, %v4236
        %v4251 = vmul.f32 %v4212, %v4236
        %v4252 = vmul.f32 %v4213, %v4236
        %v4253 = vmul.f32 %v4214, %v4236
        %v4254 = vld [vmem:[%s6] sm:$0x1]
        %v4256 = vlaneseq
        %v4257 = vshrl.u32 %v4256, 7
        %v4258 = vsub.s32 0, %v4257
        %v4259 = vrot.slane %v4254, %v4258
        %v4261 = vadd.f32 %v4238, %v4259
        %v4262 = vadd.f32 %v4239, %v4259
        %v4263 = vadd.f32 %v4240, %v4259
        %v4264 = vadd.f32 %v4241, %v4259
        %v4265 = vadd.f32 %v4242, %v4259
        %v4266 = vadd.f32 %v4243, %v4259
        %v4267 = vadd.f32 %v4244, %v4259
        %v4268 = vadd.f32 %v4245, %v4259
        %v4269 = vadd.f32 %v4246, %v4259
        %v4270 = vadd.f32 %v4247, %v4259
        %v4271 = vadd.f32 %v4248, %v4259
        %v4272 = vadd.f32 %v4249, %v4259
        %v4273 = vadd.f32 %v4250, %v4259
        %v4274 = vadd.f32 %v4251, %v4259
        %v4275 = vadd.f32 %v4252, %v4259
        %v4276 = vadd.f32 %v4253, %v4259
        %v4277 = vadd.f32 %v4261, %v4215
        %v4278 = vadd.f32 %v4262, %v4216
        %v4279 = vadd.f32 %v4263, %v4217
        %v4280 = vadd.f32 %v4264, %v4218
        %v4281 = vadd.f32 %v4265, %v4219
        %v4282 = vadd.f32 %v4266, %v4220
        %v4283 = vadd.f32 %v4267, %v4221
        %v4284 = vadd.f32 %v4268, %v4222
        %v4285 = vadd.f32 %v4269, %v4223
        %v4286 = vadd.f32 %v4270, %v4224
        %v4287 = vadd.f32 %v4271, %v4225
        %v4288 = vadd.f32 %v4272, %v4226
        %v4289 = vadd.f32 %v4273, %v4227
        %v4290 = vadd.f32 %v4274, %v4228
        %v4291 = vadd.f32 %v4275, %v4229
        %v4292 = vadd.f32 %v4276, %v4230
        %v4293 = vmax.f32 %v4277, 0.0
        %v4294 = vmax.f32 %v4278, 0.0
        %v4295 = vmax.f32 %v4279, 0.0
        %v4296 = vmax.f32 %v4280, 0.0
        %v4297 = vmax.f32 %v4281, 0.0
        %v4298 = vmax.f32 %v4282, 0.0
        %v4299 = vmax.f32 %v4283, 0.0
        %v4300 = vmax.f32 %v4284, 0.0
        %v4301 = vmax.f32 %v4285, 0.0
        %v4302 = vmax.f32 %v4286, 0.0
        %v4303 = vmax.f32 %v4287, 0.0
        %v4304 = vmax.f32 %v4288, 0.0
        %v4305 = vmax.f32 %v4289, 0.0
        %v4306 = vmax.f32 %v4290, 0.0
        %v4307 = vmax.f32 %v4291, 0.0
        %v4308 = vmax.f32 %v4292, 0.0
        %v4309 = vpack.c.bf16 %v4294, %v4293
        %v4310 = vpack.c.bf16 %v4296, %v4295
        %v4311 = vpack.c.bf16 %v4298, %v4297
        %v4312 = vpack.c.bf16 %v4300, %v4299
        %v4313 = vpack.c.bf16 %v4302, %v4301
        %v4314 = vpack.c.bf16 %v4304, %v4303
        %v4315 = vpack.c.bf16 %v4306, %v4305
        %v4316 = vpack.c.bf16 %v4308, %v4307
        %v4325 = vunpack.c.l.b16 %v4309
        %v4326 = vunpack.c.h.b16 %v4309
        %v4327 = vunpack.c.l.b16 %v4310
        %v4328 = vunpack.c.h.b16 %v4310
        %v4329 = vunpack.c.l.b16 %v4311
        %v4330 = vunpack.c.h.b16 %v4311
        %v4331 = vunpack.c.l.b16 %v4312
        %v4332 = vunpack.c.h.b16 %v4312
        %v4333 = vunpack.c.l.b16 %v4313
        %v4334 = vunpack.c.h.b16 %v4313
        %v4335 = vunpack.c.l.b16 %v4314
        %v4336 = vunpack.c.h.b16 %v4314
        %v4337 = vunpack.c.l.b16 %v4315
        %v4338 = vunpack.c.h.b16 %v4315
        %v4339 = vunpack.c.l.b16 %v4316
        %v4340 = vunpack.c.h.b16 %v4316
        %v4341 = vpack.c.b16 %v4325, %v4325
        %v4342 = vpack.c.b16 %v4326, %v4326
        %v4343 = vpack.c.b16 %v4327, %v4327
        %v4344 = vpack.c.b16 %v4328, %v4328
        %v4345 = vpack.c.b16 %v4329, %v4329
        %v4346 = vpack.c.b16 %v4330, %v4330
        %v4347 = vpack.c.b16 %v4331, %v4331
        %v4348 = vpack.c.b16 %v4332, %v4332
        %v4349 = vpack.c.b16 %v4333, %v4333
        %v4350 = vpack.c.b16 %v4334, %v4334
        %v4351 = vpack.c.b16 %v4335, %v4335
        %v4352 = vpack.c.b16 %v4336, %v4336
        %v4353 = vpack.c.b16 %v4337, %v4337
        %v4354 = vpack.c.b16 %v4338, %v4338
        %v4355 = vpack.c.b16 %v4339, %v4339
        %v4356 = vpack.c.b16 %v4340, %v4340
        %4373 = vst [vmem:[%s285] sm:$0xf] %v4341
        %4374 = vst [vmem:[%s285 + $0x4] sm:$0xf] %v4342
        %4375 = vst [vmem:[%s285 + $0x8] sm:$0xf] %v4343
        %4376 = vst [vmem:[%s285 + $0xc] sm:$0xf] %v4344
        %4377 = vst [vmem:[%s285 + $0x10] sm:$0xf] %v4345
        %4378 = vst [vmem:[%s285 + $0x14] sm:$0xf] %v4346
        %4379 = vst [vmem:[%s285 + $0x18] sm:$0xf] %v4347
        %4380 = vst [vmem:[%s285 + $0x1c] sm:$0xf] %v4348
        %4381 = vst [vmem:[%s285 + $0x20] sm:$0xf] %v4349
        %4382 = vst [vmem:[%s285 + $0x24] sm:$0xf] %v4350
        %4383 = vst [vmem:[%s285 + $0x28] sm:$0xf] %v4351
        %4384 = vst [vmem:[%s285 + $0x2c] sm:$0xf] %v4352
        %4385 = vst [vmem:[%s285 + $0x30] sm:$0xf] %v4353
        %4386 = vst [vmem:[%s285 + $0x34] sm:$0xf] %v4354
        %4387 = vst [vmem:[%s285 + $0x38] sm:$0xf] %v4355
        %4388 = vst [vmem:[%s285 + $0x3c] sm:$0xf] %v4356
        %s4389 = sand.u32 %s195, 1
        %s4390 = scalar_lea.sflag [#allocation3], %s4389
        %s4391 = sand.u32 %s195, 1
        %s4392 = smul.addr %s4391, 64
        %s4393 = scalar_lea.vmem [#allocation2], %s4392
        // Predicated region
        $region49: #{tpu_custom_call.1} parent=47 // pred_check
          %p4394 = pneg %p205
        $region50: #{tpu_custom_call.1} parent=47 // pred_check_branch
          %4396 = sbr.rel (%p4394) target = $region52
        $region51: #{tpu_custom_call.1} parent=47 // pred_region
          %s4397 = smul.u32 8, %s26
          %s4399 = ssub.s32 1024, 1024
          %4400 = vsyncadd %s4390, %s4399
          %s4401 = smul.addr %s4397, 2
          %s4402 = smul.addr %s25, 32
          %s4403 = sadd.s32 %s4401, %s4402
          %s4404 = smul.addr %s4403, 64
          %s4405 = scalar_lea.hbm %s7, %s4404
          %s4406 = sshll.u32 %s4393, 4
          %s4407 = int_to_ptr.vmem [resolvable:$true] %s4406
          %4412 = dma.vmem_to_hbm [thread:$0]  %s4407, 1024, %s4405, %s4390, 64, 64, 4
        $region52: #{tpu_custom_call.1} parent=47 // pred_fallthru
          _
      $region48: #{tpu_custom_call.1} parent=5 // pred_fallthru
        _
      %p4413 = scmp.le.s32.totalorder 2, %s16
      // Predicated region
      $region53: #{tpu_custom_call.1} parent=5 // pred_check
        %p4414 = pneg %p4413
      $region54: #{tpu_custom_call.1} parent=5 // pred_check_branch
        %4416 = sbr.rel (%p4414) target = $region56
      $region55: #{tpu_custom_call.1} parent=5 // pred_region
        %s4417 = ssub.s32 %s16, 2
        // Predicated region
        $region57: #{tpu_custom_call.1} parent=55 // pred_check
          %p4418 = pneg %p211
        $region58: #{tpu_custom_call.1} parent=55 // pred_check_branch
          %4420 = sbr.rel (%p4418) target = $region60
        $region59: #{tpu_custom_call.1} parent=55 // pred_region
          %s4421 = sand.u32 %s196, 1
          %s4422 = scalar_lea.sflag [#allocation3], %s4421
          %s4423 = sand.u32 %s196, 1
          %s4424 = smul.addr %s4423, 64
          %s4425 = scalar_lea.vmem [#allocation2], %s4424
          %4426 = dma.done %s4422, 1024
        $region60: #{tpu_custom_call.1} parent=55 // pred_fallthru
          _
      $region56: #{tpu_custom_call.1} parent=5 // pred_fallthru
        _
    $region6: #{tpu_custom_call.1} parent=1 // loop_footer
      %s20 = sadd.s32 1, %s16
    $region7: #{tpu_custom_call.1} parent=1 // loop_footer_branch
      %15 = sbr.rel target = $region3
    $region8: #{tpu_custom_call.1} parent=1 // loop_exit
      _
    %4427 = vsyncpa [#allocation3], 1
    %s4428 = scalar_lea.sflag [#allocation3], 1
    %4429 = vsyncpa %s4428, 1

</llo_original>
